<compile_context>
chip_gen: v7x
topology: tpu7x:2x2x1
jax: 0.10.0
libtpu: 0.0.40
codegen_flags: <defaults>
</compile_context>

<pallas_src>
import functools

import jax
import jax.numpy as jnp
from jax.experimental import pallas as pl
from jax.experimental.pallas import tpu as pltpu


def _resblock_kernel(xp_ref, w1_ref, b1_ref, w2_ref, b2_ref, out_ref,
                     patches, midp, *, Bt, H, W, C, K):
    # xp_ref:  (Bt, Hp, Wp, C)   zero-padded input block, compute dtype
    # w*_ref:  (K*K*C, C)        flattened conv weights (tap-major), compute dtype
    # b*_ref:  (1, C)            conv biases, f32
    # out_ref: (Bt, H*W, C)      lane-dense output (C is a multiple of 128), f32
    # patches: VMEM (Bt*H*W, K*K*C) im2col scratch, compute dtype
    # midp:    VMEM (Bt, Hp, Wp, C) padded ReLU activation, compute dtype
    Hp, Wp = H + 2, W + 2
    HW = H * W
    cdt = patches.dtype

    def im2col(src_ref):
        # Fill the im2col scratch from a padded (Bt, Hp, Wp, C) ref.
        # Only K sublane (W-direction) shifted loads; kh slices are leading-dim
        # (free) and the column stores are 128-lane aligned.
        for kw in range(K):
            xs = src_ref[:, :, kw:kw + W, :]                # (Bt, Hp, W, C)
            for kh in range(K):
                t = kh * K + kw
                patches[:, t * C:(t + 1) * C] = (
                    xs[:, kh:kh + H].reshape(Bt * HW, C))

    # ---- conv1 + bias + ReLU: one deep matmul on the MXU ---------------------
    im2col(xp_ref)
    h = jnp.dot(patches[...], w1_ref[...], preferred_element_type=jnp.float32)
    h = jnp.maximum(h + b1_ref[...], 0.0)                   # f32 bias add

    # ---- stash padded activation directly in VMEM scratch --------------------
    # Zero only the 1-px halo strips; done per step (megacore-safe, tiny cost).
    midp[:, 0:1, :, :] = jnp.zeros((Bt, 1, Wp, C), cdt)
    midp[:, Hp - 1:Hp, :, :] = jnp.zeros((Bt, 1, Wp, C), cdt)
    midp[:, :, 0:1, :] = jnp.zeros((Bt, Hp, 1, C), cdt)
    midp[:, :, Wp - 1:Wp, :] = jnp.zeros((Bt, Hp, 1, C), cdt)
    midp[:, 1:1 + H, 1:1 + W, :] = h.reshape(Bt, H, W, C).astype(cdt)

    # ---- conv2 + bias ---------------------------------------------------------
    im2col(midp)
    acc = jnp.dot(patches[...], w2_ref[...], preferred_element_type=jnp.float32)
    acc = acc + b2_ref[...]                                 # f32 bias add

    # ---- residual add (f32) and lane-dense store ------------------------------
    res = xp_ref[:, 1:1 + H, 1:1 + W, :].reshape(Bt * HW, C).astype(jnp.float32)
    out_ref[...] = (acc + res).reshape(Bt, HW, C).astype(out_ref.dtype)


def _pick_block_n(N, H, W, cap_rows=2048):
    """Batch elements folded into one grid step.

    Amortizes per-step pipeline overhead for tiny images, but keeps >= 2 grid
    steps so both v7x TensorCores get work when the batch axis is 'parallel'.
    """
    bn = 1
    while (N % (bn * 2) == 0 and N // (bn * 2) >= 2
           and (bn * 2) * H * W <= cap_rows):
        bn *= 2
    return bn


def residual_block_pallas(x_nchw, w1, b1, w2, b2, *,
                          compute_dtype=jnp.bfloat16):
    """x_nchw: (N, C, H, W).  w*: (C, C, 3, 3) OIHW.  b*: (C,).

    compute_dtype: dtype of activations/weights fed to the MXU (bf16 default;
    accumulation, bias add and the residual add stay in f32).
    """
    N, C, H, W = x_nchw.shape
    K = w1.shape[-1]
    assert K == 3 and w1.shape == (C, C, K, K), \
        "kernel assumes kernel_size=3, stride=1, padding=1, dilation=1"
    pad = 1
    Hp, Wp = H + 2 * pad, W + 2 * pad
    LANES = 128
    Cp = ((C + LANES - 1) // LANES) * LANES       # channel pad -> full lanes

    # NCHW -> NHWC, zero-pad spatial by 1 and channels up to Cp.
    x_nhwc = jnp.transpose(x_nchw, (0, 2, 3, 1))
    xp = jnp.pad(x_nhwc, ((0, 0), (pad, pad), (pad, pad), (0, Cp - C)))
    xp = xp.astype(compute_dtype)

    def flatten_w(w):
        # OIHW -> (kh, kw, cin, cout), zero-pad channels, flatten taps+cin so
        # the whole conv is one (.., 9*Cp) x (9*Cp, Cp) matmul.
        w_hwio = jnp.transpose(w, (2, 3, 1, 0))
        w_hwio = jnp.pad(w_hwio, ((0, 0), (0, 0), (0, Cp - C), (0, Cp - C)))
        return w_hwio.reshape(K * K * Cp, Cp).astype(compute_dtype)

    w1f, w2f = flatten_w(w1), flatten_w(w2)
    b1p = jnp.pad(b1, (0, Cp - C)).reshape(1, Cp).astype(jnp.float32)
    b2p = jnp.pad(b2, (0, Cp - C)).reshape(1, Cp).astype(jnp.float32)

    Bt = _pick_block_n(N, H, W)
    grid = (N // Bt,)

    kernel = functools.partial(_resblock_kernel, Bt=Bt, H=H, W=W, C=Cp, K=K)

    out = pl.pallas_call(
        kernel,
        out_shape=jax.ShapeDtypeStruct((N, H * W, Cp), jnp.float32),
        grid_spec=pltpu.PrefetchScalarGridSpec(
            num_scalar_prefetch=0,
            grid=grid,
            in_specs=[
                pl.BlockSpec((Bt, Hp, Wp, Cp), lambda n: (n, 0, 0, 0)),
                pl.BlockSpec((K * K * Cp, Cp), lambda n: (0, 0)),
                pl.BlockSpec((1, Cp), lambda n: (0, 0)),
                pl.BlockSpec((K * K * Cp, Cp), lambda n: (0, 0)),
                pl.BlockSpec((1, Cp), lambda n: (0, 0)),
            ],
            # Lane-dense output: last dim is a multiple of 128 -> unmasked vst.
            out_specs=pl.BlockSpec((Bt, H * W, Cp), lambda n: (n, 0, 0)),
            scratch_shapes=[
                pltpu.VMEM((Bt * H * W, K * K * Cp), compute_dtype),  # im2col
                pltpu.VMEM((Bt, Hp, Wp, Cp), compute_dtype),          # pad act
            ]),
        compiler_params=pltpu.CompilerParams(
            dimension_semantics=("parallel",)),
    )(xp, w1f, b1p, w2f, b2p)

    # Strip channel padding, restore NCHW.
    out = out[:, :, :C].reshape(N, H, W, C)
    return jnp.transpose(out, (0, 3, 1, 2)).astype(x_nchw.dtype)


def residual_block_ref(x_nchw, w1, b1, w2, b2):
    """Pure-JAX reference matching nn.Conv2d(NCHW, OIHW) semantics."""
    dn = jax.lax.conv_dimension_numbers(x_nchw.shape, w1.shape,
                                        ("NCHW", "OIHW", "NCHW"))
    h = jax.lax.conv_general_dilated(x_nchw, w1, (1, 1), ((1, 1), (1, 1)),
                                     dimension_numbers=dn)
    h = h + b1.reshape(1, -1, 1, 1)
    h = jnp.maximum(h, 0.0)
    o = jax.lax.conv_general_dilated(h, w2, (1, 1), ((1, 1), (1, 1)),
                                     dimension_numbers=dn)
    o = o + b2.reshape(1, -1, 1, 1)
    return o + x_nchw


if __name__ == "__main__":
    # Small, deterministic example consistent with ResidualBlock(nf=4).
    nf, N, H, W = 4, 2, 16, 16
    key = jax.random.PRNGKey(0)
    kx, kw1, kb1, kw2, kb2 = jax.random.split(key, 5)

    x = jax.random.normal(kx, (N, nf, H, W), dtype=jnp.float32)
    fan_in = nf * 3 * 3
    bound = 1.0 / (fan_in ** 0.5)
    w1 = jax.random.uniform(kw1, (nf, nf, 3, 3), jnp.float32, -bound, bound)
    b1 = jax.random.uniform(kb1, (nf,), jnp.float32, -bound, bound)
    w2 = jax.random.uniform(kw2, (nf, nf, 3, 3), jnp.float32, -bound, bound)
    b2 = jax.random.uniform(kb2, (nf,), jnp.float32, -bound, bound)

    ref = jax.block_until_ready(residual_block_ref(x, w1, b1, w2, b2))

    # Strict check in f32 compute mode.
    out_f32 = jax.block_until_ready(
        residual_block_pallas(x, w1, b1, w2, b2, compute_dtype=jnp.float32))
    assert out_f32.shape == (N, nf, H, W)
    assert jnp.allclose(out_f32, ref, atol=1e-4, rtol=1e-4), \
        f"f32 max abs err {jnp.max(jnp.abs(out_f32 - ref))}"

    # Production default: bf16 operands (2x MXU rate, half HBM/VMEM bytes),
    # f32 accumulation / bias / residual add -> looser tolerance.
    out_bf16 = jax.block_until_ready(
        residual_block_pallas(x, w1, b1, w2, b2, compute_dtype=jnp.bfloat16))
    assert jnp.allclose(out_bf16, ref, atol=5e-2, rtol=5e-2), \
        f"bf16 max abs err {jnp.max(jnp.abs(out_bf16 - ref))}"

    print("KERNEL_OK")
</pallas_src>

<mosaic_0001>
module attributes {stable_mosaic.version = 11 : i64} {
  func.func @_resblock_kernel(%arg0: i32, %arg1: memref<1x18x18x128xf32, #tpu.memory_space<vmem>>, %arg2: memref<1152x128xf32, #tpu.memory_space<vmem>>, %arg3: memref<1x128xf32, #tpu.memory_space<vmem>>, %arg4: memref<1152x128xf32, #tpu.memory_space<vmem>>, %arg5: memref<1x128xf32, #tpu.memory_space<vmem>>, %arg6: memref<1x256x128xf32, #tpu.memory_space<vmem>>, %arg7: memref<256x1152xf32, #tpu.memory_space<vmem>>, %arg8: memref<1x18x18x128xf32, #tpu.memory_space<vmem>>) attributes {dimension_semantics = [#tpu.dimension_semantics<parallel>], iteration_bounds = array<i64: 2>, scalar_prefetch = 0 : i64, scratch_operands = 2 : i64, tpu.core_type = #tpu.core_type<tc>, window_params = [{transform_indices = @transform_0, window_bounds = array<i64: 1, 18, 18, 128>}, {pipeline_mode = #tpu.pipeline_mode<synchronous>, transform_indices = @transform_1, window_bounds = array<i64: 1152, 128>}, {pipeline_mode = #tpu.pipeline_mode<synchronous>, transform_indices = @transform_2, window_bounds = array<i64: 1, 128>}, {pipeline_mode = #tpu.pipeline_mode<synchronous>, transform_indices = @transform_3, window_bounds = array<i64: 1152, 128>}, {pipeline_mode = #tpu.pipeline_mode<synchronous>, transform_indices = @transform_4, window_bounds = array<i64: 1, 128>}, {transform_indices = @transform_5, window_bounds = array<i64: 1, 256, 128>}]} {
    %c0 = arith.constant 0 : index
    %c0_0 = arith.constant 0 : index
    %c0_1 = arith.constant 0 : index
    %c0_2 = arith.constant 0 : index
    %0 = vector.load %arg1[%c0, %c0_0, %c0_1, %c0_2] : memref<1x18x18x128xf32, #tpu.memory_space<vmem>>, vector<1x18x16x128xf32>
    %1 = vector.extract_strided_slice %0 {offsets = [0, 0, 0, 0], sizes = [1, 16, 16, 128], strides = [1, 1, 1, 1]} : vector<1x18x16x128xf32> to vector<1x16x16x128xf32>
    %2 = vector.shape_cast %1 : vector<1x16x16x128xf32> to vector<256x128xf32>
    %c0_3 = arith.constant 0 : index
    %c0_4 = arith.constant 0 : index
    %3 = vector.load %arg7[%c0_3, %c0_4] : memref<256x1152xf32, #tpu.memory_space<vmem>>, vector<256x128xf32>
    tpu.vector_store %arg7[%c0_3, %c0_4], %2 {strides = array<i32>} : memref<256x1152xf32, #tpu.memory_space<vmem>>, vector<256x128xf32>,
    %4 = vector.extract_strided_slice %0 {offsets = [0, 1, 0, 0], sizes = [1, 16, 16, 128], strides = [1, 1, 1, 1]} : vector<1x18x16x128xf32> to vector<1x16x16x128xf32>
    %5 = vector.shape_cast %4 : vector<1x16x16x128xf32> to vector<256x128xf32>
    %c0_5 = arith.constant 0 : index
    %c384 = arith.constant 384 : index
    %6 = vector.load %arg7[%c0_5, %c384] : memref<256x1152xf32, #tpu.memory_space<vmem>>, vector<256x128xf32>
    tpu.vector_store %arg7[%c0_5, %c384], %5 {strides = array<i32>} : memref<256x1152xf32, #tpu.memory_space<vmem>>, vector<256x128xf32>,
    %7 = vector.extract_strided_slice %0 {offsets = [0, 2, 0, 0], sizes = [1, 16, 16, 128], strides = [1, 1, 1, 1]} : vector<1x18x16x128xf32> to vector<1x16x16x128xf32>
    %8 = vector.shape_cast %7 : vector<1x16x16x128xf32> to vector<256x128xf32>
    %c0_6 = arith.constant 0 : index
    %c768 = arith.constant 768 : index
    %9 = vector.load %arg7[%c0_6, %c768] : memref<256x1152xf32, #tpu.memory_space<vmem>>, vector<256x128xf32>
    tpu.vector_store %arg7[%c0_6, %c768], %8 {strides = array<i32>} : memref<256x1152xf32, #tpu.memory_space<vmem>>, vector<256x128xf32>,
    %c0_7 = arith.constant 0 : index
    %c0_8 = arith.constant 0 : index
    %c1 = arith.constant 1 : index
    %c0_9 = arith.constant 0 : index
    %10 = vector.load %arg1[%c0_7, %c0_8, %c1, %c0_9] : memref<1x18x18x128xf32, #tpu.memory_space<vmem>>, vector<1x18x16x128xf32>
    %11 = vector.extract_strided_slice %10 {offsets = [0, 0, 0, 0], sizes = [1, 16, 16, 128], strides = [1, 1, 1, 1]} : vector<1x18x16x128xf32> to vector<1x16x16x128xf32>
    %12 = vector.shape_cast %11 : vector<1x16x16x128xf32> to vector<256x128xf32>
    %c0_10 = arith.constant 0 : index
    %c128 = arith.constant 128 : index
    %13 = vector.load %arg7[%c0_10, %c128] : memref<256x1152xf32, #tpu.memory_space<vmem>>, vector<256x128xf32>
    tpu.vector_store %arg7[%c0_10, %c128], %12 {strides = array<i32>} : memref<256x1152xf32, #tpu.memory_space<vmem>>, vector<256x128xf32>,
    %14 = vector.extract_strided_slice %10 {offsets = [0, 1, 0, 0], sizes = [1, 16, 16, 128], strides = [1, 1, 1, 1]} : vector<1x18x16x128xf32> to vector<1x16x16x128xf32>
    %15 = vector.shape_cast %14 : vector<1x16x16x128xf32> to vector<256x128xf32>
    %c0_11 = arith.constant 0 : index
    %c512 = arith.constant 512 : index
    %16 = vector.load %arg7[%c0_11, %c512] : memref<256x1152xf32, #tpu.memory_space<vmem>>, vector<256x128xf32>
    tpu.vector_store %arg7[%c0_11, %c512], %15 {strides = array<i32>} : memref<256x1152xf32, #tpu.memory_space<vmem>>, vector<256x128xf32>,
    %17 = vector.extract_strided_slice %10 {offsets = [0, 2, 0, 0], sizes = [1, 16, 16, 128], strides = [1, 1, 1, 1]} : vector<1x18x16x128xf32> to vector<1x16x16x128xf32>
    %18 = vector.shape_cast %17 : vector<1x16x16x128xf32> to vector<256x128xf32>
    %c0_12 = arith.constant 0 : index
    %c896 = arith.constant 896 : index
    %19 = vector.load %arg7[%c0_12, %c896] : memref<256x1152xf32, #tpu.memory_space<vmem>>, vector<256x128xf32>
    tpu.vector_store %arg7[%c0_12, %c896], %18 {strides = array<i32>} : memref<256x1152xf32, #tpu.memory_space<vmem>>, vector<256x128xf32>,
    %c0_13 = arith.constant 0 : index
    %c0_14 = arith.constant 0 : index
    %c2 = arith.constant 2 : index
    %c0_15 = arith.constant 0 : index
    %20 = vector.load %arg1[%c0_13, %c0_14, %c2, %c0_15] : memref<1x18x18x128xf32, #tpu.memory_space<vmem>>, vector<1x18x16x128xf32>
    %21 = vector.extract_strided_slice %20 {offsets = [0, 0, 0, 0], sizes = [1, 16, 16, 128], strides = [1, 1, 1, 1]} : vector<1x18x16x128xf32> to vector<1x16x16x128xf32>
    %22 = vector.shape_cast %21 : vector<1x16x16x128xf32> to vector<256x128xf32>
    %c0_16 = arith.constant 0 : index
    %c256 = arith.constant 256 : index
    %23 = vector.load %arg7[%c0_16, %c256] : memref<256x1152xf32, #tpu.memory_space<vmem>>, vector<256x128xf32>
    tpu.vector_store %arg7[%c0_16, %c256], %22 {strides = array<i32>} : memref<256x1152xf32, #tpu.memory_space<vmem>>, vector<256x128xf32>,
    %24 = vector.extract_strided_slice %20 {offsets = [0, 1, 0, 0], sizes = [1, 16, 16, 128], strides = [1, 1, 1, 1]} : vector<1x18x16x128xf32> to vector<1x16x16x128xf32>
    %25 = vector.shape_cast %24 : vector<1x16x16x128xf32> to vector<256x128xf32>
    %c0_17 = arith.constant 0 : index
    %c640 = arith.constant 640 : index
    %26 = vector.load %arg7[%c0_17, %c640] : memref<256x1152xf32, #tpu.memory_space<vmem>>, vector<256x128xf32>
    tpu.vector_store %arg7[%c0_17, %c640], %25 {strides = array<i32>} : memref<256x1152xf32, #tpu.memory_space<vmem>>, vector<256x128xf32>,
    %27 = vector.extract_strided_slice %20 {offsets = [0, 2, 0, 0], sizes = [1, 16, 16, 128], strides = [1, 1, 1, 1]} : vector<1x18x16x128xf32> to vector<1x16x16x128xf32>
    %28 = vector.shape_cast %27 : vector<1x16x16x128xf32> to vector<256x128xf32>
    %c0_18 = arith.constant 0 : index
    %c1024 = arith.constant 1024 : index
    %29 = vector.load %arg7[%c0_18, %c1024] : memref<256x1152xf32, #tpu.memory_space<vmem>>, vector<256x128xf32>
    tpu.vector_store %arg7[%c0_18, %c1024], %28 {strides = array<i32>} : memref<256x1152xf32, #tpu.memory_space<vmem>>, vector<256x128xf32>,
    %c0_19 = arith.constant 0 : index
    %c0_20 = arith.constant 0 : index
    %30 = vector.load %arg7[%c0_19, %c0_20] : memref<256x1152xf32, #tpu.memory_space<vmem>>, vector<256x1152xf32>
    %c0_21 = arith.constant 0 : index
    %c0_22 = arith.constant 0 : index
    %31 = vector.load %arg2[%c0_21, %c0_22] : memref<1152x128xf32, #tpu.memory_space<vmem>>, vector<1152x128xf32>
    %cst = arith.constant dense<0.000000e+00> : vector<256x128xf32>
    %32 = tpu.matmul %30, %31, %cst {dimension_numbers = #tpu.dot_dimension_numbers<[1], [0], [0], [1], [0, 0, 1, 1], [], []>} : vector<256x1152xf32>, vector<1152x128xf32>, vector<256x128xf32> -> vector<256x128xf32>
    %c0_23 = arith.constant 0 : index
    %c0_24 = arith.constant 0 : index
    %33 = vector.load %arg3[%c0_23, %c0_24] : memref<1x128xf32, #tpu.memory_space<vmem>>, vector<1x128xf32>
    %34 = vector.broadcast %33 : vector<1x128xf32> to vector<256x128xf32>
    %35 = arith.addf %32, %34 : vector<256x128xf32>
    %cst_25 = arith.constant 0.000000e+00 : f32
    %36 = vector.broadcast %cst_25 : f32 to vector<256x128xf32>
    %37 = arith.maximumf %35, %36 : vector<256x128xf32>
    %cst_26 = arith.constant 0.000000e+00 : f32
    %38 = vector.broadcast %cst_26 : f32 to vector<1x1x18x128xf32>
    %c0_27 = arith.constant 0 : index
    %c0_28 = arith.constant 0 : index
    %c0_29 = arith.constant 0 : index
    %c0_30 = arith.constant 0 : index
    %39 = vector.load %arg8[%c0_27, %c0_28, %c0_29, %c0_30] : memref<1x18x18x128xf32, #tpu.memory_space<vmem>>, vector<1x1x18x128xf32>
    tpu.vector_store %arg8[%c0_27, %c0_28, %c0_29, %c0_30], %38 {strides = array<i32>} : memref<1x18x18x128xf32, #tpu.memory_space<vmem>>, vector<1x1x18x128xf32>,
    %cst_31 = arith.constant 0.000000e+00 : f32
    %40 = vector.broadcast %cst_31 : f32 to vector<1x1x18x128xf32>
    %c0_32 = arith.constant 0 : index
    %c17 = arith.constant 17 : index
    %c0_33 = arith.constant 0 : index
    %c0_34 = arith.constant 0 : index
    %41 = vector.load %arg8[%c0_32, %c17, %c0_33, %c0_34] : memref<1x18x18x128xf32, #tpu.memory_space<vmem>>, vector<1x1x18x128xf32>
    tpu.vector_store %arg8[%c0_32, %c17, %c0_33, %c0_34], %40 {strides = array<i32>} : memref<1x18x18x128xf32, #tpu.memory_space<vmem>>, vector<1x1x18x128xf32>,
    %cst_35 = arith.constant 0.000000e+00 : f32
    %42 = vector.broadcast %cst_35 : f32 to vector<1x18x1x128xf32>
    %c0_36 = arith.constant 0 : index
    %c0_37 = arith.constant 0 : index
    %c0_38 = arith.constant 0 : index
    %c0_39 = arith.constant 0 : index
    %43 = vector.load %arg8[%c0_36, %c0_37, %c0_38, %c0_39] : memref<1x18x18x128xf32, #tpu.memory_space<vmem>>, vector<1x18x1x128xf32>
    tpu.vector_store %arg8[%c0_36, %c0_37, %c0_38, %c0_39], %42 {strides = array<i32>} : memref<1x18x18x128xf32, #tpu.memory_space<vmem>>, vector<1x18x1x128xf32>,
    %cst_40 = arith.constant 0.000000e+00 : f32
    %44 = vector.broadcast %cst_40 : f32 to vector<1x18x1x128xf32>
    %c0_41 = arith.constant 0 : index
    %c0_42 = arith.constant 0 : index
    %c17_43 = arith.constant 17 : index
    %c0_44 = arith.constant 0 : index
    %45 = vector.load %arg8[%c0_41, %c0_42, %c17_43, %c0_44] : memref<1x18x18x128xf32, #tpu.memory_space<vmem>>, vector<1x18x1x128xf32>
    tpu.vector_store %arg8[%c0_41, %c0_42, %c17_43, %c0_44], %44 {strides = array<i32>} : memref<1x18x18x128xf32, #tpu.memory_space<vmem>>, vector<1x18x1x128xf32>,
    %46 = vector.shape_cast %37 : vector<256x128xf32> to vector<1x16x16x128xf32>
    %c0_45 = arith.constant 0 : index
    %c1_46 = arith.constant 1 : index
    %c1_47 = arith.constant 1 : index
    %c0_48 = arith.constant 0 : index
    %47 = vector.load %arg8[%c0_45, %c1_46, %c1_47, %c0_48] : memref<1x18x18x128xf32, #tpu.memory_space<vmem>>, vector<1x16x16x128xf32>
    tpu.vector_store %arg8[%c0_45, %c1_46, %c1_47, %c0_48], %46 {strides = array<i32>} : memref<1x18x18x128xf32, #tpu.memory_space<vmem>>, vector<1x16x16x128xf32>,
    %c0_49 = arith.constant 0 : index
    %c0_50 = arith.constant 0 : index
    %c0_51 = arith.constant 0 : index
    %c0_52 = arith.constant 0 : index
    %48 = vector.load %arg8[%c0_49, %c0_50, %c0_51, %c0_52] : memref<1x18x18x128xf32, #tpu.memory_space<vmem>>, vector<1x18x16x128xf32>
    %49 = vector.extract_strided_slice %48 {offsets = [0, 0, 0, 0], sizes = [1, 16, 16, 128], strides = [1, 1, 1, 1]} : vector<1x18x16x128xf32> to vector<1x16x16x128xf32>
    %50 = vector.shape_cast %49 : vector<1x16x16x128xf32> to vector<256x128xf32>
    %c0_53 = arith.constant 0 : index
    %c0_54 = arith.constant 0 : index
    %51 = vector.load %arg7[%c0_53, %c0_54] : memref<256x1152xf32, #tpu.memory_space<vmem>>, vector<256x128xf32>
    tpu.vector_store %arg7[%c0_53, %c0_54], %50 {strides = array<i32>} : memref<256x1152xf32, #tpu.memory_space<vmem>>, vector<256x128xf32>,
    %52 = vector.extract_strided_slice %48 {offsets = [0, 1, 0, 0], sizes = [1, 16, 16, 128], strides = [1, 1, 1, 1]} : vector<1x18x16x128xf32> to vector<1x16x16x128xf32>
    %53 = vector.shape_cast %52 : vector<1x16x16x128xf32> to vector<256x128xf32>
    %c0_55 = arith.constant 0 : index
    %c384_56 = arith.constant 384 : index
    %54 = vector.load %arg7[%c0_55, %c384_56] : memref<256x1152xf32, #tpu.memory_space<vmem>>, vector<256x128xf32>
    tpu.vector_store %arg7[%c0_55, %c384_56], %53 {strides = array<i32>} : memref<256x1152xf32, #tpu.memory_space<vmem>>, vector<256x128xf32>,
    %55 = vector.extract_strided_slice %48 {offsets = [0, 2, 0, 0], sizes = [1, 16, 16, 128], strides = [1, 1, 1, 1]} : vector<1x18x16x128xf32> to vector<1x16x16x128xf32>
    %56 = vector.shape_cast %55 : vector<1x16x16x128xf32> to vector<256x128xf32>
    %c0_57 = arith.constant 0 : index
    %c768_58 = arith.constant 768 : index
    %57 = vector.load %arg7[%c0_57, %c768_58] : memref<256x1152xf32, #tpu.memory_space<vmem>>, vector<256x128xf32>
    tpu.vector_store %arg7[%c0_57, %c768_58], %56 {strides = array<i32>} : memref<256x1152xf32, #tpu.memory_space<vmem>>, vector<256x128xf32>,
    %c0_59 = arith.constant 0 : index
    %c0_60 = arith.constant 0 : index
    %c1_61 = arith.constant 1 : index
    %c0_62 = arith.constant 0 : index
    %58 = vector.load %arg8[%c0_59, %c0_60, %c1_61, %c0_62] : memref<1x18x18x128xf32, #tpu.memory_space<vmem>>, vector<1x18x16x128xf32>
    %59 = vector.extract_strided_slice %58 {offsets = [0, 0, 0, 0], sizes = [1, 16, 16, 128], strides = [1, 1, 1, 1]} : vector<1x18x16x128xf32> to vector<1x16x16x128xf32>
    %60 = vector.shape_cast %59 : vector<1x16x16x128xf32> to vector<256x128xf32>
    %c0_63 = arith.constant 0 : index
    %c128_64 = arith.constant 128 : index
    %61 = vector.load %arg7[%c0_63, %c128_64] : memref<256x1152xf32, #tpu.memory_space<vmem>>, vector<256x128xf32>
    tpu.vector_store %arg7[%c0_63, %c128_64], %60 {strides = array<i32>} : memref<256x1152xf32, #tpu.memory_space<vmem>>, vector<256x128xf32>,
    %62 = vector.extract_strided_slice %58 {offsets = [0, 1, 0, 0], sizes = [1, 16, 16, 128], strides = [1, 1, 1, 1]} : vector<1x18x16x128xf32> to vector<1x16x16x128xf32>
    %63 = vector.shape_cast %62 : vector<1x16x16x128xf32> to vector<256x128xf32>
    %c0_65 = arith.constant 0 : index
    %c512_66 = arith.constant 512 : index
    %64 = vector.load %arg7[%c0_65, %c512_66] : memref<256x1152xf32, #tpu.memory_space<vmem>>, vector<256x128xf32>
    tpu.vector_store %arg7[%c0_65, %c512_66], %63 {strides = array<i32>} : memref<256x1152xf32, #tpu.memory_space<vmem>>, vector<256x128xf32>,
    %65 = vector.extract_strided_slice %58 {offsets = [0, 2, 0, 0], sizes = [1, 16, 16, 128], strides = [1, 1, 1, 1]} : vector<1x18x16x128xf32> to vector<1x16x16x128xf32>
    %66 = vector.shape_cast %65 : vector<1x16x16x128xf32> to vector<256x128xf32>
    %c0_67 = arith.constant 0 : index
    %c896_68 = arith.constant 896 : index
    %67 = vector.load %arg7[%c0_67, %c896_68] : memref<256x1152xf32, #tpu.memory_space<vmem>>, vector<256x128xf32>
    tpu.vector_store %arg7[%c0_67, %c896_68], %66 {strides = array<i32>} : memref<256x1152xf32, #tpu.memory_space<vmem>>, vector<256x128xf32>,
    %c0_69 = arith.constant 0 : index
    %c0_70 = arith.constant 0 : index
    %c2_71 = arith.constant 2 : index
    %c0_72 = arith.constant 0 : index
    %68 = vector.load %arg8[%c0_69, %c0_70, %c2_71, %c0_72] : memref<1x18x18x128xf32, #tpu.memory_space<vmem>>, vector<1x18x16x128xf32>
    %69 = vector.extract_strided_slice %68 {offsets = [0, 0, 0, 0], sizes = [1, 16, 16, 128], strides = [1, 1, 1, 1]} : vector<1x18x16x128xf32> to vector<1x16x16x128xf32>
    %70 = vector.shape_cast %69 : vector<1x16x16x128xf32> to vector<256x128xf32>
    %c0_73 = arith.constant 0 : index
    %c256_74 = arith.constant 256 : index
    %71 = vector.load %arg7[%c0_73, %c256_74] : memref<256x1152xf32, #tpu.memory_space<vmem>>, vector<256x128xf32>
    tpu.vector_store %arg7[%c0_73, %c256_74], %70 {strides = array<i32>} : memref<256x1152xf32, #tpu.memory_space<vmem>>, vector<256x128xf32>,
    %72 = vector.extract_strided_slice %68 {offsets = [0, 1, 0, 0], sizes = [1, 16, 16, 128], strides = [1, 1, 1, 1]} : vector<1x18x16x128xf32> to vector<1x16x16x128xf32>
    %73 = vector.shape_cast %72 : vector<1x16x16x128xf32> to vector<256x128xf32>
    %c0_75 = arith.constant 0 : index
    %c640_76 = arith.constant 640 : index
    %74 = vector.load %arg7[%c0_75, %c640_76] : memref<256x1152xf32, #tpu.memory_space<vmem>>, vector<256x128xf32>
    tpu.vector_store %arg7[%c0_75, %c640_76], %73 {strides = array<i32>} : memref<256x1152xf32, #tpu.memory_space<vmem>>, vector<256x128xf32>,
    %75 = vector.extract_strided_slice %68 {offsets = [0, 2, 0, 0], sizes = [1, 16, 16, 128], strides = [1, 1, 1, 1]} : vector<1x18x16x128xf32> to vector<1x16x16x128xf32>
    %76 = vector.shape_cast %75 : vector<1x16x16x128xf32> to vector<256x128xf32>
    %c0_77 = arith.constant 0 : index
    %c1024_78 = arith.constant 1024 : index
    %77 = vector.load %arg7[%c0_77, %c1024_78] : memref<256x1152xf32, #tpu.memory_space<vmem>>, vector<256x128xf32>
    tpu.vector_store %arg7[%c0_77, %c1024_78], %76 {strides = array<i32>} : memref<256x1152xf32, #tpu.memory_space<vmem>>, vector<256x128xf32>,
    %c0_79 = arith.constant 0 : index
    %c0_80 = arith.constant 0 : index
    %78 = vector.load %arg7[%c0_79, %c0_80] : memref<256x1152xf32, #tpu.memory_space<vmem>>, vector<256x1152xf32>
    %c0_81 = arith.constant 0 : index
    %c0_82 = arith.constant 0 : index
    %79 = vector.load %arg4[%c0_81, %c0_82] : memref<1152x128xf32, #tpu.memory_space<vmem>>, vector<1152x128xf32>
    %cst_83 = arith.constant dense<0.000000e+00> : vector<256x128xf32>
    %80 = tpu.matmul %78, %79, %cst_83 {dimension_numbers = #tpu.dot_dimension_numbers<[1], [0], [0], [1], [0, 0, 1, 1], [], []>} : vector<256x1152xf32>, vector<1152x128xf32>, vector<256x128xf32> -> vector<256x128xf32>
    %c0_84 = arith.constant 0 : index
    %c0_85 = arith.constant 0 : index
    %81 = vector.load %arg5[%c0_84, %c0_85] : memref<1x128xf32, #tpu.memory_space<vmem>>, vector<1x128xf32>
    %82 = vector.broadcast %81 : vector<1x128xf32> to vector<256x128xf32>
    %83 = arith.addf %80, %82 : vector<256x128xf32>
    %c0_86 = arith.constant 0 : index
    %c1_87 = arith.constant 1 : index
    %c1_88 = arith.constant 1 : index
    %c0_89 = arith.constant 0 : index
    %84 = vector.load %arg1[%c0_86, %c1_87, %c1_88, %c0_89] : memref<1x18x18x128xf32, #tpu.memory_space<vmem>>, vector<1x16x16x128xf32>
    %85 = vector.shape_cast %84 : vector<1x16x16x128xf32> to vector<256x128xf32>
    %86 = arith.addf %83, %85 : vector<256x128xf32>
    %87 = vector.shape_cast %86 : vector<256x128xf32> to vector<1x256x128xf32>
    %c0_90 = arith.constant 0 : index
    %c0_91 = arith.constant 0 : index
    %c0_92 = arith.constant 0 : index
    %88 = vector.load %arg6[%c0_90, %c0_91, %c0_92] : memref<1x256x128xf32, #tpu.memory_space<vmem>>, vector<1x256x128xf32>
    tpu.vector_store %arg6[%c0_90, %c0_91, %c0_92], %87 {strides = array<i32>} : memref<1x256x128xf32, #tpu.memory_space<vmem>>, vector<1x256x128xf32>,
    return
  }
  func.func @transform_0(%arg0: i32) -> (i32, i32, i32, i32) {
    %c0_i32 = arith.constant 0 : i32
    %c0_i32_0 = arith.constant 0 : i32
    %c0_i32_1 = arith.constant 0 : i32
    %c0_i32_2 = arith.constant 0 : i32
    return %arg0, %c0_i32, %c0_i32_0, %c0_i32_1 : i32, i32, i32, i32
  }
  func.func @transform_1(%arg0: i32) -> (i32, i32) {
    %c0_i32 = arith.constant 0 : i32
    %c0_i32_0 = arith.constant 0 : i32
    %c0_i32_1 = arith.constant 0 : i32
    return %c0_i32, %c0_i32_0 : i32, i32
  }
  func.func @transform_2(%arg0: i32) -> (i32, i32) {
    %c0_i32 = arith.constant 0 : i32
    %c0_i32_0 = arith.constant 0 : i32
    %c0_i32_1 = arith.constant 0 : i32
    return %c0_i32, %c0_i32_0 : i32, i32
  }
  func.func @transform_3(%arg0: i32) -> (i32, i32) {
    %c0_i32 = arith.constant 0 : i32
    %c0_i32_0 = arith.constant 0 : i32
    %c0_i32_1 = arith.constant 0 : i32
    return %c0_i32, %c0_i32_0 : i32, i32
  }
  func.func @transform_4(%arg0: i32) -> (i32, i32) {
    %c0_i32 = arith.constant 0 : i32
    %c0_i32_0 = arith.constant 0 : i32
    %c0_i32_1 = arith.constant 0 : i32
    return %c0_i32, %c0_i32_0 : i32, i32
  }
  func.func @transform_5(%arg0: i32) -> (i32, i32, i32) {
    %c0_i32 = arith.constant 0 : i32
    %c0_i32_0 = arith.constant 0 : i32
    %c0_i32_1 = arith.constant 0 : i32
    return %arg0, %c0_i32, %c0_i32_0 : i32, i32, i32
  }
}

</mosaic_0001>

<llo_original>
// kernel: tpu_custom_call.1
$region0: #{tpu_custom_call.1}
  #allocation0 [shape = 'u32[]', space=smem, size = 0x4, offset = 0x4, fixed_abs, tag = 'smem constant byte address 0x4 - core index']
  #allocation1 [shape = 'u32[144,128]{1,0:T(1,128)}', space=vmem, size = 0x12000, scoped, tag = 'internal scratch']
  #allocation2 [shape = 'f32[256,1152]{1,0:T(8,128)}', space=vmem, size = 0x120000, scoped, tag = 'scratch operand']
  #allocation3 [shape = 'f32[1,18,18,128]{3,2,1,0:T(8,128)}', space=vmem, size = 0x36000, scoped, tag = 'scratch operand']
  %s0 = inlined_call_operand.vmem [shape: f32[2,18,18,128], index: 0, kind: input, shape index: {}]
  %s1 = inlined_call_operand.vmem [shape: f32[1152,128], index: 1, kind: input, shape index: {}]
  %s2 = inlined_call_operand.vmem [shape: f32[1,128], index: 2, kind: input, shape index: {}]
  %s3 = inlined_call_operand.hbm [shape: f32[1152,128], index: 3, kind: input, shape index: {}]
  %s4 = inlined_call_operand.vmem [shape: f32[1,128], index: 4, kind: input, shape index: {}]
  %s5 = inlined_call_operand.hbm [shape: f32[2,256,128], index: 5, kind: output, shape index: {}]
  %s6 = sld [smem:[#allocation0]]
  $region57: #{tpu_custom_call.1} parent=0
    _
  %s8 = ssub.s32 1, %s6
  %s9 = scalar_select 0, %s8, %s6
  $region1: #{tpu_custom_call.1} parent=0
    #allocation4 [shape = 'u8[589824]{0}', space=vmem, size = 0x90000, scoped, tag = 'input window, operand 3, single buffered']
    #allocation5 [shape = 's32[2]{0}', space=sflag, size = 0x8, scoped, tag = 'scoped memory for tpu_custom_call.1']
    #allocation6 [shape = 's32[2]{0}', space=sflag, size = 0x8, scoped, tag = 'scoped memory for tpu_custom_call.1']
    #allocation7 [shape = 'u8[262144]{0}', space=vmem, size = 0x40000, scoped, tag = 'output window, operand 0']
    %10 = vsyncpa [#allocation5], 0
    %11 = vsyncpa [#allocation6], 0
    %s12 = scalar_lea.sflag [#allocation6], 1
    %13 = vsyncpa %s12, 0
    loop: start=0, step=1, limit=4
    $region2: #{tpu_custom_call.1} parent=1 // loop_pre_header
      _
    $region3: #{tpu_custom_call.1} parent=1 // loop_header
      %s15 = sphi 0, %s19
      %p16 = scmp.ge.s32.totalorder %s15, 4
      %s25 = sphi 0, %s27
      %s28 = sphi 0, %s25
      %s29 = sphi 0, %s28
      %s45 = sphi 0, %s29
      %s49 = sphi 0, %s49
      %s51 = sphi 0, %s49
      %s52 = sphi 0, %s51
      %s66 = sphi 0, %s52
      %s70 = sphi 0, %s70
      %s72 = sphi 0, %s70
      %s73 = sphi 0, %s72
      %s87 = sphi 0, %s73
      %s91 = sphi 0, %s91
      %s93 = sphi 0, %s91
      %s94 = sphi 0, %s93
      %s108 = sphi 0, %s94
      %s112 = sphi 0, %s112
      %s114 = sphi 0, %s112
      %s115 = sphi 0, %s114
      %s129 = sphi 0, %s115
      %s135 = sphi 0, %s137
      %s138 = sphi 0, %s135
      %s139 = sphi 0, %s138
      %s155 = sphi 0, %s139
    $region4: #{tpu_custom_call.1} parent=1 // loop_header_branch
      %18 = sbr.rel (%p16) target = $region8
    $region5: #{tpu_custom_call.1} parent=1 // loop_body
      %s20 = ssub.s32 %s15, 1
      %s21 = ssub.s32 %s15, 2
      %s22 = sadd.s32 %s15, 1
      %s23 = ssub.s32 %s15, %s22
      %p24 = scmp.eq.s32.totalorder %s23, 0
      %s26 = sadd.s32 %s25, 1
      %s27 = scalar_select %p24, %s25, %s26
      %p30 = pneg %p24
      %p31 = scmp.eq.s32.totalorder %s15, 1
      %p32 = por %p30, %p31
      %p33 = scmp.ne.s32.totalorder %s25, %s28
      %p34 = scmp.eq.s32.totalorder %s15, 0
      %p35 = por %p33, %p34
      %p36 = scmp.ne.s32.totalorder %s25, %s28
      %p37 = scmp.eq.s32.totalorder %s20, 1
      %p38 = por %p36, %p37
      %p39 = scmp.ne.s32.totalorder %s28, %s29
      %p40 = scmp.eq.s32.totalorder %s20, 0
      %p41 = por %p39, %p40
      %p42 = scmp.ne.s32.totalorder %s28, %s29
      %p43 = scmp.eq.s32.totalorder %s21, 1
      %p44 = por %p42, %p43
      %p46 = scmp.ne.s32.totalorder %s29, %s45
      %p47 = scmp.eq.s32.totalorder %s21, 0
      %p48 = por %p46, %p47
      %s50 = sadd.s32 %s49, 1
      %p53 = scmp.eq.s32.totalorder %s15, 1
      %p54 = scmp.ne.s32.totalorder %s49, %s51
      %p55 = scmp.eq.s32.totalorder %s15, 0
      %p56 = por %p54, %p55
      %p57 = scmp.ne.s32.totalorder %s49, %s51
      %p58 = scmp.eq.s32.totalorder %s20, 1
      %p59 = por %p57, %p58
      %p60 = scmp.ne.s32.totalorder %s51, %s52
      %p61 = scmp.eq.s32.totalorder %s20, 0
      %p62 = por %p60, %p61
      %p63 = scmp.ne.s32.totalorder %s51, %s52
      %p64 = scmp.eq.s32.totalorder %s21, 1
      %p65 = por %p63, %p64
      %p67 = scmp.ne.s32.totalorder %s52, %s66
      %p68 = scmp.eq.s32.totalorder %s21, 0
      %p69 = por %p67, %p68
      %s71 = sadd.s32 %s70, 1
      %p74 = scmp.eq.s32.totalorder %s15, 1
      %p75 = scmp.ne.s32.totalorder %s70, %s72
      %p76 = scmp.eq.s32.totalorder %s15, 0
      %p77 = por %p75, %p76
      %p78 = scmp.ne.s32.totalorder %s70, %s72
      %p79 = scmp.eq.s32.totalorder %s20, 1
      %p80 = por %p78, %p79
      %p81 = scmp.ne.s32.totalorder %s72, %s73
      %p82 = scmp.eq.s32.totalorder %s20, 0
      %p83 = por %p81, %p82
      %p84 = scmp.ne.s32.totalorder %s72, %s73
      %p85 = scmp.eq.s32.totalorder %s21, 1
      %p86 = por %p84, %p85
      %p88 = scmp.ne.s32.totalorder %s73, %s87
      %p89 = scmp.eq.s32.totalorder %s21, 0
      %p90 = por %p88, %p89
      %s92 = sadd.s32 %s91, 1
      %p95 = scmp.eq.s32.totalorder %s15, 1
      %p96 = scmp.ne.s32.totalorder %s91, %s93
      %p97 = scmp.eq.s32.totalorder %s15, 0
      %p98 = por %p96, %p97
      %p99 = scmp.ne.s32.totalorder %s91, %s93
      %p100 = scmp.eq.s32.totalorder %s20, 1
      %p101 = por %p99, %p100
      %p102 = scmp.ne.s32.totalorder %s93, %s94
      %p103 = scmp.eq.s32.totalorder %s20, 0
      %p104 = por %p102, %p103
      %p105 = scmp.ne.s32.totalorder %s93, %s94
      %p106 = scmp.eq.s32.totalorder %s21, 1
      %p107 = por %p105, %p106
      %p109 = scmp.ne.s32.totalorder %s94, %s108
      %p110 = scmp.eq.s32.totalorder %s21, 0
      %p111 = por %p109, %p110
      %s113 = sadd.s32 %s112, 1
      %p116 = scmp.eq.s32.totalorder %s15, 1
      %p117 = scmp.ne.s32.totalorder %s112, %s114
      %p118 = scmp.eq.s32.totalorder %s15, 0
      %p119 = por %p117, %p118
      %p120 = scmp.ne.s32.totalorder %s112, %s114
      %p121 = scmp.eq.s32.totalorder %s20, 1
      %p122 = por %p120, %p121
      %p123 = scmp.ne.s32.totalorder %s114, %s115
      %p124 = scmp.eq.s32.totalorder %s20, 0
      %p125 = por %p123, %p124
      %p126 = scmp.ne.s32.totalorder %s114, %s115
      %p127 = scmp.eq.s32.totalorder %s21, 1
      %p128 = por %p126, %p127
      %p130 = scmp.ne.s32.totalorder %s115, %s129
      %p131 = scmp.eq.s32.totalorder %s21, 0
      %p132 = por %p130, %p131
      %s133 = ssub.s32 %s15, %s22
      %p134 = scmp.eq.s32.totalorder %s133, 0
      %s136 = sadd.s32 %s135, 1
      %s137 = scalar_select %p134, %s135, %s136
      %p140 = pneg %p134
      %p141 = scmp.eq.s32.totalorder %s15, 1
      %p142 = por %p140, %p141
      %p143 = scmp.ne.s32.totalorder %s135, %s138
      %p144 = scmp.eq.s32.totalorder %s15, 0
      %p145 = por %p143, %p144
      %p146 = scmp.ne.s32.totalorder %s135, %s138
      %p147 = scmp.eq.s32.totalorder %s20, 1
      %p148 = por %p146, %p147
      %p149 = scmp.ne.s32.totalorder %s138, %s139
      %p150 = scmp.eq.s32.totalorder %s20, 0
      %p151 = por %p149, %p150
      %p152 = scmp.ne.s32.totalorder %s138, %s139
      %p153 = scmp.eq.s32.totalorder %s21, 1
      %p154 = por %p152, %p153
      %p156 = scmp.ne.s32.totalorder %s139, %s155
      %p157 = scmp.eq.s32.totalorder %s21, 0
      %p158 = por %p156, %p157
      %p159 = scmp.le.s32.totalorder 1, %s15
      %p160 = scmp.lt.s32.totalorder %s15, 3
      %p161 = pnand %p159, %p160
      %p162 = pneg %p161
      // Predicated region
      $region9: #{tpu_custom_call.1} parent=5 // pred_check
        _
      $region10: #{tpu_custom_call.1} parent=5 // pred_check_branch
        %164 = sbr.rel (%p161) target = $region12
      $region11: #{tpu_custom_call.1} parent=5 // pred_region
        %s165 = ssub.s32 %s15, 1
        // Predicated region
        $region13: #{tpu_custom_call.1} parent=11 // pred_check
          %p166 = pneg %p62
        $region14: #{tpu_custom_call.1} parent=11 // pred_check_branch
          %168 = sbr.rel (%p166) target = $region16
        $region15: #{tpu_custom_call.1} parent=11 // pred_region
          _
        $region16: #{tpu_custom_call.1} parent=11 // pred_fallthru
          _
        // Predicated region
        $region17: #{tpu_custom_call.1} parent=11 // pred_check
          %p169 = pneg %p83
        $region18: #{tpu_custom_call.1} parent=11 // pred_check_branch
          %171 = sbr.rel (%p169) target = $region20
        $region19: #{tpu_custom_call.1} parent=11 // pred_region
          _
        $region20: #{tpu_custom_call.1} parent=11 // pred_fallthru
          _
        // Predicated region
        $region21: #{tpu_custom_call.1} parent=11 // pred_check
          %p172 = pneg %p104
        $region22: #{tpu_custom_call.1} parent=11 // pred_check_branch
          %174 = sbr.rel (%p172) target = $region24
        $region23: #{tpu_custom_call.1} parent=11 // pred_region
          %s176 = ssub.s32 18432, 18432
          %177 = vsyncadd [#allocation5], %s176
          %s178 = sshll.u32 [#allocation4], 4
          %s179 = int_to_ptr.vmem [resolvable:$true] %s178
          %184 = dma.hbm_to_vmem [thread:$0]  %s3, 18432, %s179, [#allocation5], 128, 128, 8
        $region24: #{tpu_custom_call.1} parent=11 // pred_fallthru
          _
        // Predicated region
        $region25: #{tpu_custom_call.1} parent=11 // pred_check
          %p185 = pneg %p125
        $region26: #{tpu_custom_call.1} parent=11 // pred_check_branch
          %187 = sbr.rel (%p185) target = $region28
        $region27: #{tpu_custom_call.1} parent=11 // pred_region
          _
        $region28: #{tpu_custom_call.1} parent=11 // pred_fallthru
          _
      $region12: #{tpu_custom_call.1} parent=5 // pred_fallthru
        _
      %p188 = scmp.lt.s32.totalorder %s15, 2
      // Predicated region
      $region29: #{tpu_custom_call.1} parent=5 // pred_check
        %p189 = pneg %p188
      $region30: #{tpu_custom_call.1} parent=5 // pred_check_branch
        %191 = sbr.rel (%p189) target = $region32
      $region31: #{tpu_custom_call.1} parent=5 // pred_region
        // Predicated region
        $region33: #{tpu_custom_call.1} parent=31 // pred_check
          %p192 = pneg %p35
        $region34: #{tpu_custom_call.1} parent=31 // pred_check_branch
          %194 = sbr.rel (%p192) target = $region36
        $region35: #{tpu_custom_call.1} parent=31 // pred_region
          %p195 = scmp.lt.s32.totalorder %s15, 1
          %s196 = scalar_select %p195, %s15, 1
          %s197 = smul.addr %s196, 54
          %s198 = smul.addr %s197, 8
          %s199 = scalar_lea.vmem %s0, %s198
        $region36: #{tpu_custom_call.1} parent=31 // pred_fallthru
          _
      $region32: #{tpu_custom_call.1} parent=5 // pred_fallthru
        _
      %p200 = scmp.le.s32.totalorder 1, %s15
      %p201 = scmp.lt.s32.totalorder %s15, 3
      %p202 = pnand %p200, %p201
      %p203 = pneg %p202
      // Predicated region
      $region37: #{tpu_custom_call.1} parent=5 // pred_check
        _
      $region38: #{tpu_custom_call.1} parent=5 // pred_check_branch
        %205 = sbr.rel (%p202) target = $region40
      $region39: #{tpu_custom_call.1} parent=5 // pred_region
        %s206 = ssub.s32 %s15, 1
        // Predicated region
        $region41: #{tpu_custom_call.1} parent=39 // pred_check
          %p207 = pneg %p104
        $region42: #{tpu_custom_call.1} parent=39 // pred_check_branch
          %209 = sbr.rel (%p207) target = $region44
        $region43: #{tpu_custom_call.1} parent=39 // pred_region
          %210 = dma.done [#allocation5], 18432
        $region44: #{tpu_custom_call.1} parent=39 // pred_fallthru
          _
        %p211 = scmp.lt.s32.totalorder %s20, 1
        %s212 = scalar_select %p211, %s20, 1
        %s213 = smul.addr %s212, 54
        %s214 = smul.addr %s213, 8
        %s215 = scalar_lea.vmem %s0, %s214
        %p216 = pneg %p41
        %p217 = pneg %p38
        %p218 = pneg %p62
        %p219 = pneg %p59
        %p220 = pneg %p83
        %p221 = pneg %p80
        %p222 = pneg %p104
        %p223 = pneg %p101
        %p224 = pneg %p125
        %p225 = pneg %p122
        %p226 = pneg %p151
        %p227 = pneg %p148
        %s228 = sand.u32 %s138, 1
        %s229 = scalar_lea.sflag [#allocation6], %s228
        %s230 = sand.u32 %s138, 1
        %s231 = smul.addr %s230, 256
        %s232 = scalar_lea.vmem [#allocation7], %s231
        %p233 = scmp.lt.s32.totalorder %s20, 1
        %s234 = scalar_select %p233, %s20, 1
        %s235 = smul.addr %s234, 54
        %s236 = smul.addr %s235, 8
        %s237 = scalar_lea.vmem %s0, %s236
        %v238 = vld [vmem:[%s237] sm:$0xff]
        %v239 = vld [vmem:[%s237 + $0x8] sm:$0xff]
        %v240 = vld [vmem:[%s237 + $0x18] sm:$0xff]
        %v241 = vld [vmem:[%s237 + $0x20] sm:$0xff]
        %v242 = vld [vmem:[%s237 + $0x30] sm:$0xff]
        %v243 = vld [vmem:[%s237 + $0x38] sm:$0xff]
        %v244 = vld [vmem:[%s237 + $0x48] sm:$0xff]
        %v245 = vld [vmem:[%s237 + $0x50] sm:$0xff]
        %v246 = vld [vmem:[%s237 + $0x60] sm:$0xff]
        %v247 = vld [vmem:[%s237 + $0x68] sm:$0xff]
        %v248 = vld [vmem:[%s237 + $0x78] sm:$0xff]
        %v249 = vld [vmem:[%s237 + $0x80] sm:$0xff]
        %v250 = vld [vmem:[%s237 + $0x90] sm:$0xff]
        %v251 = vld [vmem:[%s237 + $0x98] sm:$0xff]
        %v252 = vld [vmem:[%s237 + $0xa8] sm:$0xff]
        %v253 = vld [vmem:[%s237 + $0xb0] sm:$0xff]
        %v254 = vld [vmem:[%s237 + $0xc0] sm:$0xff]
        %v255 = vld [vmem:[%s237 + $0xc8] sm:$0xff]
        %v256 = vld [vmem:[%s237 + $0xd8] sm:$0xff]
        %v257 = vld [vmem:[%s237 + $0xe0] sm:$0xff]
        %v258 = vld [vmem:[%s237 + $0xf0] sm:$0xff]
        %v259 = vld [vmem:[%s237 + $0xf8] sm:$0xff]
        %v260 = vld [vmem:[%s237 + $0x108] sm:$0xff]
        %v261 = vld [vmem:[%s237 + $0x110] sm:$0xff]
        %v262 = vld [vmem:[%s237 + $0x120] sm:$0xff]
        %v263 = vld [vmem:[%s237 + $0x128] sm:$0xff]
        %v264 = vld [vmem:[%s237 + $0x138] sm:$0xff]
        %v265 = vld [vmem:[%s237 + $0x140] sm:$0xff]
        %v266 = vld [vmem:[%s237 + $0x150] sm:$0xff]
        %v267 = vld [vmem:[%s237 + $0x158] sm:$0xff]
        %v268 = vld [vmem:[%s237 + $0x168] sm:$0xff]
        %v269 = vld [vmem:[%s237 + $0x170] sm:$0xff]
        %v270 = vld [vmem:[%s237 + $0x180] sm:$0xff]
        %v271 = vld [vmem:[%s237 + $0x188] sm:$0xff]
        %v272 = vld [vmem:[%s237 + $0x198] sm:$0xff]
        %v273 = vld [vmem:[%s237 + $0x1a0] sm:$0xff]
        %274 = vst [vmem:[#allocation2] sm:$0xff] %v238
        %275 = vst [vmem:[#allocation2 + $0x48] sm:$0xff] %v239
        %276 = vst [vmem:[#allocation2 + $0x90] sm:$0xff] %v240
        %277 = vst [vmem:[#allocation2 + $0xd8] sm:$0xff] %v241
        %278 = vst [vmem:[#allocation2 + $0x120] sm:$0xff] %v242
        %279 = vst [vmem:[#allocation2 + $0x168] sm:$0xff] %v243
        %280 = vst [vmem:[#allocation2 + $0x1b0] sm:$0xff] %v244
        %281 = vst [vmem:[#allocation2 + $0x1f8] sm:$0xff] %v245
        %282 = vst [vmem:[#allocation2 + $0x240] sm:$0xff] %v246
        %283 = vst [vmem:[#allocation2 + $0x288] sm:$0xff] %v247
        %284 = vst [vmem:[#allocation2 + $0x2d0] sm:$0xff] %v248
        %285 = vst [vmem:[#allocation2 + $0x318] sm:$0xff] %v249
        %286 = vst [vmem:[#allocation2 + $0x360] sm:$0xff] %v250
        %287 = vst [vmem:[#allocation2 + $0x3a8] sm:$0xff] %v251
        %288 = vst [vmem:[#allocation2 + $0x3f0] sm:$0xff] %v252
        %289 = vst [vmem:[#allocation2 + $0x438] sm:$0xff] %v253
        %290 = vst [vmem:[#allocation2 + $0x480] sm:$0xff] %v254
        %291 = vst [vmem:[#allocation2 + $0x4c8] sm:$0xff] %v255
        %292 = vst [vmem:[#allocation2 + $0x510] sm:$0xff] %v256
        %293 = vst [vmem:[#allocation2 + $0x558] sm:$0xff] %v257
        %294 = vst [vmem:[#allocation2 + $0x5a0] sm:$0xff] %v258
        %295 = vst [vmem:[#allocation2 + $0x5e8] sm:$0xff] %v259
        %296 = vst [vmem:[#allocation2 + $0x630] sm:$0xff] %v260
        %297 = vst [vmem:[#allocation2 + $0x678] sm:$0xff] %v261
        %298 = vst [vmem:[#allocation2 + $0x6c0] sm:$0xff] %v262
        %299 = vst [vmem:[#allocation2 + $0x708] sm:$0xff] %v263
        %300 = vst [vmem:[#allocation2 + $0x750] sm:$0xff] %v264
        %301 = vst [vmem:[#allocation2 + $0x798] sm:$0xff] %v265
        %302 = vst [vmem:[#allocation2 + $0x7e0] sm:$0xff] %v266
        %303 = vst [vmem:[#allocation2 + $0x828] sm:$0xff] %v267
        %304 = vst [vmem:[#allocation2 + $0x870] sm:$0xff] %v268
        %305 = vst [vmem:[#allocation2 + $0x8b8] sm:$0xff] %v269
        %306 = vst [vmem:[#allocation2 + $0x18] sm:$0xff] %v240
        %307 = vst [vmem:[#allocation2 + $0x60] sm:$0xff] %v241
        %308 = vst [vmem:[#allocation2 + $0xa8] sm:$0xff] %v242
        %309 = vst [vmem:[#allocation2 + $0xf0] sm:$0xff] %v243
        %310 = vst [vmem:[#allocation2 + $0x138] sm:$0xff] %v244
        %311 = vst [vmem:[#allocation2 + $0x180] sm:$0xff] %v245
        %312 = vst [vmem:[#allocation2 + $0x1c8] sm:$0xff] %v246
        %313 = vst [vmem:[#allocation2 + $0x210] sm:$0xff] %v247
        %314 = vst [vmem:[#allocation2 + $0x258] sm:$0xff] %v248
        %315 = vst [vmem:[#allocation2 + $0x2a0] sm:$0xff] %v249
        %316 = vst [vmem:[#allocation2 + $0x2e8] sm:$0xff] %v250
        %317 = vst [vmem:[#allocation2 + $0x330] sm:$0xff] %v251
        %318 = vst [vmem:[#allocation2 + $0x378] sm:$0xff] %v252
        %319 = vst [vmem:[#allocation2 + $0x3c0] sm:$0xff] %v253
        %320 = vst [vmem:[#allocation2 + $0x408] sm:$0xff] %v254
        %321 = vst [vmem:[#allocation2 + $0x450] sm:$0xff] %v255
        %322 = vst [vmem:[#allocation2 + $0x498] sm:$0xff] %v256
        %323 = vst [vmem:[#allocation2 + $0x4e0] sm:$0xff] %v257
        %324 = vst [vmem:[#allocation2 + $0x528] sm:$0xff] %v258
        %325 = vst [vmem:[#allocation2 + $0x570] sm:$0xff] %v259
        %326 = vst [vmem:[#allocation2 + $0x5b8] sm:$0xff] %v260
        %327 = vst [vmem:[#allocation2 + $0x600] sm:$0xff] %v261
        %328 = vst [vmem:[#allocation2 + $0x648] sm:$0xff] %v262
        %329 = vst [vmem:[#allocation2 + $0x690] sm:$0xff] %v263
        %330 = vst [vmem:[#allocation2 + $0x6d8] sm:$0xff] %v264
        %331 = vst [vmem:[#allocation2 + $0x720] sm:$0xff] %v265
        %332 = vst [vmem:[#allocation2 + $0x768] sm:$0xff] %v266
        %333 = vst [vmem:[#allocation2 + $0x7b0] sm:$0xff] %v267
        %334 = vst [vmem:[#allocation2 + $0x7f8] sm:$0xff] %v268
        %335 = vst [vmem:[#allocation2 + $0x840] sm:$0xff] %v269
        %336 = vst [vmem:[#allocation2 + $0x888] sm:$0xff] %v270
        %337 = vst [vmem:[#allocation2 + $0x8d0] sm:$0xff] %v271
        %338 = vst [vmem:[#allocation2 + $0x30] sm:$0xff] %v242
        %339 = vst [vmem:[#allocation2 + $0x78] sm:$0xff] %v243
        %340 = vst [vmem:[#allocation2 + $0xc0] sm:$0xff] %v244
        %341 = vst [vmem:[#allocation2 + $0x108] sm:$0xff] %v245
        %342 = vst [vmem:[#allocation2 + $0x150] sm:$0xff] %v246
        %343 = vst [vmem:[#allocation2 + $0x198] sm:$0xff] %v247
        %344 = vst [vmem:[#allocation2 + $0x1e0] sm:$0xff] %v248
        %345 = vst [vmem:[#allocation2 + $0x228] sm:$0xff] %v249
        %346 = vst [vmem:[#allocation2 + $0x270] sm:$0xff] %v250
        %347 = vst [vmem:[#allocation2 + $0x2b8] sm:$0xff] %v251
        %348 = vst [vmem:[#allocation2 + $0x300] sm:$0xff] %v252
        %349 = vst [vmem:[#allocation2 + $0x348] sm:$0xff] %v253
        %350 = vst [vmem:[#allocation2 + $0x390] sm:$0xff] %v254
        %351 = vst [vmem:[#allocation2 + $0x3d8] sm:$0xff] %v255
        %352 = vst [vmem:[#allocation2 + $0x420] sm:$0xff] %v256
        %353 = vst [vmem:[#allocation2 + $0x468] sm:$0xff] %v257
        %354 = vst [vmem:[#allocation2 + $0x4b0] sm:$0xff] %v258
        %355 = vst [vmem:[#allocation2 + $0x4f8] sm:$0xff] %v259
        %356 = vst [vmem:[#allocation2 + $0x540] sm:$0xff] %v260
        %357 = vst [vmem:[#allocation2 + $0x588] sm:$0xff] %v261
        %358 = vst [vmem:[#allocation2 + $0x5d0] sm:$0xff] %v262
        %359 = vst [vmem:[#allocation2 + $0x618] sm:$0xff] %v263
        %360 = vst [vmem:[#allocation2 + $0x660] sm:$0xff] %v264
        %361 = vst [vmem:[#allocation2 + $0x6a8] sm:$0xff] %v265
        %362 = vst [vmem:[#allocation2 + $0x6f0] sm:$0xff] %v266
        %363 = vst [vmem:[#allocation2 + $0x738] sm:$0xff] %v267
        %364 = vst [vmem:[#allocation2 + $0x780] sm:$0xff] %v268
        %365 = vst [vmem:[#allocation2 + $0x7c8] sm:$0xff] %v269
        %366 = vst [vmem:[#allocation2 + $0x810] sm:$0xff] %v270
        %367 = vst [vmem:[#allocation2 + $0x858] sm:$0xff] %v271
        %368 = vst [vmem:[#allocation2 + $0x8a0] sm:$0xff] %v272
        %369 = vst [vmem:[#allocation2 + $0x8e8] sm:$0xff] %v273
        %v370 = vld [vmem:[%s237 + $0x1] sm:$0xff]
        %v371 = vld [vmem:[%s237 + $0x9] sm:$0xff]
        %v372 = vld [vmem:[%s237 + $0x19] sm:$0xff]
        %v373 = vld [vmem:[%s237 + $0x21] sm:$0xff]
        %v374 = vld [vmem:[%s237 + $0x31] sm:$0xff]
        %v375 = vld [vmem:[%s237 + $0x39] sm:$0xff]
        %v376 = vld [vmem:[%s237 + $0x49] sm:$0xff]
        %v377 = vld [vmem:[%s237 + $0x51] sm:$0xff]
        %v378 = vld [vmem:[%s237 + $0x61] sm:$0xff]
        %v379 = vld [vmem:[%s237 + $0x69] sm:$0xff]
        %v380 = vld [vmem:[%s237 + $0x79] sm:$0xff]
        %v381 = vld [vmem:[%s237 + $0x81] sm:$0xff]
        %v382 = vld [vmem:[%s237 + $0x91] sm:$0xff]
        %v383 = vld [vmem:[%s237 + $0x99] sm:$0xff]
        %v384 = vld [vmem:[%s237 + $0xa9] sm:$0xff]
        %v385 = vld [vmem:[%s237 + $0xb1] sm:$0xff]
        %v386 = vld [vmem:[%s237 + $0xc1] sm:$0xff]
        %v387 = vld [vmem:[%s237 + $0xc9] sm:$0xff]
        %v388 = vld [vmem:[%s237 + $0xd9] sm:$0xff]
        %v389 = vld [vmem:[%s237 + $0xe1] sm:$0xff]
        %v390 = vld [vmem:[%s237 + $0xf1] sm:$0xff]
        %v391 = vld [vmem:[%s237 + $0xf9] sm:$0xff]
        %v392 = vld [vmem:[%s237 + $0x109] sm:$0xff]
        %v393 = vld [vmem:[%s237 + $0x111] sm:$0xff]
        %v394 = vld [vmem:[%s237 + $0x121] sm:$0xff]
        %v395 = vld [vmem:[%s237 + $0x129] sm:$0xff]
        %v396 = vld [vmem:[%s237 + $0x139] sm:$0xff]
        %v397 = vld [vmem:[%s237 + $0x141] sm:$0xff]
        %v398 = vld [vmem:[%s237 + $0x151] sm:$0xff]
        %v399 = vld [vmem:[%s237 + $0x159] sm:$0xff]
        %v400 = vld [vmem:[%s237 + $0x169] sm:$0xff]
        %v401 = vld [vmem:[%s237 + $0x171] sm:$0xff]
        %v402 = vld [vmem:[%s237 + $0x181] sm:$0xff]
        %v403 = vld [vmem:[%s237 + $0x189] sm:$0xff]
        %v404 = vld [vmem:[%s237 + $0x199] sm:$0xff]
        %v405 = vld [vmem:[%s237 + $0x1a1] sm:$0xff]
        %406 = vst [vmem:[#allocation2 + $0x8] sm:$0xff] %v370
        %407 = vst [vmem:[#allocation2 + $0x50] sm:$0xff] %v371
        %408 = vst [vmem:[#allocation2 + $0x98] sm:$0xff] %v372
        %409 = vst [vmem:[#allocation2 + $0xe0] sm:$0xff] %v373
        %410 = vst [vmem:[#allocation2 + $0x128] sm:$0xff] %v374
        %411 = vst [vmem:[#allocation2 + $0x170] sm:$0xff] %v375
        %412 = vst [vmem:[#allocation2 + $0x1b8] sm:$0xff] %v376
        %413 = vst [vmem:[#allocation2 + $0x200] sm:$0xff] %v377
        %414 = vst [vmem:[#allocation2 + $0x248] sm:$0xff] %v378
        %415 = vst [vmem:[#allocation2 + $0x290] sm:$0xff] %v379
        %416 = vst [vmem:[#allocation2 + $0x2d8] sm:$0xff] %v380
        %417 = vst [vmem:[#allocation2 + $0x320] sm:$0xff] %v381
        %418 = vst [vmem:[#allocation2 + $0x368] sm:$0xff] %v382
        %419 = vst [vmem:[#allocation2 + $0x3b0] sm:$0xff] %v383
        %420 = vst [vmem:[#allocation2 + $0x3f8] sm:$0xff] %v384
        %421 = vst [vmem:[#allocation2 + $0x440] sm:$0xff] %v385
        %422 = vst [vmem:[#allocation2 + $0x488] sm:$0xff] %v386
        %423 = vst [vmem:[#allocation2 + $0x4d0] sm:$0xff] %v387
        %424 = vst [vmem:[#allocation2 + $0x518] sm:$0xff] %v388
        %425 = vst [vmem:[#allocation2 + $0x560] sm:$0xff] %v389
        %426 = vst [vmem:[#allocation2 + $0x5a8] sm:$0xff] %v390
        %427 = vst [vmem:[#allocation2 + $0x5f0] sm:$0xff] %v391
        %428 = vst [vmem:[#allocation2 + $0x638] sm:$0xff] %v392
        %429 = vst [vmem:[#allocation2 + $0x680] sm:$0xff] %v393
        %430 = vst [vmem:[#allocation2 + $0x6c8] sm:$0xff] %v394
        %431 = vst [vmem:[#allocation2 + $0x710] sm:$0xff] %v395
        %432 = vst [vmem:[#allocation2 + $0x758] sm:$0xff] %v396
        %433 = vst [vmem:[#allocation2 + $0x7a0] sm:$0xff] %v397
        %434 = vst [vmem:[#allocation2 + $0x7e8] sm:$0xff] %v398
        %435 = vst [vmem:[#allocation2 + $0x830] sm:$0xff] %v399
        %436 = vst [vmem:[#allocation2 + $0x878] sm:$0xff] %v400
        %437 = vst [vmem:[#allocation2 + $0x8c0] sm:$0xff] %v401
        %438 = vst [vmem:[#allocation2 + $0x20] sm:$0xff] %v372
        %439 = vst [vmem:[#allocation2 + $0x68] sm:$0xff] %v373
        %440 = vst [vmem:[#allocation2 + $0xb0] sm:$0xff] %v374
        %441 = vst [vmem:[#allocation2 + $0xf8] sm:$0xff] %v375
        %442 = vst [vmem:[#allocation2 + $0x140] sm:$0xff] %v376
        %443 = vst [vmem:[#allocation2 + $0x188] sm:$0xff] %v377
        %444 = vst [vmem:[#allocation2 + $0x1d0] sm:$0xff] %v378
        %445 = vst [vmem:[#allocation2 + $0x218] sm:$0xff] %v379
        %446 = vst [vmem:[#allocation2 + $0x260] sm:$0xff] %v380
        %447 = vst [vmem:[#allocation2 + $0x2a8] sm:$0xff] %v381
        %448 = vst [vmem:[#allocation2 + $0x2f0] sm:$0xff] %v382
        %449 = vst [vmem:[#allocation2 + $0x338] sm:$0xff] %v383
        %450 = vst [vmem:[#allocation2 + $0x380] sm:$0xff] %v384
        %451 = vst [vmem:[#allocation2 + $0x3c8] sm:$0xff] %v385
        %452 = vst [vmem:[#allocation2 + $0x410] sm:$0xff] %v386
        %453 = vst [vmem:[#allocation2 + $0x458] sm:$0xff] %v387
        %454 = vst [vmem:[#allocation2 + $0x4a0] sm:$0xff] %v388
        %455 = vst [vmem:[#allocation2 + $0x4e8] sm:$0xff] %v389
        %456 = vst [vmem:[#allocation2 + $0x530] sm:$0xff] %v390
        %457 = vst [vmem:[#allocation2 + $0x578] sm:$0xff] %v391
        %458 = vst [vmem:[#allocation2 + $0x5c0] sm:$0xff] %v392
        %459 = vst [vmem:[#allocation2 + $0x608] sm:$0xff] %v393
        %460 = vst [vmem:[#allocation2 + $0x650] sm:$0xff] %v394
        %461 = vst [vmem:[#allocation2 + $0x698] sm:$0xff] %v395
        %462 = vst [vmem:[#allocation2 + $0x6e0] sm:$0xff] %v396
        %463 = vst [vmem:[#allocation2 + $0x728] sm:$0xff] %v397
        %464 = vst [vmem:[#allocation2 + $0x770] sm:$0xff] %v398
        %465 = vst [vmem:[#allocation2 + $0x7b8] sm:$0xff] %v399
        %466 = vst [vmem:[#allocation2 + $0x800] sm:$0xff] %v400
        %467 = vst [vmem:[#allocation2 + $0x848] sm:$0xff] %v401
        %468 = vst [vmem:[#allocation2 + $0x890] sm:$0xff] %v402
        %469 = vst [vmem:[#allocation2 + $0x8d8] sm:$0xff] %v403
        %470 = vst [vmem:[#allocation2 + $0x38] sm:$0xff] %v374
        %471 = vst [vmem:[#allocation2 + $0x80] sm:$0xff] %v375
        %472 = vst [vmem:[#allocation2 + $0xc8] sm:$0xff] %v376
        %473 = vst [vmem:[#allocation2 + $0x110] sm:$0xff] %v377
        %474 = vst [vmem:[#allocation2 + $0x158] sm:$0xff] %v378
        %475 = vst [vmem:[#allocation2 + $0x1a0] sm:$0xff] %v379
        %476 = vst [vmem:[#allocation2 + $0x1e8] sm:$0xff] %v380
        %477 = vst [vmem:[#allocation2 + $0x230] sm:$0xff] %v381
        %478 = vst [vmem:[#allocation2 + $0x278] sm:$0xff] %v382
        %479 = vst [vmem:[#allocation2 + $0x2c0] sm:$0xff] %v383
        %480 = vst [vmem:[#allocation2 + $0x308] sm:$0xff] %v384
        %481 = vst [vmem:[#allocation2 + $0x350] sm:$0xff] %v385
        %482 = vst [vmem:[#allocation2 + $0x398] sm:$0xff] %v386
        %483 = vst [vmem:[#allocation2 + $0x3e0] sm:$0xff] %v387
        %484 = vst [vmem:[#allocation2 + $0x428] sm:$0xff] %v388
        %485 = vst [vmem:[#allocation2 + $0x470] sm:$0xff] %v389
        %486 = vst [vmem:[#allocation2 + $0x4b8] sm:$0xff] %v390
        %487 = vst [vmem:[#allocation2 + $0x500] sm:$0xff] %v391
        %488 = vst [vmem:[#allocation2 + $0x548] sm:$0xff] %v392
        %489 = vst [vmem:[#allocation2 + $0x590] sm:$0xff] %v393
        %490 = vst [vmem:[#allocation2 + $0x5d8] sm:$0xff] %v394
        %491 = vst [vmem:[#allocation2 + $0x620] sm:$0xff] %v395
        %492 = vst [vmem:[#allocation2 + $0x668] sm:$0xff] %v396
        %493 = vst [vmem:[#allocation2 + $0x6b0] sm:$0xff] %v397
        %494 = vst [vmem:[#allocation2 + $0x6f8] sm:$0xff] %v398
        %495 = vst [vmem:[#allocation2 + $0x740] sm:$0xff] %v399
        %496 = vst [vmem:[#allocation2 + $0x788] sm:$0xff] %v400
        %497 = vst [vmem:[#allocation2 + $0x7d0] sm:$0xff] %v401
        %498 = vst [vmem:[#allocation2 + $0x818] sm:$0xff] %v402
        %499 = vst [vmem:[#allocation2 + $0x860] sm:$0xff] %v403
        %500 = vst [vmem:[#allocation2 + $0x8a8] sm:$0xff] %v404
        %501 = vst [vmem:[#allocation2 + $0x8f0] sm:$0xff] %v405
        %v502 = vld [vmem:[%s237 + $0x2] sm:$0xff]
        %v503 = vld [vmem:[%s237 + $0xa] sm:$0xff]
        %v504 = vld [vmem:[%s237 + $0x1a] sm:$0xff]
        %v505 = vld [vmem:[%s237 + $0x22] sm:$0xff]
        %v506 = vld [vmem:[%s237 + $0x32] sm:$0xff]
        %v507 = vld [vmem:[%s237 + $0x3a] sm:$0xff]
        %v508 = vld [vmem:[%s237 + $0x4a] sm:$0xff]
        %v509 = vld [vmem:[%s237 + $0x52] sm:$0xff]
        %v510 = vld [vmem:[%s237 + $0x62] sm:$0xff]
        %v511 = vld [vmem:[%s237 + $0x6a] sm:$0xff]
        %v512 = vld [vmem:[%s237 + $0x7a] sm:$0xff]
        %v513 = vld [vmem:[%s237 + $0x82] sm:$0xff]
        %v514 = vld [vmem:[%s237 + $0x92] sm:$0xff]
        %v515 = vld [vmem:[%s237 + $0x9a] sm:$0xff]
        %v516 = vld [vmem:[%s237 + $0xaa] sm:$0xff]
        %v517 = vld [vmem:[%s237 + $0xb2] sm:$0xff]
        %v518 = vld [vmem:[%s237 + $0xc2] sm:$0xff]
        %v519 = vld [vmem:[%s237 + $0xca] sm:$0xff]
        %v520 = vld [vmem:[%s237 + $0xda] sm:$0xff]
        %v521 = vld [vmem:[%s237 + $0xe2] sm:$0xff]
        %v522 = vld [vmem:[%s237 + $0xf2] sm:$0xff]
        %v523 = vld [vmem:[%s237 + $0xfa] sm:$0xff]
        %v524 = vld [vmem:[%s237 + $0x10a] sm:$0xff]
        %v525 = vld [vmem:[%s237 + $0x112] sm:$0xff]
        %v526 = vld [vmem:[%s237 + $0x122] sm:$0xff]
        %v527 = vld [vmem:[%s237 + $0x12a] sm:$0xff]
        %v528 = vld [vmem:[%s237 + $0x13a] sm:$0xff]
        %v529 = vld [vmem:[%s237 + $0x142] sm:$0xff]
        %v530 = vld [vmem:[%s237 + $0x152] sm:$0xff]
        %v531 = vld [vmem:[%s237 + $0x15a] sm:$0xff]
        %v532 = vld [vmem:[%s237 + $0x16a] sm:$0xff]
        %v533 = vld [vmem:[%s237 + $0x172] sm:$0xff]
        %v534 = vld [vmem:[%s237 + $0x182] sm:$0xff]
        %v535 = vld [vmem:[%s237 + $0x18a] sm:$0xff]
        %v536 = vld [vmem:[%s237 + $0x19a] sm:$0xff]
        %v537 = vld [vmem:[%s237 + $0x1a2] sm:$0xff]
        %538 = vst [vmem:[#allocation2 + $0x10] sm:$0xff] %v502
        %539 = vst [vmem:[#allocation2 + $0x58] sm:$0xff] %v503
        %540 = vst [vmem:[#allocation2 + $0xa0] sm:$0xff] %v504
        %541 = vst [vmem:[#allocation2 + $0xe8] sm:$0xff] %v505
        %542 = vst [vmem:[#allocation2 + $0x130] sm:$0xff] %v506
        %543 = vst [vmem:[#allocation2 + $0x178] sm:$0xff] %v507
        %544 = vst [vmem:[#allocation2 + $0x1c0] sm:$0xff] %v508
        %545 = vst [vmem:[#allocation2 + $0x208] sm:$0xff] %v509
        %546 = vst [vmem:[#allocation2 + $0x250] sm:$0xff] %v510
        %547 = vst [vmem:[#allocation2 + $0x298] sm:$0xff] %v511
        %548 = vst [vmem:[#allocation2 + $0x2e0] sm:$0xff] %v512
        %549 = vst [vmem:[#allocation2 + $0x328] sm:$0xff] %v513
        %550 = vst [vmem:[#allocation2 + $0x370] sm:$0xff] %v514
        %551 = vst [vmem:[#allocation2 + $0x3b8] sm:$0xff] %v515
        %552 = vst [vmem:[#allocation2 + $0x400] sm:$0xff] %v516
        %553 = vst [vmem:[#allocation2 + $0x448] sm:$0xff] %v517
        %554 = vst [vmem:[#allocation2 + $0x490] sm:$0xff] %v518
        %555 = vst [vmem:[#allocation2 + $0x4d8] sm:$0xff] %v519
        %556 = vst [vmem:[#allocation2 + $0x520] sm:$0xff] %v520
        %557 = vst [vmem:[#allocation2 + $0x568] sm:$0xff] %v521
        %558 = vst [vmem:[#allocation2 + $0x5b0] sm:$0xff] %v522
        %559 = vst [vmem:[#allocation2 + $0x5f8] sm:$0xff] %v523
        %560 = vst [vmem:[#allocation2 + $0x640] sm:$0xff] %v524
        %561 = vst [vmem:[#allocation2 + $0x688] sm:$0xff] %v525
        %562 = vst [vmem:[#allocation2 + $0x6d0] sm:$0xff] %v526
        %563 = vst [vmem:[#allocation2 + $0x718] sm:$0xff] %v527
        %564 = vst [vmem:[#allocation2 + $0x760] sm:$0xff] %v528
        %565 = vst [vmem:[#allocation2 + $0x7a8] sm:$0xff] %v529
        %566 = vst [vmem:[#allocation2 + $0x7f0] sm:$0xff] %v530
        %567 = vst [vmem:[#allocation2 + $0x838] sm:$0xff] %v531
        %568 = vst [vmem:[#allocation2 + $0x880] sm:$0xff] %v532
        %569 = vst [vmem:[#allocation2 + $0x8c8] sm:$0xff] %v533
        %570 = vst [vmem:[#allocation2 + $0x28] sm:$0xff] %v504
        %571 = vst [vmem:[#allocation2 + $0x70] sm:$0xff] %v505
        %572 = vst [vmem:[#allocation2 + $0xb8] sm:$0xff] %v506
        %573 = vst [vmem:[#allocation2 + $0x100] sm:$0xff] %v507
        %574 = vst [vmem:[#allocation2 + $0x148] sm:$0xff] %v508
        %575 = vst [vmem:[#allocation2 + $0x190] sm:$0xff] %v509
        %576 = vst [vmem:[#allocation2 + $0x1d8] sm:$0xff] %v510
        %577 = vst [vmem:[#allocation2 + $0x220] sm:$0xff] %v511
        %578 = vst [vmem:[#allocation2 + $0x268] sm:$0xff] %v512
        %579 = vst [vmem:[#allocation2 + $0x2b0] sm:$0xff] %v513
        %580 = vst [vmem:[#allocation2 + $0x2f8] sm:$0xff] %v514
        %581 = vst [vmem:[#allocation2 + $0x340] sm:$0xff] %v515
        %582 = vst [vmem:[#allocation2 + $0x388] sm:$0xff] %v516
        %583 = vst [vmem:[#allocation2 + $0x3d0] sm:$0xff] %v517
        %584 = vst [vmem:[#allocation2 + $0x418] sm:$0xff] %v518
        %585 = vst [vmem:[#allocation2 + $0x460] sm:$0xff] %v519
        %586 = vst [vmem:[#allocation2 + $0x4a8] sm:$0xff] %v520
        %587 = vst [vmem:[#allocation2 + $0x4f0] sm:$0xff] %v521
        %588 = vst [vmem:[#allocation2 + $0x538] sm:$0xff] %v522
        %589 = vst [vmem:[#allocation2 + $0x580] sm:$0xff] %v523
        %590 = vst [vmem:[#allocation2 + $0x5c8] sm:$0xff] %v524
        %591 = vst [vmem:[#allocation2 + $0x610] sm:$0xff] %v525
        %592 = vst [vmem:[#allocation2 + $0x658] sm:$0xff] %v526
        %593 = vst [vmem:[#allocation2 + $0x6a0] sm:$0xff] %v527
        %594 = vst [vmem:[#allocation2 + $0x6e8] sm:$0xff] %v528
        %595 = vst [vmem:[#allocation2 + $0x730] sm:$0xff] %v529
        %596 = vst [vmem:[#allocation2 + $0x778] sm:$0xff] %v530
        %597 = vst [vmem:[#allocation2 + $0x7c0] sm:$0xff] %v531
        %598 = vst [vmem:[#allocation2 + $0x808] sm:$0xff] %v532
        %599 = vst [vmem:[#allocation2 + $0x850] sm:$0xff] %v533
        %600 = vst [vmem:[#allocation2 + $0x898] sm:$0xff] %v534
        %601 = vst [vmem:[#allocation2 + $0x8e0] sm:$0xff] %v535
        %602 = vst [vmem:[#allocation2 + $0x40] sm:$0xff] %v506
        %603 = vst [vmem:[#allocation2 + $0x88] sm:$0xff] %v507
        %604 = vst [vmem:[#allocation2 + $0xd0] sm:$0xff] %v508
        %605 = vst [vmem:[#allocation2 + $0x118] sm:$0xff] %v509
        %606 = vst [vmem:[#allocation2 + $0x160] sm:$0xff] %v510
        %607 = vst [vmem:[#allocation2 + $0x1a8] sm:$0xff] %v511
        %608 = vst [vmem:[#allocation2 + $0x1f0] sm:$0xff] %v512
        %609 = vst [vmem:[#allocation2 + $0x238] sm:$0xff] %v513
        %610 = vst [vmem:[#allocation2 + $0x280] sm:$0xff] %v514
        %611 = vst [vmem:[#allocation2 + $0x2c8] sm:$0xff] %v515
        %612 = vst [vmem:[#allocation2 + $0x310] sm:$0xff] %v516
        %613 = vst [vmem:[#allocation2 + $0x358] sm:$0xff] %v517
        %614 = vst [vmem:[#allocation2 + $0x3a0] sm:$0xff] %v518
        %615 = vst [vmem:[#allocation2 + $0x3e8] sm:$0xff] %v519
        %616 = vst [vmem:[#allocation2 + $0x430] sm:$0xff] %v520
        %617 = vst [vmem:[#allocation2 + $0x478] sm:$0xff] %v521
        %618 = vst [vmem:[#allocation2 + $0x4c0] sm:$0xff] %v522
        %619 = vst [vmem:[#allocation2 + $0x508] sm:$0xff] %v523
        %620 = vst [vmem:[#allocation2 + $0x550] sm:$0xff] %v524
        %621 = vst [vmem:[#allocation2 + $0x598] sm:$0xff] %v525
        %622 = vst [vmem:[#allocation2 + $0x5e0] sm:$0xff] %v526
        %623 = vst [vmem:[#allocation2 + $0x628] sm:$0xff] %v527
        %624 = vst [vmem:[#allocation2 + $0x670] sm:$0xff] %v528
        %625 = vst [vmem:[#allocation2 + $0x6b8] sm:$0xff] %v529
        %626 = vst [vmem:[#allocation2 + $0x700] sm:$0xff] %v530
        %627 = vst [vmem:[#allocation2 + $0x748] sm:$0xff] %v531
        %628 = vst [vmem:[#allocation2 + $0x790] sm:$0xff] %v532
        %629 = vst [vmem:[#allocation2 + $0x7d8] sm:$0xff] %v533
        %630 = vst [vmem:[#allocation2 + $0x820] sm:$0xff] %v534
        %631 = vst [vmem:[#allocation2 + $0x868] sm:$0xff] %v535
        %632 = vst [vmem:[#allocation2 + $0x8b0] sm:$0xff] %v536
        %633 = vst [vmem:[#allocation2 + $0x8f8] sm:$0xff] %v537
        %v634 = vld [vmem:[#allocation2] sm:$0xff]
        %v635 = vld [vmem:[#allocation2 + $0x8] sm:$0xff]
        %v636 = vld [vmem:[#allocation2 + $0x10] sm:$0xff]
        %v637 = vld [vmem:[#allocation2 + $0x18] sm:$0xff]
        %v638 = vld [vmem:[#allocation2 + $0x20] sm:$0xff]
        %v639 = vld [vmem:[#allocation2 + $0x28] sm:$0xff]
        %v640 = vld [vmem:[#allocation2 + $0x30] sm:$0xff]
        %v641 = vld [vmem:[#allocation2 + $0x38] sm:$0xff]
        %v642 = vld [vmem:[#allocation2 + $0x40] sm:$0xff]
        %v643 = vld [vmem:[#allocation2 + $0x48] sm:$0xff]
        %v644 = vld [vmem:[#allocation2 + $0x50] sm:$0xff]
        %v645 = vld [vmem:[#allocation2 + $0x58] sm:$0xff]
        %v646 = vld [vmem:[#allocation2 + $0x60] sm:$0xff]
        %v647 = vld [vmem:[#allocation2 + $0x68] sm:$0xff]
        %v648 = vld [vmem:[#allocation2 + $0x70] sm:$0xff]
        %v649 = vld [vmem:[#allocation2 + $0x78] sm:$0xff]
        %v650 = vld [vmem:[#allocation2 + $0x80] sm:$0xff]
        %v651 = vld [vmem:[#allocation2 + $0x88] sm:$0xff]
        %v652 = vld [vmem:[#allocation2 + $0x90] sm:$0xff]
        %v653 = vld [vmem:[#allocation2 + $0x98] sm:$0xff]
        %v654 = vld [vmem:[#allocation2 + $0xa0] sm:$0xff]
        %v655 = vld [vmem:[#allocation2 + $0xa8] sm:$0xff]
        %v656 = vld [vmem:[#allocation2 + $0xb0] sm:$0xff]
        %v657 = vld [vmem:[#allocation2 + $0xb8] sm:$0xff]
        %v658 = vld [vmem:[#allocation2 + $0xc0] sm:$0xff]
        %v659 = vld [vmem:[#allocation2 + $0xc8] sm:$0xff]
        %v660 = vld [vmem:[#allocation2 + $0xd0] sm:$0xff]
        %v661 = vld [vmem:[#allocation2 + $0xd8] sm:$0xff]
        %v662 = vld [vmem:[#allocation2 + $0xe0] sm:$0xff]
        %v663 = vld [vmem:[#allocation2 + $0xe8] sm:$0xff]
        %v664 = vld [vmem:[#allocation2 + $0xf0] sm:$0xff]
        %v665 = vld [vmem:[#allocation2 + $0xf8] sm:$0xff]
        %v666 = vld [vmem:[#allocation2 + $0x100] sm:$0xff]
        %v667 = vld [vmem:[#allocation2 + $0x108] sm:$0xff]
        %v668 = vld [vmem:[#allocation2 + $0x110] sm:$0xff]
        %v669 = vld [vmem:[#allocation2 + $0x118] sm:$0xff]
        %v670 = vld [vmem:[#allocation2 + $0x120] sm:$0xff]
        %v671 = vld [vmem:[#allocation2 + $0x128] sm:$0xff]
        %v672 = vld [vmem:[#allocation2 + $0x130] sm:$0xff]
        %v673 = vld [vmem:[#allocation2 + $0x138] sm:$0xff]
        %v674 = vld [vmem:[#allocation2 + $0x140] sm:$0xff]
        %v675 = vld [vmem:[#allocation2 + $0x148] sm:$0xff]
        %v676 = vld [vmem:[#allocation2 + $0x150] sm:$0xff]
        %v677 = vld [vmem:[#allocation2 + $0x158] sm:$0xff]
        %v678 = vld [vmem:[#allocation2 + $0x160] sm:$0xff]
        %v679 = vld [vmem:[#allocation2 + $0x168] sm:$0xff]
        %v680 = vld [vmem:[#allocation2 + $0x170] sm:$0xff]
        %v681 = vld [vmem:[#allocation2 + $0x178] sm:$0xff]
        %v682 = vld [vmem:[#allocation2 + $0x180] sm:$0xff]
        %v683 = vld [vmem:[#allocation2 + $0x188] sm:$0xff]
        %v684 = vld [vmem:[#allocation2 + $0x190] sm:$0xff]
        %v685 = vld [vmem:[#allocation2 + $0x198] sm:$0xff]
        %v686 = vld [vmem:[#allocation2 + $0x1a0] sm:$0xff]
        %v687 = vld [vmem:[#allocation2 + $0x1a8] sm:$0xff]
        %v688 = vld [vmem:[#allocation2 + $0x1b0] sm:$0xff]
        %v689 = vld [vmem:[#allocation2 + $0x1b8] sm:$0xff]
        %v690 = vld [vmem:[#allocation2 + $0x1c0] sm:$0xff]
        %v691 = vld [vmem:[#allocation2 + $0x1c8] sm:$0xff]
        %v692 = vld [vmem:[#allocation2 + $0x1d0] sm:$0xff]
        %v693 = vld [vmem:[#allocation2 + $0x1d8] sm:$0xff]
        %v694 = vld [vmem:[#allocation2 + $0x1e0] sm:$0xff]
        %v695 = vld [vmem:[#allocation2 + $0x1e8] sm:$0xff]
        %v696 = vld [vmem:[#allocation2 + $0x1f0] sm:$0xff]
        %v697 = vld [vmem:[#allocation2 + $0x1f8] sm:$0xff]
        %v698 = vld [vmem:[#allocation2 + $0x200] sm:$0xff]
        %v699 = vld [vmem:[#allocation2 + $0x208] sm:$0xff]
        %v700 = vld [vmem:[#allocation2 + $0x210] sm:$0xff]
        %v701 = vld [vmem:[#allocation2 + $0x218] sm:$0xff]
        %v702 = vld [vmem:[#allocation2 + $0x220] sm:$0xff]
        %v703 = vld [vmem:[#allocation2 + $0x228] sm:$0xff]
        %v704 = vld [vmem:[#allocation2 + $0x230] sm:$0xff]
        %v705 = vld [vmem:[#allocation2 + $0x238] sm:$0xff]
        %v706 = vld [vmem:[#allocation2 + $0x240] sm:$0xff]
        %v707 = vld [vmem:[#allocation2 + $0x248] sm:$0xff]
        %v708 = vld [vmem:[#allocation2 + $0x250] sm:$0xff]
        %v709 = vld [vmem:[#allocation2 + $0x258] sm:$0xff]
        %v710 = vld [vmem:[#allocation2 + $0x260] sm:$0xff]
        %v711 = vld [vmem:[#allocation2 + $0x268] sm:$0xff]
        %v712 = vld [vmem:[#allocation2 + $0x270] sm:$0xff]
        %v713 = vld [vmem:[#allocation2 + $0x278] sm:$0xff]
        %v714 = vld [vmem:[#allocation2 + $0x280] sm:$0xff]
        %v715 = vld [vmem:[#allocation2 + $0x288] sm:$0xff]
        %v716 = vld [vmem:[#allocation2 + $0x290] sm:$0xff]
        %v717 = vld [vmem:[#allocation2 + $0x298] sm:$0xff]
        %v718 = vld [vmem:[#allocation2 + $0x2a0] sm:$0xff]
        %v719 = vld [vmem:[#allocation2 + $0x2a8] sm:$0xff]
        %v720 = vld [vmem:[#allocation2 + $0x2b0] sm:$0xff]
        %v721 = vld [vmem:[#allocation2 + $0x2b8] sm:$0xff]
        %v722 = vld [vmem:[#allocation2 + $0x2c0] sm:$0xff]
        %v723 = vld [vmem:[#allocation2 + $0x2c8] sm:$0xff]
        %v724 = vld [vmem:[#allocation2 + $0x2d0] sm:$0xff]
        %v725 = vld [vmem:[#allocation2 + $0x2d8] sm:$0xff]
        %v726 = vld [vmem:[#allocation2 + $0x2e0] sm:$0xff]
        %v727 = vld [vmem:[#allocation2 + $0x2e8] sm:$0xff]
        %v728 = vld [vmem:[#allocation2 + $0x2f0] sm:$0xff]
        %v729 = vld [vmem:[#allocation2 + $0x2f8] sm:$0xff]
        %v730 = vld [vmem:[#allocation2 + $0x300] sm:$0xff]
        %v731 = vld [vmem:[#allocation2 + $0x308] sm:$0xff]
        %v732 = vld [vmem:[#allocation2 + $0x310] sm:$0xff]
        %v733 = vld [vmem:[#allocation2 + $0x318] sm:$0xff]
        %v734 = vld [vmem:[#allocation2 + $0x320] sm:$0xff]
        %v735 = vld [vmem:[#allocation2 + $0x328] sm:$0xff]
        %v736 = vld [vmem:[#allocation2 + $0x330] sm:$0xff]
        %v737 = vld [vmem:[#allocation2 + $0x338] sm:$0xff]
        %v738 = vld [vmem:[#allocation2 + $0x340] sm:$0xff]
        %v739 = vld [vmem:[#allocation2 + $0x348] sm:$0xff]
        %v740 = vld [vmem:[#allocation2 + $0x350] sm:$0xff]
        %v741 = vld [vmem:[#allocation2 + $0x358] sm:$0xff]
        %v742 = vld [vmem:[#allocation2 + $0x360] sm:$0xff]
        %v743 = vld [vmem:[#allocation2 + $0x368] sm:$0xff]
        %v744 = vld [vmem:[#allocation2 + $0x370] sm:$0xff]
        %v745 = vld [vmem:[#allocation2 + $0x378] sm:$0xff]
        %v746 = vld [vmem:[#allocation2 + $0x380] sm:$0xff]
        %v747 = vld [vmem:[#allocation2 + $0x388] sm:$0xff]
        %v748 = vld [vmem:[#allocation2 + $0x390] sm:$0xff]
        %v749 = vld [vmem:[#allocation2 + $0x398] sm:$0xff]
        %v750 = vld [vmem:[#allocation2 + $0x3a0] sm:$0xff]
        %v751 = vld [vmem:[#allocation2 + $0x3a8] sm:$0xff]
        %v752 = vld [vmem:[#allocation2 + $0x3b0] sm:$0xff]
        %v753 = vld [vmem:[#allocation2 + $0x3b8] sm:$0xff]
        %v754 = vld [vmem:[#allocation2 + $0x3c0] sm:$0xff]
        %v755 = vld [vmem:[#allocation2 + $0x3c8] sm:$0xff]
        %v756 = vld [vmem:[#allocation2 + $0x3d0] sm:$0xff]
        %v757 = vld [vmem:[#allocation2 + $0x3d8] sm:$0xff]
        %v758 = vld [vmem:[#allocation2 + $0x3e0] sm:$0xff]
        %v759 = vld [vmem:[#allocation2 + $0x3e8] sm:$0xff]
        %v760 = vld [vmem:[#allocation2 + $0x3f0] sm:$0xff]
        %v761 = vld [vmem:[#allocation2 + $0x3f8] sm:$0xff]
        %v762 = vld [vmem:[#allocation2 + $0x400] sm:$0xff]
        %v763 = vld [vmem:[#allocation2 + $0x408] sm:$0xff]
        %v764 = vld [vmem:[#allocation2 + $0x410] sm:$0xff]
        %v765 = vld [vmem:[#allocation2 + $0x418] sm:$0xff]
        %v766 = vld [vmem:[#allocation2 + $0x420] sm:$0xff]
        %v767 = vld [vmem:[#allocation2 + $0x428] sm:$0xff]
        %v768 = vld [vmem:[#allocation2 + $0x430] sm:$0xff]
        %v769 = vld [vmem:[#allocation2 + $0x438] sm:$0xff]
        %v770 = vld [vmem:[#allocation2 + $0x440] sm:$0xff]
        %v771 = vld [vmem:[#allocation2 + $0x448] sm:$0xff]
        %v772 = vld [vmem:[#allocation2 + $0x450] sm:$0xff]
        %v773 = vld [vmem:[#allocation2 + $0x458] sm:$0xff]
        %v774 = vld [vmem:[#allocation2 + $0x460] sm:$0xff]
        %v775 = vld [vmem:[#allocation2 + $0x468] sm:$0xff]
        %v776 = vld [vmem:[#allocation2 + $0x470] sm:$0xff]
        %v777 = vld [vmem:[#allocation2 + $0x478] sm:$0xff]
        %v778 = vld [vmem:[#allocation2 + $0x480] sm:$0xff]
        %v779 = vld [vmem:[#allocation2 + $0x488] sm:$0xff]
        %v780 = vld [vmem:[#allocation2 + $0x490] sm:$0xff]
        %v781 = vld [vmem:[#allocation2 + $0x498] sm:$0xff]
        %v782 = vld [vmem:[#allocation2 + $0x4a0] sm:$0xff]
        %v783 = vld [vmem:[#allocation2 + $0x4a8] sm:$0xff]
        %v784 = vld [vmem:[#allocation2 + $0x4b0] sm:$0xff]
        %v785 = vld [vmem:[#allocation2 + $0x4b8] sm:$0xff]
        %v786 = vld [vmem:[#allocation2 + $0x4c0] sm:$0xff]
        %v787 = vld [vmem:[#allocation2 + $0x4c8] sm:$0xff]
        %v788 = vld [vmem:[#allocation2 + $0x4d0] sm:$0xff]
        %v789 = vld [vmem:[#allocation2 + $0x4d8] sm:$0xff]
        %v790 = vld [vmem:[#allocation2 + $0x4e0] sm:$0xff]
        %v791 = vld [vmem:[#allocation2 + $0x4e8] sm:$0xff]
        %v792 = vld [vmem:[#allocation2 + $0x4f0] sm:$0xff]
        %v793 = vld [vmem:[#allocation2 + $0x4f8] sm:$0xff]
        %v794 = vld [vmem:[#allocation2 + $0x500] sm:$0xff]
        %v795 = vld [vmem:[#allocation2 + $0x508] sm:$0xff]
        %v796 = vld [vmem:[#allocation2 + $0x510] sm:$0xff]
        %v797 = vld [vmem:[#allocation2 + $0x518] sm:$0xff]
        %v798 = vld [vmem:[#allocation2 + $0x520] sm:$0xff]
        %v799 = vld [vmem:[#allocation2 + $0x528] sm:$0xff]
        %v800 = vld [vmem:[#allocation2 + $0x530] sm:$0xff]
        %v801 = vld [vmem:[#allocation2 + $0x538] sm:$0xff]
        %v802 = vld [vmem:[#allocation2 + $0x540] sm:$0xff]
        %v803 = vld [vmem:[#allocation2 + $0x548] sm:$0xff]
        %v804 = vld [vmem:[#allocation2 + $0x550] sm:$0xff]
        %v805 = vld [vmem:[#allocation2 + $0x558] sm:$0xff]
        %v806 = vld [vmem:[#allocation2 + $0x560] sm:$0xff]
        %v807 = vld [vmem:[#allocation2 + $0x568] sm:$0xff]
        %v808 = vld [vmem:[#allocation2 + $0x570] sm:$0xff]
        %v809 = vld [vmem:[#allocation2 + $0x578] sm:$0xff]
        %v810 = vld [vmem:[#allocation2 + $0x580] sm:$0xff]
        %v811 = vld [vmem:[#allocation2 + $0x588] sm:$0xff]
        %v812 = vld [vmem:[#allocation2 + $0x590] sm:$0xff]
        %v813 = vld [vmem:[#allocation2 + $0x598] sm:$0xff]
        %v814 = vld [vmem:[#allocation2 + $0x5a0] sm:$0xff]
        %v815 = vld [vmem:[#allocation2 + $0x5a8] sm:$0xff]
        %v816 = vld [vmem:[#allocation2 + $0x5b0] sm:$0xff]
        %v817 = vld [vmem:[#allocation2 + $0x5b8] sm:$0xff]
        %v818 = vld [vmem:[#allocation2 + $0x5c0] sm:$0xff]
        %v819 = vld [vmem:[#allocation2 + $0x5c8] sm:$0xff]
        %v820 = vld [vmem:[#allocation2 + $0x5d0] sm:$0xff]
        %v821 = vld [vmem:[#allocation2 + $0x5d8] sm:$0xff]
        %v822 = vld [vmem:[#allocation2 + $0x5e0] sm:$0xff]
        %v823 = vld [vmem:[#allocation2 + $0x5e8] sm:$0xff]
        %v824 = vld [vmem:[#allocation2 + $0x5f0] sm:$0xff]
        %v825 = vld [vmem:[#allocation2 + $0x5f8] sm:$0xff]
        %v826 = vld [vmem:[#allocation2 + $0x600] sm:$0xff]
        %v827 = vld [vmem:[#allocation2 + $0x608] sm:$0xff]
        %v828 = vld [vmem:[#allocation2 + $0x610] sm:$0xff]
        %v829 = vld [vmem:[#allocation2 + $0x618] sm:$0xff]
        %v830 = vld [vmem:[#allocation2 + $0x620] sm:$0xff]
        %v831 = vld [vmem:[#allocation2 + $0x628] sm:$0xff]
        %v832 = vld [vmem:[#allocation2 + $0x630] sm:$0xff]
        %v833 = vld [vmem:[#allocation2 + $0x638] sm:$0xff]
        %v834 = vld [vmem:[#allocation2 + $0x640] sm:$0xff]
        %v835 = vld [vmem:[#allocation2 + $0x648] sm:$0xff]
        %v836 = vld [vmem:[#allocation2 + $0x650] sm:$0xff]
        %v837 = vld [vmem:[#allocation2 + $0x658] sm:$0xff]
        %v838 = vld [vmem:[#allocation2 + $0x660] sm:$0xff]
        %v839 = vld [vmem:[#allocation2 + $0x668] sm:$0xff]
        %v840 = vld [vmem:[#allocation2 + $0x670] sm:$0xff]
        %v841 = vld [vmem:[#allocation2 + $0x678] sm:$0xff]
        %v842 = vld [vmem:[#allocation2 + $0x680] sm:$0xff]
        %v843 = vld [vmem:[#allocation2 + $0x688] sm:$0xff]
        %v844 = vld [vmem:[#allocation2 + $0x690] sm:$0xff]
        %v845 = vld [vmem:[#allocation2 + $0x698] sm:$0xff]
        %v846 = vld [vmem:[#allocation2 + $0x6a0] sm:$0xff]
        %v847 = vld [vmem:[#allocation2 + $0x6a8] sm:$0xff]
        %v848 = vld [vmem:[#allocation2 + $0x6b0] sm:$0xff]
        %v849 = vld [vmem:[#allocation2 + $0x6b8] sm:$0xff]
        %v850 = vld [vmem:[#allocation2 + $0x6c0] sm:$0xff]
        %v851 = vld [vmem:[#allocation2 + $0x6c8] sm:$0xff]
        %v852 = vld [vmem:[#allocation2 + $0x6d0] sm:$0xff]
        %v853 = vld [vmem:[#allocation2 + $0x6d8] sm:$0xff]
        %v854 = vld [vmem:[#allocation2 + $0x6e0] sm:$0xff]
        %v855 = vld [vmem:[#allocation2 + $0x6e8] sm:$0xff]
        %v856 = vld [vmem:[#allocation2 + $0x6f0] sm:$0xff]
        %v857 = vld [vmem:[#allocation2 + $0x6f8] sm:$0xff]
        %v858 = vld [vmem:[#allocation2 + $0x700] sm:$0xff]
        %v859 = vld [vmem:[#allocation2 + $0x708] sm:$0xff]
        %v860 = vld [vmem:[#allocation2 + $0x710] sm:$0xff]
        %v861 = vld [vmem:[#allocation2 + $0x718] sm:$0xff]
        %v862 = vld [vmem:[#allocation2 + $0x720] sm:$0xff]
        %v863 = vld [vmem:[#allocation2 + $0x728] sm:$0xff]
        %v864 = vld [vmem:[#allocation2 + $0x730] sm:$0xff]
        %v865 = vld [vmem:[#allocation2 + $0x738] sm:$0xff]
        %v866 = vld [vmem:[#allocation2 + $0x740] sm:$0xff]
        %v867 = vld [vmem:[#allocation2 + $0x748] sm:$0xff]
        %v868 = vld [vmem:[#allocation2 + $0x750] sm:$0xff]
        %v869 = vld [vmem:[#allocation2 + $0x758] sm:$0xff]
        %v870 = vld [vmem:[#allocation2 + $0x760] sm:$0xff]
        %v871 = vld [vmem:[#allocation2 + $0x768] sm:$0xff]
        %v872 = vld [vmem:[#allocation2 + $0x770] sm:$0xff]
        %v873 = vld [vmem:[#allocation2 + $0x778] sm:$0xff]
        %v874 = vld [vmem:[#allocation2 + $0x780] sm:$0xff]
        %v875 = vld [vmem:[#allocation2 + $0x788] sm:$0xff]
        %v876 = vld [vmem:[#allocation2 + $0x790] sm:$0xff]
        %v877 = vld [vmem:[#allocation2 + $0x798] sm:$0xff]
        %v878 = vld [vmem:[#allocation2 + $0x7a0] sm:$0xff]
        %v879 = vld [vmem:[#allocation2 + $0x7a8] sm:$0xff]
        %v880 = vld [vmem:[#allocation2 + $0x7b0] sm:$0xff]
        %v881 = vld [vmem:[#allocation2 + $0x7b8] sm:$0xff]
        %v882 = vld [vmem:[#allocation2 + $0x7c0] sm:$0xff]
        %v883 = vld [vmem:[#allocation2 + $0x7c8] sm:$0xff]
        %v884 = vld [vmem:[#allocation2 + $0x7d0] sm:$0xff]
        %v885 = vld [vmem:[#allocation2 + $0x7d8] sm:$0xff]
        %v886 = vld [vmem:[#allocation2 + $0x7e0] sm:$0xff]
        %v887 = vld [vmem:[#allocation2 + $0x7e8] sm:$0xff]
        %v888 = vld [vmem:[#allocation2 + $0x7f0] sm:$0xff]
        %v889 = vld [vmem:[#allocation2 + $0x7f8] sm:$0xff]
        %v890 = vld [vmem:[#allocation2 + $0x800] sm:$0xff]
        %v891 = vld [vmem:[#allocation2 + $0x808] sm:$0xff]
        %v892 = vld [vmem:[#allocation2 + $0x810] sm:$0xff]
        %v893 = vld [vmem:[#allocation2 + $0x818] sm:$0xff]
        %v894 = vld [vmem:[#allocation2 + $0x820] sm:$0xff]
        %v895 = vld [vmem:[#allocation2 + $0x828] sm:$0xff]
        %v896 = vld [vmem:[#allocation2 + $0x830] sm:$0xff]
        %v897 = vld [vmem:[#allocation2 + $0x838] sm:$0xff]
        %v898 = vld [vmem:[#allocation2 + $0x840] sm:$0xff]
        %v899 = vld [vmem:[#allocation2 + $0x848] sm:$0xff]
        %v900 = vld [vmem:[#allocation2 + $0x850] sm:$0xff]
        %v901 = vld [vmem:[#allocation2 + $0x858] sm:$0xff]
        %v902 = vld [vmem:[#allocation2 + $0x860] sm:$0xff]
        %v903 = vld [vmem:[#allocation2 + $0x868] sm:$0xff]
        %v904 = vld [vmem:[#allocation2 + $0x870] sm:$0xff]
        %v905 = vld [vmem:[#allocation2 + $0x878] sm:$0xff]
        %v906 = vld [vmem:[#allocation2 + $0x880] sm:$0xff]
        %v907 = vld [vmem:[#allocation2 + $0x888] sm:$0xff]
        %v908 = vld [vmem:[#allocation2 + $0x890] sm:$0xff]
        %v909 = vld [vmem:[#allocation2 + $0x898] sm:$0xff]
        %v910 = vld [vmem:[#allocation2 + $0x8a0] sm:$0xff]
        %v911 = vld [vmem:[#allocation2 + $0x8a8] sm:$0xff]
        %v912 = vld [vmem:[#allocation2 + $0x8b0] sm:$0xff]
        %v913 = vld [vmem:[#allocation2 + $0x8b8] sm:$0xff]
        %v914 = vld [vmem:[#allocation2 + $0x8c0] sm:$0xff]
        %v915 = vld [vmem:[#allocation2 + $0x8c8] sm:$0xff]
        %v916 = vld [vmem:[#allocation2 + $0x8d0] sm:$0xff]
        %v917 = vld [vmem:[#allocation2 + $0x8d8] sm:$0xff]
        %v918 = vld [vmem:[#allocation2 + $0x8e0] sm:$0xff]
        %v919 = vld [vmem:[#allocation2 + $0x8e8] sm:$0xff]
        %v920 = vld [vmem:[#allocation2 + $0x8f0] sm:$0xff]
        %v921 = vld [vmem:[#allocation2 + $0x8f8] sm:$0xff]
        %v922 = vld [vmem:[%s1] sm:$0xff]
        %v923 = vld [vmem:[%s1 + $0x8] sm:$0xff]
        %v924 = vld [vmem:[%s1 + $0x10] sm:$0xff]
        %v925 = vld [vmem:[%s1 + $0x18] sm:$0xff]
        %v926 = vld [vmem:[%s1 + $0x20] sm:$0xff]
        %v927 = vld [vmem:[%s1 + $0x28] sm:$0xff]
        %v928 = vld [vmem:[%s1 + $0x30] sm:$0xff]
        %v929 = vld [vmem:[%s1 + $0x38] sm:$0xff]
        %v930 = vld [vmem:[%s1 + $0x40] sm:$0xff]
        %v931 = vld [vmem:[%s1 + $0x48] sm:$0xff]
        %v932 = vld [vmem:[%s1 + $0x50] sm:$0xff]
        %v933 = vld [vmem:[%s1 + $0x58] sm:$0xff]
        %v934 = vld [vmem:[%s1 + $0x60] sm:$0xff]
        %v935 = vld [vmem:[%s1 + $0x68] sm:$0xff]
        %v936 = vld [vmem:[%s1 + $0x70] sm:$0xff]
        %v937 = vld [vmem:[%s1 + $0x78] sm:$0xff]
        %v938 = vld [vmem:[%s1 + $0x80] sm:$0xff]
        %v939 = vld [vmem:[%s1 + $0x88] sm:$0xff]
        %v940 = vld [vmem:[%s1 + $0x90] sm:$0xff]
        %v941 = vld [vmem:[%s1 + $0x98] sm:$0xff]
        %v942 = vld [vmem:[%s1 + $0xa0] sm:$0xff]
        %v943 = vld [vmem:[%s1 + $0xa8] sm:$0xff]
        %v944 = vld [vmem:[%s1 + $0xb0] sm:$0xff]
        %v945 = vld [vmem:[%s1 + $0xb8] sm:$0xff]
        %v946 = vld [vmem:[%s1 + $0xc0] sm:$0xff]
        %v947 = vld [vmem:[%s1 + $0xc8] sm:$0xff]
        %v948 = vld [vmem:[%s1 + $0xd0] sm:$0xff]
        %v949 = vld [vmem:[%s1 + $0xd8] sm:$0xff]
        %v950 = vld [vmem:[%s1 + $0xe0] sm:$0xff]
        %v951 = vld [vmem:[%s1 + $0xe8] sm:$0xff]
        %v952 = vld [vmem:[%s1 + $0xf0] sm:$0xff]
        %v953 = vld [vmem:[%s1 + $0xf8] sm:$0xff]
        %v954 = vld [vmem:[%s1 + $0x100] sm:$0xff]
        %v955 = vld [vmem:[%s1 + $0x108] sm:$0xff]
        %v956 = vld [vmem:[%s1 + $0x110] sm:$0xff]
        %v957 = vld [vmem:[%s1 + $0x118] sm:$0xff]
        %v958 = vld [vmem:[%s1 + $0x120] sm:$0xff]
        %v959 = vld [vmem:[%s1 + $0x128] sm:$0xff]
        %v960 = vld [vmem:[%s1 + $0x130] sm:$0xff]
        %v961 = vld [vmem:[%s1 + $0x138] sm:$0xff]
        %v962 = vld [vmem:[%s1 + $0x140] sm:$0xff]
        %v963 = vld [vmem:[%s1 + $0x148] sm:$0xff]
        %v964 = vld [vmem:[%s1 + $0x150] sm:$0xff]
        %v965 = vld [vmem:[%s1 + $0x158] sm:$0xff]
        %v966 = vld [vmem:[%s1 + $0x160] sm:$0xff]
        %v967 = vld [vmem:[%s1 + $0x168] sm:$0xff]
        %v968 = vld [vmem:[%s1 + $0x170] sm:$0xff]
        %v969 = vld [vmem:[%s1 + $0x178] sm:$0xff]
        %v970 = vld [vmem:[%s1 + $0x180] sm:$0xff]
        %v971 = vld [vmem:[%s1 + $0x188] sm:$0xff]
        %v972 = vld [vmem:[%s1 + $0x190] sm:$0xff]
        %v973 = vld [vmem:[%s1 + $0x198] sm:$0xff]
        %v974 = vld [vmem:[%s1 + $0x1a0] sm:$0xff]
        %v975 = vld [vmem:[%s1 + $0x1a8] sm:$0xff]
        %v976 = vld [vmem:[%s1 + $0x1b0] sm:$0xff]
        %v977 = vld [vmem:[%s1 + $0x1b8] sm:$0xff]
        %v978 = vld [vmem:[%s1 + $0x1c0] sm:$0xff]
        %v979 = vld [vmem:[%s1 + $0x1c8] sm:$0xff]
        %v980 = vld [vmem:[%s1 + $0x1d0] sm:$0xff]
        %v981 = vld [vmem:[%s1 + $0x1d8] sm:$0xff]
        %v982 = vld [vmem:[%s1 + $0x1e0] sm:$0xff]
        %v983 = vld [vmem:[%s1 + $0x1e8] sm:$0xff]
        %v984 = vld [vmem:[%s1 + $0x1f0] sm:$0xff]
        %v985 = vld [vmem:[%s1 + $0x1f8] sm:$0xff]
        %v986 = vld [vmem:[%s1 + $0x200] sm:$0xff]
        %v987 = vld [vmem:[%s1 + $0x208] sm:$0xff]
        %v988 = vld [vmem:[%s1 + $0x210] sm:$0xff]
        %v989 = vld [vmem:[%s1 + $0x218] sm:$0xff]
        %v990 = vld [vmem:[%s1 + $0x220] sm:$0xff]
        %v991 = vld [vmem:[%s1 + $0x228] sm:$0xff]
        %v992 = vld [vmem:[%s1 + $0x230] sm:$0xff]
        %v993 = vld [vmem:[%s1 + $0x238] sm:$0xff]
        %v994 = vld [vmem:[%s1 + $0x240] sm:$0xff]
        %v995 = vld [vmem:[%s1 + $0x248] sm:$0xff]
        %v996 = vld [vmem:[%s1 + $0x250] sm:$0xff]
        %v997 = vld [vmem:[%s1 + $0x258] sm:$0xff]
        %v998 = vld [vmem:[%s1 + $0x260] sm:$0xff]
        %v999 = vld [vmem:[%s1 + $0x268] sm:$0xff]
        %v1000 = vld [vmem:[%s1 + $0x270] sm:$0xff]
        %v1001 = vld [vmem:[%s1 + $0x278] sm:$0xff]
        %v1002 = vld [vmem:[%s1 + $0x280] sm:$0xff]
        %v1003 = vld [vmem:[%s1 + $0x288] sm:$0xff]
        %v1004 = vld [vmem:[%s1 + $0x290] sm:$0xff]
        %v1005 = vld [vmem:[%s1 + $0x298] sm:$0xff]
        %v1006 = vld [vmem:[%s1 + $0x2a0] sm:$0xff]
        %v1007 = vld [vmem:[%s1 + $0x2a8] sm:$0xff]
        %v1008 = vld [vmem:[%s1 + $0x2b0] sm:$0xff]
        %v1009 = vld [vmem:[%s1 + $0x2b8] sm:$0xff]
        %v1010 = vld [vmem:[%s1 + $0x2c0] sm:$0xff]
        %v1011 = vld [vmem:[%s1 + $0x2c8] sm:$0xff]
        %v1012 = vld [vmem:[%s1 + $0x2d0] sm:$0xff]
        %v1013 = vld [vmem:[%s1 + $0x2d8] sm:$0xff]
        %v1014 = vld [vmem:[%s1 + $0x2e0] sm:$0xff]
        %v1015 = vld [vmem:[%s1 + $0x2e8] sm:$0xff]
        %v1016 = vld [vmem:[%s1 + $0x2f0] sm:$0xff]
        %v1017 = vld [vmem:[%s1 + $0x2f8] sm:$0xff]
        %v1018 = vld [vmem:[%s1 + $0x300] sm:$0xff]
        %v1019 = vld [vmem:[%s1 + $0x308] sm:$0xff]
        %v1020 = vld [vmem:[%s1 + $0x310] sm:$0xff]
        %v1021 = vld [vmem:[%s1 + $0x318] sm:$0xff]
        %v1022 = vld [vmem:[%s1 + $0x320] sm:$0xff]
        %v1023 = vld [vmem:[%s1 + $0x328] sm:$0xff]
        %v1024 = vld [vmem:[%s1 + $0x330] sm:$0xff]
        %v1025 = vld [vmem:[%s1 + $0x338] sm:$0xff]
        %v1026 = vld [vmem:[%s1 + $0x340] sm:$0xff]
        %v1027 = vld [vmem:[%s1 + $0x348] sm:$0xff]
        %v1028 = vld [vmem:[%s1 + $0x350] sm:$0xff]
        %v1029 = vld [vmem:[%s1 + $0x358] sm:$0xff]
        %v1030 = vld [vmem:[%s1 + $0x360] sm:$0xff]
        %v1031 = vld [vmem:[%s1 + $0x368] sm:$0xff]
        %v1032 = vld [vmem:[%s1 + $0x370] sm:$0xff]
        %v1033 = vld [vmem:[%s1 + $0x378] sm:$0xff]
        %v1034 = vld [vmem:[%s1 + $0x380] sm:$0xff]
        %v1035 = vld [vmem:[%s1 + $0x388] sm:$0xff]
        %v1036 = vld [vmem:[%s1 + $0x390] sm:$0xff]
        %v1037 = vld [vmem:[%s1 + $0x398] sm:$0xff]
        %v1038 = vld [vmem:[%s1 + $0x3a0] sm:$0xff]
        %v1039 = vld [vmem:[%s1 + $0x3a8] sm:$0xff]
        %v1040 = vld [vmem:[%s1 + $0x3b0] sm:$0xff]
        %v1041 = vld [vmem:[%s1 + $0x3b8] sm:$0xff]
        %v1042 = vld [vmem:[%s1 + $0x3c0] sm:$0xff]
        %v1043 = vld [vmem:[%s1 + $0x3c8] sm:$0xff]
        %v1044 = vld [vmem:[%s1 + $0x3d0] sm:$0xff]
        %v1045 = vld [vmem:[%s1 + $0x3d8] sm:$0xff]
        %v1046 = vld [vmem:[%s1 + $0x3e0] sm:$0xff]
        %v1047 = vld [vmem:[%s1 + $0x3e8] sm:$0xff]
        %v1048 = vld [vmem:[%s1 + $0x3f0] sm:$0xff]
        %v1049 = vld [vmem:[%s1 + $0x3f8] sm:$0xff]
        %v1050 = vld [vmem:[%s1 + $0x400] sm:$0xff]
        %v1051 = vld [vmem:[%s1 + $0x408] sm:$0xff]
        %v1052 = vld [vmem:[%s1 + $0x410] sm:$0xff]
        %v1053 = vld [vmem:[%s1 + $0x418] sm:$0xff]
        %v1054 = vld [vmem:[%s1 + $0x420] sm:$0xff]
        %v1055 = vld [vmem:[%s1 + $0x428] sm:$0xff]
        %v1056 = vld [vmem:[%s1 + $0x430] sm:$0xff]
        %v1057 = vld [vmem:[%s1 + $0x438] sm:$0xff]
        %v1058 = vld [vmem:[%s1 + $0x440] sm:$0xff]
        %v1059 = vld [vmem:[%s1 + $0x448] sm:$0xff]
        %v1060 = vld [vmem:[%s1 + $0x450] sm:$0xff]
        %v1061 = vld [vmem:[%s1 + $0x458] sm:$0xff]
        %v1062 = vld [vmem:[%s1 + $0x460] sm:$0xff]
        %v1063 = vld [vmem:[%s1 + $0x468] sm:$0xff]
        %v1064 = vld [vmem:[%s1 + $0x470] sm:$0xff]
        %v1065 = vld [vmem:[%s1 + $0x478] sm:$0xff]
        %v1066 = vld [vmem:[%s2] sm:$0x1]
        %v1068 = vlaneseq
        %v1069 = vshrl.u32 %v1068, 7
        %v1070 = vsub.s32 0, %v1069
        %v1071 = vrot.slane %v1066, %v1070
        %1073 = vmatprep.subr.mxu0 0.0
        %1074 = vmatpush1.msra.mxu0 %v922
        %1075 = vmatprep.subr.mxu0 0.0
        %1076 = vmatpush1.msra.mxu0 %v923
        %1077 = vmatprep.subr.mxu0 0.0
        %1078 = vmatpush1.msra.mxu0 %v924
        %1079 = vmatprep.subr.mxu0 0.0
        %1080 = vmatpush1.msra.mxu0 %v925
        %1081 = vmatprep.subr.mxu0 0.0
        %1082 = vmatpush1.msra.mxu0 %v926
        %1083 = vmatprep.subr.mxu0 0.0
        %1084 = vmatpush1.msra.mxu0 %v927
        %1085 = vmatprep.subr.mxu0 0.0
        %1086 = vmatpush1.msra.mxu0 %v928
        %1087 = vmatprep.subr.mxu0 0.0
        %1088 = vmatpush1.msra.mxu0 %v929
        %1089 = vmatprep.subr.mxu0 0.0
        %1090 = vmatpush1.msra.mxu0 %v930
        %1091 = vmatprep.subr.mxu0 0.0
        %1092 = vmatpush1.msra.mxu0 %v931
        %1093 = vmatprep.subr.mxu0 0.0
        %1094 = vmatpush1.msra.mxu0 %v932
        %1095 = vmatprep.subr.mxu0 0.0
        %1096 = vmatpush1.msra.mxu0 %v933
        %1097 = vmatprep.subr.mxu0 0.0
        %1098 = vmatpush1.msra.mxu0 %v934
        %1099 = vmatprep.subr.mxu0 0.0
        %1100 = vmatpush1.msra.mxu0 %v935
        %1101 = vmatprep.subr.mxu0 0.0
        %1102 = vmatpush1.msra.mxu0 %v936
        %1103 = vmatprep.subr.mxu0 0.0
        %1104 = vmatpush1.msra.mxu0 %v937
        %1105 = vmatprep.subr.mxu0 0.0
        %1106 = vmatpush1.msra.mxu0 %v938
        %1107 = vmatprep.subr.mxu0 0.0
        %1108 = vmatpush1.msra.mxu0 %v939
        %1109 = vmatprep.subr.mxu0 0.0
        %1110 = vmatpush1.msra.mxu0 %v940
        %1111 = vmatprep.subr.mxu0 0.0
        %1112 = vmatpush1.msra.mxu0 %v941
        %1113 = vmatprep.subr.mxu0 0.0
        %1114 = vmatpush1.msra.mxu0 %v942
        %1115 = vmatprep.subr.mxu0 0.0
        %1116 = vmatpush1.msra.mxu0 %v943
        %1117 = vmatprep.subr.mxu0 0.0
        %1118 = vmatpush1.msra.mxu0 %v944
        %1119 = vmatprep.subr.mxu0 0.0
        %1120 = vmatpush1.msra.mxu0 %v945
        %1121 = vmatprep.subr.mxu0 0.0
        %1122 = vmatpush1.msra.mxu0 %v946
        %1123 = vmatprep.subr.mxu0 0.0
        %1124 = vmatpush1.msra.mxu0 %v947
        %1125 = vmatprep.subr.mxu0 0.0
        %1126 = vmatpush1.msra.mxu0 %v948
        %1127 = vmatprep.subr.mxu0 0.0
        %1128 = vmatpush1.msra.mxu0 %v949
        %1129 = vmatprep.subr.mxu0 0.0
        %1130 = vmatpush1.msra.mxu0 %v950
        %1131 = vmatprep.subr.mxu0 0.0
        %1132 = vmatpush1.msra.mxu0 %v951
        %1133 = vmatprep.subr.mxu0 0.0
        %1134 = vmatpush1.msra.mxu0 %v952
        %1135 = vmatprep.subr.mxu0 0.0
        %1136 = vmatpush1.msra.mxu0 %v953
        %1137 = vmatprep.mubr.f32.mxu0 %v635
        %1138 = vmatmul.mubr.f32.gmra.mrb[0].mxu0 %v634
        %v1139 = vpop.f32.mrb[0].mxu0
        %v1140 = vadd.f32 %v1071, %v1139
        %v1141 = vpop.f32.mrb[0].mxu0
        %1142 = vmatprep.mubr.f32.mxu0 %v644
        %1143 = vmatmul.mubr.f32.gmra.mrb[0].mxu0 %v643
        %v1144 = vpop.f32.mrb[0].mxu0
        %v1145 = vadd.f32 %v1071, %v1144
        %v1146 = vpop.f32.mrb[0].mxu0
        %1147 = vmatprep.mubr.f32.mxu0 %v653
        %1148 = vmatmul.mubr.f32.gmra.mrb[0].mxu0 %v652
        %v1149 = vpop.f32.mrb[0].mxu0
        %v1150 = vadd.f32 %v1071, %v1149
        %v1151 = vpop.f32.mrb[0].mxu0
        %1152 = vmatprep.mubr.f32.mxu0 %v662
        %1153 = vmatmul.mubr.f32.gmra.mrb[0].mxu0 %v661
        %v1154 = vpop.f32.mrb[0].mxu0
        %v1155 = vadd.f32 %v1071, %v1154
        %v1156 = vpop.f32.mrb[0].mxu0
        %1157 = vmatprep.mubr.f32.mxu0 %v671
        %1158 = vmatmul.mubr.f32.gmra.mrb[0].mxu0 %v670
        %v1159 = vpop.f32.mrb[0].mxu0
        %v1160 = vadd.f32 %v1071, %v1159
        %v1161 = vpop.f32.mrb[0].mxu0
        %1162 = vmatprep.mubr.f32.mxu0 %v680
        %1163 = vmatmul.mubr.f32.gmra.mrb[0].mxu0 %v679
        %v1164 = vpop.f32.mrb[0].mxu0
        %v1165 = vadd.f32 %v1071, %v1164
        %v1166 = vpop.f32.mrb[0].mxu0
        %1167 = vmatprep.mubr.f32.mxu0 %v689
        %1168 = vmatmul.mubr.f32.gmra.mrb[0].mxu0 %v688
        %v1169 = vpop.f32.mrb[0].mxu0
        %v1170 = vadd.f32 %v1071, %v1169
        %v1171 = vpop.f32.mrb[0].mxu0
        %1172 = vmatprep.mubr.f32.mxu0 %v698
        %1173 = vmatmul.mubr.f32.gmra.mrb[0].mxu0 %v697
        %v1174 = vpop.f32.mrb[0].mxu0
        %v1175 = vadd.f32 %v1071, %v1174
        %v1176 = vpop.f32.mrb[0].mxu0
        %1177 = vmatprep.mubr.f32.mxu0 %v707
        %1178 = vmatmul.mubr.f32.gmra.mrb[0].mxu0 %v706
        %v1179 = vpop.f32.mrb[0].mxu0
        %v1180 = vadd.f32 %v1071, %v1179
        %v1181 = vpop.f32.mrb[0].mxu0
        %1182 = vmatprep.mubr.f32.mxu0 %v716
        %1183 = vmatmul.mubr.f32.gmra.mrb[0].mxu0 %v715
        %v1184 = vpop.f32.mrb[0].mxu0
        %v1185 = vadd.f32 %v1071, %v1184
        %v1186 = vpop.f32.mrb[0].mxu0
        %1187 = vmatprep.mubr.f32.mxu0 %v725
        %1188 = vmatmul.mubr.f32.gmra.mrb[0].mxu0 %v724
        %v1189 = vpop.f32.mrb[0].mxu0
        %v1190 = vadd.f32 %v1071, %v1189
        %v1191 = vpop.f32.mrb[0].mxu0
        %1192 = vmatprep.mubr.f32.mxu0 %v734
        %1193 = vmatmul.mubr.f32.gmra.mrb[0].mxu0 %v733
        %v1194 = vpop.f32.mrb[0].mxu0
        %v1195 = vadd.f32 %v1071, %v1194
        %v1196 = vpop.f32.mrb[0].mxu0
        %1197 = vmatprep.mubr.f32.mxu0 %v743
        %1198 = vmatmul.mubr.f32.gmra.mrb[0].mxu0 %v742
        %v1199 = vpop.f32.mrb[0].mxu0
        %v1200 = vadd.f32 %v1071, %v1199
        %v1201 = vpop.f32.mrb[0].mxu0
        %1202 = vmatprep.mubr.f32.mxu0 %v752
        %1203 = vmatmul.mubr.f32.gmra.mrb[0].mxu0 %v751
        %v1204 = vpop.f32.mrb[0].mxu0
        %v1205 = vadd.f32 %v1071, %v1204
        %v1206 = vpop.f32.mrb[0].mxu0
        %1207 = vmatprep.mubr.f32.mxu0 %v761
        %1208 = vmatmul.mubr.f32.gmra.mrb[0].mxu0 %v760
        %v1209 = vpop.f32.mrb[0].mxu0
        %v1210 = vadd.f32 %v1071, %v1209
        %v1211 = vpop.f32.mrb[0].mxu0
        %1212 = vmatprep.mubr.f32.mxu0 %v770
        %1213 = vmatmul.mubr.f32.gmra.mrb[0].mxu0 %v769
        %v1214 = vpop.f32.mrb[0].mxu0
        %v1215 = vadd.f32 %v1071, %v1214
        %v1216 = vpop.f32.mrb[0].mxu0
        %1217 = vmatprep.mubr.f32.mxu0 %v779
        %1218 = vmatmul.mubr.f32.gmra.mrb[0].mxu0 %v778
        %v1219 = vpop.f32.mrb[0].mxu0
        %v1220 = vadd.f32 %v1071, %v1219
        %v1221 = vpop.f32.mrb[0].mxu0
        %1222 = vmatprep.mubr.f32.mxu0 %v788
        %1223 = vmatmul.mubr.f32.gmra.mrb[0].mxu0 %v787
        %v1224 = vpop.f32.mrb[0].mxu0
        %v1225 = vadd.f32 %v1071, %v1224
        %v1226 = vpop.f32.mrb[0].mxu0
        %1227 = vmatprep.mubr.f32.mxu0 %v797
        %1228 = vmatmul.mubr.f32.gmra.mrb[0].mxu0 %v796
        %v1229 = vpop.f32.mrb[0].mxu0
        %v1230 = vadd.f32 %v1071, %v1229
        %v1231 = vpop.f32.mrb[0].mxu0
        %1232 = vmatprep.mubr.f32.mxu0 %v806
        %1233 = vmatmul.mubr.f32.gmra.mrb[0].mxu0 %v805
        %v1234 = vpop.f32.mrb[0].mxu0
        %v1235 = vadd.f32 %v1071, %v1234
        %v1236 = vpop.f32.mrb[0].mxu0
        %1237 = vmatprep.mubr.f32.mxu0 %v815
        %1238 = vmatmul.mubr.f32.gmra.mrb[0].mxu0 %v814
        %v1239 = vpop.f32.mrb[0].mxu0
        %v1240 = vadd.f32 %v1071, %v1239
        %v1241 = vpop.f32.mrb[0].mxu0
        %1242 = vmatprep.mubr.f32.mxu0 %v824
        %1243 = vmatmul.mubr.f32.gmra.mrb[0].mxu0 %v823
        %v1244 = vpop.f32.mrb[0].mxu0
        %v1245 = vadd.f32 %v1071, %v1244
        %v1246 = vpop.f32.mrb[0].mxu0
        %1247 = vmatprep.mubr.f32.mxu0 %v833
        %1248 = vmatmul.mubr.f32.gmra.mrb[0].mxu0 %v832
        %v1249 = vpop.f32.mrb[0].mxu0
        %v1250 = vadd.f32 %v1071, %v1249
        %v1251 = vpop.f32.mrb[0].mxu0
        %1252 = vmatprep.mubr.f32.mxu0 %v842
        %1253 = vmatmul.mubr.f32.gmra.mrb[0].mxu0 %v841
        %v1254 = vpop.f32.mrb[0].mxu0
        %v1255 = vadd.f32 %v1071, %v1254
        %v1256 = vpop.f32.mrb[0].mxu0
        %1257 = vmatprep.mubr.f32.mxu0 %v851
        %1258 = vmatmul.mubr.f32.gmra.mrb[0].mxu0 %v850
        %v1259 = vpop.f32.mrb[0].mxu0
        %v1260 = vadd.f32 %v1071, %v1259
        %v1261 = vpop.f32.mrb[0].mxu0
        %1262 = vmatprep.mubr.f32.mxu0 %v860
        %1263 = vmatmul.mubr.f32.gmra.mrb[0].mxu0 %v859
        %v1264 = vpop.f32.mrb[0].mxu0
        %v1265 = vadd.f32 %v1071, %v1264
        %v1266 = vpop.f32.mrb[0].mxu0
        %1267 = vmatprep.mubr.f32.mxu0 %v869
        %1268 = vmatmul.mubr.f32.gmra.mrb[0].mxu0 %v868
        %v1269 = vpop.f32.mrb[0].mxu0
        %v1270 = vadd.f32 %v1071, %v1269
        %v1271 = vpop.f32.mrb[0].mxu0
        %1272 = vmatprep.mubr.f32.mxu0 %v878
        %1273 = vmatmul.mubr.f32.gmra.mrb[0].mxu0 %v877
        %v1274 = vpop.f32.mrb[0].mxu0
        %v1275 = vadd.f32 %v1071, %v1274
        %v1276 = vpop.f32.mrb[0].mxu0
        %1277 = vmatprep.mubr.f32.mxu0 %v887
        %1278 = vmatmul.mubr.f32.gmra.mrb[0].mxu0 %v886
        %v1279 = vpop.f32.mrb[0].mxu0
        %v1280 = vadd.f32 %v1071, %v1279
        %v1281 = vpop.f32.mrb[0].mxu0
        %1282 = vmatprep.mubr.f32.mxu0 %v896
        %1283 = vmatmul.mubr.f32.gmra.mrb[0].mxu0 %v895
        %v1284 = vpop.f32.mrb[0].mxu0
        %v1285 = vadd.f32 %v1071, %v1284
        %v1286 = vpop.f32.mrb[0].mxu0
        %1287 = vmatprep.mubr.f32.mxu0 %v905
        %1288 = vmatmul.mubr.f32.gmra.mrb[0].mxu0 %v904
        %v1289 = vpop.f32.mrb[0].mxu0
        %v1290 = vadd.f32 %v1071, %v1289
        %v1291 = vpop.f32.mrb[0].mxu0
        %1292 = vmatprep.mubr.f32.mxu0 %v914
        %1293 = vmatmul.mubr.f32.gmra.mrb[0].mxu0 %v913
        %v1294 = vpop.f32.mrb[0].mxu0
        %v1295 = vadd.f32 %v1071, %v1294
        %v1296 = vpop.f32.mrb[0].mxu0
        %1297 = vdwg.mxu0
        %1298 = vmatprep.subr.mxu0 0.0
        %1299 = vmatpush1.msra.mxu0 %v954
        %1300 = vmatprep.subr.mxu0 0.0
        %1301 = vmatpush1.msra.mxu0 %v955
        %1302 = vmatprep.subr.mxu0 0.0
        %1303 = vmatpush1.msra.mxu0 %v956
        %1304 = vmatprep.subr.mxu0 0.0
        %1305 = vmatpush1.msra.mxu0 %v957
        %1306 = vmatprep.subr.mxu0 0.0
        %1307 = vmatpush1.msra.mxu0 %v958
        %1308 = vmatprep.subr.mxu0 0.0
        %1309 = vmatpush1.msra.mxu0 %v959
        %1310 = vmatprep.subr.mxu0 0.0
        %1311 = vmatpush1.msra.mxu0 %v960
        %1312 = vmatprep.subr.mxu0 0.0
        %1313 = vmatpush1.msra.mxu0 %v961
        %1314 = vmatprep.subr.mxu0 0.0
        %1315 = vmatpush1.msra.mxu0 %v962
        %1316 = vmatprep.subr.mxu0 0.0
        %1317 = vmatpush1.msra.mxu0 %v963
        %1318 = vmatprep.subr.mxu0 0.0
        %1319 = vmatpush1.msra.mxu0 %v964
        %1320 = vmatprep.subr.mxu0 0.0
        %1321 = vmatpush1.msra.mxu0 %v965
        %1322 = vmatprep.subr.mxu0 0.0
        %1323 = vmatpush1.msra.mxu0 %v966
        %1324 = vmatprep.subr.mxu0 0.0
        %1325 = vmatpush1.msra.mxu0 %v967
        %1326 = vmatprep.subr.mxu0 0.0
        %1327 = vmatpush1.msra.mxu0 %v968
        %1328 = vmatprep.subr.mxu0 0.0
        %1329 = vmatpush1.msra.mxu0 %v969
        %1330 = vmatprep.subr.mxu0 0.0
        %1331 = vmatpush1.msra.mxu0 %v970
        %1332 = vmatprep.subr.mxu0 0.0
        %1333 = vmatpush1.msra.mxu0 %v971
        %1334 = vmatprep.subr.mxu0 0.0
        %1335 = vmatpush1.msra.mxu0 %v972
        %1336 = vmatprep.subr.mxu0 0.0
        %1337 = vmatpush1.msra.mxu0 %v973
        %1338 = vmatprep.subr.mxu0 0.0
        %1339 = vmatpush1.msra.mxu0 %v974
        %1340 = vmatprep.subr.mxu0 0.0
        %1341 = vmatpush1.msra.mxu0 %v975
        %1342 = vmatprep.subr.mxu0 0.0
        %1343 = vmatpush1.msra.mxu0 %v976
        %1344 = vmatprep.subr.mxu0 0.0
        %1345 = vmatpush1.msra.mxu0 %v977
        %1346 = vmatprep.subr.mxu0 0.0
        %1347 = vmatpush1.msra.mxu0 %v978
        %1348 = vmatprep.subr.mxu0 0.0
        %1349 = vmatpush1.msra.mxu0 %v979
        %1350 = vmatprep.subr.mxu0 0.0
        %1351 = vmatpush1.msra.mxu0 %v980
        %1352 = vmatprep.subr.mxu0 0.0
        %1353 = vmatpush1.msra.mxu0 %v981
        %1354 = vmatprep.subr.mxu0 0.0
        %1355 = vmatpush1.msra.mxu0 %v982
        %1356 = vmatprep.subr.mxu0 0.0
        %1357 = vmatpush1.msra.mxu0 %v983
        %1358 = vmatprep.subr.mxu0 0.0
        %1359 = vmatpush1.msra.mxu0 %v984
        %1360 = vmatprep.subr.mxu0 0.0
        %1361 = vmatpush1.msra.mxu0 %v985
        %1362 = vmatprep.mubr.f32.mxu0 %v637
        %1363 = vmatmul.mubr.f32.gmra.mrb[0].mxu0 %v636
        %v1364 = vpop.f32.mrb[0].mxu0
        %v1365 = vadd.f32 %v1140, %v1364
        %v1366 = vpop.f32.mrb[0].mxu0
        %1367 = vmatprep.mubr.f32.mxu0 %v646
        %1368 = vmatmul.mubr.f32.gmra.mrb[0].mxu0 %v645
        %v1369 = vpop.f32.mrb[0].mxu0
        %v1370 = vadd.f32 %v1145, %v1369
        %v1371 = vpop.f32.mrb[0].mxu0
        %1372 = vmatprep.mubr.f32.mxu0 %v655
        %1373 = vmatmul.mubr.f32.gmra.mrb[0].mxu0 %v654
        %v1374 = vpop.f32.mrb[0].mxu0
        %v1375 = vadd.f32 %v1150, %v1374
        %v1376 = vpop.f32.mrb[0].mxu0
        %1377 = vmatprep.mubr.f32.mxu0 %v664
        %1378 = vmatmul.mubr.f32.gmra.mrb[0].mxu0 %v663
        %v1379 = vpop.f32.mrb[0].mxu0
        %v1380 = vadd.f32 %v1155, %v1379
        %v1381 = vpop.f32.mrb[0].mxu0
        %1382 = vmatprep.mubr.f32.mxu0 %v673
        %1383 = vmatmul.mubr.f32.gmra.mrb[0].mxu0 %v672
        %v1384 = vpop.f32.mrb[0].mxu0
        %v1385 = vadd.f32 %v1160, %v1384
        %v1386 = vpop.f32.mrb[0].mxu0
        %1387 = vmatprep.mubr.f32.mxu0 %v682
        %1388 = vmatmul.mubr.f32.gmra.mrb[0].mxu0 %v681
        %v1389 = vpop.f32.mrb[0].mxu0
        %v1390 = vadd.f32 %v1165, %v1389
        %v1391 = vpop.f32.mrb[0].mxu0
        %1392 = vmatprep.mubr.f32.mxu0 %v691
        %1393 = vmatmul.mubr.f32.gmra.mrb[0].mxu0 %v690
        %v1394 = vpop.f32.mrb[0].mxu0
        %v1395 = vadd.f32 %v1170, %v1394
        %v1396 = vpop.f32.mrb[0].mxu0
        %1397 = vmatprep.mubr.f32.mxu0 %v700
        %1398 = vmatmul.mubr.f32.gmra.mrb[0].mxu0 %v699
        %v1399 = vpop.f32.mrb[0].mxu0
        %v1400 = vadd.f32 %v1175, %v1399
        %v1401 = vpop.f32.mrb[0].mxu0
        %1402 = vmatprep.mubr.f32.mxu0 %v709
        %1403 = vmatmul.mubr.f32.gmra.mrb[0].mxu0 %v708
        %v1404 = vpop.f32.mrb[0].mxu0
        %v1405 = vadd.f32 %v1180, %v1404
        %v1406 = vpop.f32.mrb[0].mxu0
        %1407 = vmatprep.mubr.f32.mxu0 %v718
        %1408 = vmatmul.mubr.f32.gmra.mrb[0].mxu0 %v717
        %v1409 = vpop.f32.mrb[0].mxu0
        %v1410 = vadd.f32 %v1185, %v1409
        %v1411 = vpop.f32.mrb[0].mxu0
        %1412 = vmatprep.mubr.f32.mxu0 %v727
        %1413 = vmatmul.mubr.f32.gmra.mrb[0].mxu0 %v726
        %v1414 = vpop.f32.mrb[0].mxu0
        %v1415 = vadd.f32 %v1190, %v1414
        %v1416 = vpop.f32.mrb[0].mxu0
        %1417 = vmatprep.mubr.f32.mxu0 %v736
        %1418 = vmatmul.mubr.f32.gmra.mrb[0].mxu0 %v735
        %v1419 = vpop.f32.mrb[0].mxu0
        %v1420 = vadd.f32 %v1195, %v1419
        %v1421 = vpop.f32.mrb[0].mxu0
        %1422 = vmatprep.mubr.f32.mxu0 %v745
        %1423 = vmatmul.mubr.f32.gmra.mrb[0].mxu0 %v744
        %v1424 = vpop.f32.mrb[0].mxu0
        %v1425 = vadd.f32 %v1200, %v1424
        %v1426 = vpop.f32.mrb[0].mxu0
        %1427 = vmatprep.mubr.f32.mxu0 %v754
        %1428 = vmatmul.mubr.f32.gmra.mrb[0].mxu0 %v753
        %v1429 = vpop.f32.mrb[0].mxu0
        %v1430 = vadd.f32 %v1205, %v1429
        %v1431 = vpop.f32.mrb[0].mxu0
        %1432 = vmatprep.mubr.f32.mxu0 %v763
        %1433 = vmatmul.mubr.f32.gmra.mrb[0].mxu0 %v762
        %v1434 = vpop.f32.mrb[0].mxu0
        %v1435 = vadd.f32 %v1210, %v1434
        %v1436 = vpop.f32.mrb[0].mxu0
        %1437 = vmatprep.mubr.f32.mxu0 %v772
        %1438 = vmatmul.mubr.f32.gmra.mrb[0].mxu0 %v771
        %v1439 = vpop.f32.mrb[0].mxu0
        %v1440 = vadd.f32 %v1215, %v1439
        %v1441 = vpop.f32.mrb[0].mxu0
        %1442 = vmatprep.mubr.f32.mxu0 %v781
        %1443 = vmatmul.mubr.f32.gmra.mrb[0].mxu0 %v780
        %v1444 = vpop.f32.mrb[0].mxu0
        %v1445 = vadd.f32 %v1220, %v1444
        %v1446 = vpop.f32.mrb[0].mxu0
        %1447 = vmatprep.mubr.f32.mxu0 %v790
        %1448 = vmatmul.mubr.f32.gmra.mrb[0].mxu0 %v789
        %v1449 = vpop.f32.mrb[0].mxu0
        %v1450 = vadd.f32 %v1225, %v1449
        %v1451 = vpop.f32.mrb[0].mxu0
        %1452 = vmatprep.mubr.f32.mxu0 %v799
        %1453 = vmatmul.mubr.f32.gmra.mrb[0].mxu0 %v798
        %v1454 = vpop.f32.mrb[0].mxu0
        %v1455 = vadd.f32 %v1230, %v1454
        %v1456 = vpop.f32.mrb[0].mxu0
        %1457 = vmatprep.mubr.f32.mxu0 %v808
        %1458 = vmatmul.mubr.f32.gmra.mrb[0].mxu0 %v807
        %v1459 = vpop.f32.mrb[0].mxu0
        %v1460 = vadd.f32 %v1235, %v1459
        %v1461 = vpop.f32.mrb[0].mxu0
        %1462 = vmatprep.mubr.f32.mxu0 %v817
        %1463 = vmatmul.mubr.f32.gmra.mrb[0].mxu0 %v816
        %v1464 = vpop.f32.mrb[0].mxu0
        %v1465 = vadd.f32 %v1240, %v1464
        %v1466 = vpop.f32.mrb[0].mxu0
        %1467 = vmatprep.mubr.f32.mxu0 %v826
        %1468 = vmatmul.mubr.f32.gmra.mrb[0].mxu0 %v825
        %v1469 = vpop.f32.mrb[0].mxu0
        %v1470 = vadd.f32 %v1245, %v1469
        %v1471 = vpop.f32.mrb[0].mxu0
        %1472 = vmatprep.mubr.f32.mxu0 %v835
        %1473 = vmatmul.mubr.f32.gmra.mrb[0].mxu0 %v834
        %v1474 = vpop.f32.mrb[0].mxu0
        %v1475 = vadd.f32 %v1250, %v1474
        %v1476 = vpop.f32.mrb[0].mxu0
        %1477 = vmatprep.mubr.f32.mxu0 %v844
        %1478 = vmatmul.mubr.f32.gmra.mrb[0].mxu0 %v843
        %v1479 = vpop.f32.mrb[0].mxu0
        %v1480 = vadd.f32 %v1255, %v1479
        %v1481 = vpop.f32.mrb[0].mxu0
        %1482 = vmatprep.mubr.f32.mxu0 %v853
        %1483 = vmatmul.mubr.f32.gmra.mrb[0].mxu0 %v852
        %v1484 = vpop.f32.mrb[0].mxu0
        %v1485 = vadd.f32 %v1260, %v1484
        %v1486 = vpop.f32.mrb[0].mxu0
        %1487 = vmatprep.mubr.f32.mxu0 %v862
        %1488 = vmatmul.mubr.f32.gmra.mrb[0].mxu0 %v861
        %v1489 = vpop.f32.mrb[0].mxu0
        %v1490 = vadd.f32 %v1265, %v1489
        %v1491 = vpop.f32.mrb[0].mxu0
        %1492 = vmatprep.mubr.f32.mxu0 %v871
        %1493 = vmatmul.mubr.f32.gmra.mrb[0].mxu0 %v870
        %v1494 = vpop.f32.mrb[0].mxu0
        %v1495 = vadd.f32 %v1270, %v1494
        %v1496 = vpop.f32.mrb[0].mxu0
        %1497 = vmatprep.mubr.f32.mxu0 %v880
        %1498 = vmatmul.mubr.f32.gmra.mrb[0].mxu0 %v879
        %v1499 = vpop.f32.mrb[0].mxu0
        %v1500 = vadd.f32 %v1275, %v1499
        %v1501 = vpop.f32.mrb[0].mxu0
        %1502 = vmatprep.mubr.f32.mxu0 %v889
        %1503 = vmatmul.mubr.f32.gmra.mrb[0].mxu0 %v888
        %v1504 = vpop.f32.mrb[0].mxu0
        %v1505 = vadd.f32 %v1280, %v1504
        %v1506 = vpop.f32.mrb[0].mxu0
        %1507 = vmatprep.mubr.f32.mxu0 %v898
        %1508 = vmatmul.mubr.f32.gmra.mrb[0].mxu0 %v897
        %v1509 = vpop.f32.mrb[0].mxu0
        %v1510 = vadd.f32 %v1285, %v1509
        %v1511 = vpop.f32.mrb[0].mxu0
        %1512 = vmatprep.mubr.f32.mxu0 %v907
        %1513 = vmatmul.mubr.f32.gmra.mrb[0].mxu0 %v906
        %v1514 = vpop.f32.mrb[0].mxu0
        %v1515 = vadd.f32 %v1290, %v1514
        %v1516 = vpop.f32.mrb[0].mxu0
        %1517 = vmatprep.mubr.f32.mxu0 %v916
        %1518 = vmatmul.mubr.f32.gmra.mrb[0].mxu0 %v915
        %v1519 = vpop.f32.mrb[0].mxu0
        %v1520 = vadd.f32 %v1295, %v1519
        %v1521 = vpop.f32.mrb[0].mxu0
        %1522 = vdwg.mxu0
        %1523 = vmatprep.subr.mxu0 0.0
        %1524 = vmatpush1.msra.mxu0 %v986
        %1525 = vmatprep.subr.mxu0 0.0
        %1526 = vmatpush1.msra.mxu0 %v987
        %1527 = vmatprep.subr.mxu0 0.0
        %1528 = vmatpush1.msra.mxu0 %v988
        %1529 = vmatprep.subr.mxu0 0.0
        %1530 = vmatpush1.msra.mxu0 %v989
        %1531 = vmatprep.subr.mxu0 0.0
        %1532 = vmatpush1.msra.mxu0 %v990
        %1533 = vmatprep.subr.mxu0 0.0
        %1534 = vmatpush1.msra.mxu0 %v991
        %1535 = vmatprep.subr.mxu0 0.0
        %1536 = vmatpush1.msra.mxu0 %v992
        %1537 = vmatprep.subr.mxu0 0.0
        %1538 = vmatpush1.msra.mxu0 %v993
        %1539 = vmatprep.subr.mxu0 0.0
        %1540 = vmatpush1.msra.mxu0 %v994
        %1541 = vmatprep.subr.mxu0 0.0
        %1542 = vmatpush1.msra.mxu0 %v995
        %1543 = vmatprep.subr.mxu0 0.0
        %1544 = vmatpush1.msra.mxu0 %v996
        %1545 = vmatprep.subr.mxu0 0.0
        %1546 = vmatpush1.msra.mxu0 %v997
        %1547 = vmatprep.subr.mxu0 0.0
        %1548 = vmatpush1.msra.mxu0 %v998
        %1549 = vmatprep.subr.mxu0 0.0
        %1550 = vmatpush1.msra.mxu0 %v999
        %1551 = vmatprep.subr.mxu0 0.0
        %1552 = vmatpush1.msra.mxu0 %v1000
        %1553 = vmatprep.subr.mxu0 0.0
        %1554 = vmatpush1.msra.mxu0 %v1001
        %1555 = vmatprep.subr.mxu0 0.0
        %1556 = vmatpush1.msra.mxu0 %v1002
        %1557 = vmatprep.subr.mxu0 0.0
        %1558 = vmatpush1.msra.mxu0 %v1003
        %1559 = vmatprep.subr.mxu0 0.0
        %1560 = vmatpush1.msra.mxu0 %v1004
        %1561 = vmatprep.subr.mxu0 0.0
        %1562 = vmatpush1.msra.mxu0 %v1005
        %1563 = vmatprep.subr.mxu0 0.0
        %1564 = vmatpush1.msra.mxu0 %v1006
        %1565 = vmatprep.subr.mxu0 0.0
        %1566 = vmatpush1.msra.mxu0 %v1007
        %1567 = vmatprep.subr.mxu0 0.0
        %1568 = vmatpush1.msra.mxu0 %v1008
        %1569 = vmatprep.subr.mxu0 0.0
        %1570 = vmatpush1.msra.mxu0 %v1009
        %1571 = vmatprep.subr.mxu0 0.0
        %1572 = vmatpush1.msra.mxu0 %v1010
        %1573 = vmatprep.subr.mxu0 0.0
        %1574 = vmatpush1.msra.mxu0 %v1011
        %1575 = vmatprep.subr.mxu0 0.0
        %1576 = vmatpush1.msra.mxu0 %v1012
        %1577 = vmatprep.subr.mxu0 0.0
        %1578 = vmatpush1.msra.mxu0 %v1013
        %1579 = vmatprep.subr.mxu0 0.0
        %1580 = vmatpush1.msra.mxu0 %v1014
        %1581 = vmatprep.subr.mxu0 0.0
        %1582 = vmatpush1.msra.mxu0 %v1015
        %1583 = vmatprep.subr.mxu0 0.0
        %1584 = vmatpush1.msra.mxu0 %v1016
        %1585 = vmatprep.subr.mxu0 0.0
        %1586 = vmatpush1.msra.mxu0 %v1017
        %1587 = vmatprep.mubr.f32.mxu0 %v639
        %1588 = vmatmul.mubr.f32.gmra.mrb[0].mxu0 %v638
        %v1589 = vpop.f32.mrb[0].mxu0
        %v1590 = vadd.f32 %v1365, %v1589
        %v1591 = vpop.f32.mrb[0].mxu0
        %1592 = vmatprep.mubr.f32.mxu0 %v648
        %1593 = vmatmul.mubr.f32.gmra.mrb[0].mxu0 %v647
        %v1594 = vpop.f32.mrb[0].mxu0
        %v1595 = vadd.f32 %v1370, %v1594
        %v1596 = vpop.f32.mrb[0].mxu0
        %1597 = vmatprep.mubr.f32.mxu0 %v657
        %1598 = vmatmul.mubr.f32.gmra.mrb[0].mxu0 %v656
        %v1599 = vpop.f32.mrb[0].mxu0
        %v1600 = vadd.f32 %v1375, %v1599
        %v1601 = vpop.f32.mrb[0].mxu0
        %1602 = vmatprep.mubr.f32.mxu0 %v666
        %1603 = vmatmul.mubr.f32.gmra.mrb[0].mxu0 %v665
        %v1604 = vpop.f32.mrb[0].mxu0
        %v1605 = vadd.f32 %v1380, %v1604
        %v1606 = vpop.f32.mrb[0].mxu0
        %1607 = vmatprep.mubr.f32.mxu0 %v675
        %1608 = vmatmul.mubr.f32.gmra.mrb[0].mxu0 %v674
        %v1609 = vpop.f32.mrb[0].mxu0
        %v1610 = vadd.f32 %v1385, %v1609
        %v1611 = vpop.f32.mrb[0].mxu0
        %1612 = vmatprep.mubr.f32.mxu0 %v684
        %1613 = vmatmul.mubr.f32.gmra.mrb[0].mxu0 %v683
        %v1614 = vpop.f32.mrb[0].mxu0
        %v1615 = vadd.f32 %v1390, %v1614
        %v1616 = vpop.f32.mrb[0].mxu0
        %1617 = vmatprep.mubr.f32.mxu0 %v693
        %1618 = vmatmul.mubr.f32.gmra.mrb[0].mxu0 %v692
        %v1619 = vpop.f32.mrb[0].mxu0
        %v1620 = vadd.f32 %v1395, %v1619
        %v1621 = vpop.f32.mrb[0].mxu0
        %1622 = vmatprep.mubr.f32.mxu0 %v702
        %1623 = vmatmul.mubr.f32.gmra.mrb[0].mxu0 %v701
        %v1624 = vpop.f32.mrb[0].mxu0
        %v1625 = vadd.f32 %v1400, %v1624
        %v1626 = vpop.f32.mrb[0].mxu0
        %1627 = vmatprep.mubr.f32.mxu0 %v711
        %1628 = vmatmul.mubr.f32.gmra.mrb[0].mxu0 %v710
        %v1629 = vpop.f32.mrb[0].mxu0
        %v1630 = vadd.f32 %v1405, %v1629
        %v1631 = vpop.f32.mrb[0].mxu0
        %1632 = vmatprep.mubr.f32.mxu0 %v720
        %1633 = vmatmul.mubr.f32.gmra.mrb[0].mxu0 %v719
        %v1634 = vpop.f32.mrb[0].mxu0
        %v1635 = vadd.f32 %v1410, %v1634
        %v1636 = vpop.f32.mrb[0].mxu0
        %1637 = vmatprep.mubr.f32.mxu0 %v729
        %1638 = vmatmul.mubr.f32.gmra.mrb[0].mxu0 %v728
        %v1639 = vpop.f32.mrb[0].mxu0
        %v1640 = vadd.f32 %v1415, %v1639
        %v1641 = vpop.f32.mrb[0].mxu0
        %1642 = vmatprep.mubr.f32.mxu0 %v738
        %1643 = vmatmul.mubr.f32.gmra.mrb[0].mxu0 %v737
        %v1644 = vpop.f32.mrb[0].mxu0
        %v1645 = vadd.f32 %v1420, %v1644
        %v1646 = vpop.f32.mrb[0].mxu0
        %1647 = vmatprep.mubr.f32.mxu0 %v747
        %1648 = vmatmul.mubr.f32.gmra.mrb[0].mxu0 %v746
        %v1649 = vpop.f32.mrb[0].mxu0
        %v1650 = vadd.f32 %v1425, %v1649
        %v1651 = vpop.f32.mrb[0].mxu0
        %1652 = vmatprep.mubr.f32.mxu0 %v756
        %1653 = vmatmul.mubr.f32.gmra.mrb[0].mxu0 %v755
        %v1654 = vpop.f32.mrb[0].mxu0
        %v1655 = vadd.f32 %v1430, %v1654
        %v1656 = vpop.f32.mrb[0].mxu0
        %1657 = vmatprep.mubr.f32.mxu0 %v765
        %1658 = vmatmul.mubr.f32.gmra.mrb[0].mxu0 %v764
        %v1659 = vpop.f32.mrb[0].mxu0
        %v1660 = vadd.f32 %v1435, %v1659
        %v1661 = vpop.f32.mrb[0].mxu0
        %1662 = vmatprep.mubr.f32.mxu0 %v774
        %1663 = vmatmul.mubr.f32.gmra.mrb[0].mxu0 %v773
        %v1664 = vpop.f32.mrb[0].mxu0
        %v1665 = vadd.f32 %v1440, %v1664
        %v1666 = vpop.f32.mrb[0].mxu0
        %1667 = vmatprep.mubr.f32.mxu0 %v783
        %1668 = vmatmul.mubr.f32.gmra.mrb[0].mxu0 %v782
        %v1669 = vpop.f32.mrb[0].mxu0
        %v1670 = vadd.f32 %v1445, %v1669
        %v1671 = vpop.f32.mrb[0].mxu0
        %1672 = vmatprep.mubr.f32.mxu0 %v792
        %1673 = vmatmul.mubr.f32.gmra.mrb[0].mxu0 %v791
        %v1674 = vpop.f32.mrb[0].mxu0
        %v1675 = vadd.f32 %v1450, %v1674
        %v1676 = vpop.f32.mrb[0].mxu0
        %1677 = vmatprep.mubr.f32.mxu0 %v801
        %1678 = vmatmul.mubr.f32.gmra.mrb[0].mxu0 %v800
        %v1679 = vpop.f32.mrb[0].mxu0
        %v1680 = vadd.f32 %v1455, %v1679
        %v1681 = vpop.f32.mrb[0].mxu0
        %1682 = vmatprep.mubr.f32.mxu0 %v810
        %1683 = vmatmul.mubr.f32.gmra.mrb[0].mxu0 %v809
        %v1684 = vpop.f32.mrb[0].mxu0
        %v1685 = vadd.f32 %v1460, %v1684
        %v1686 = vpop.f32.mrb[0].mxu0
        %1687 = vmatprep.mubr.f32.mxu0 %v819
        %1688 = vmatmul.mubr.f32.gmra.mrb[0].mxu0 %v818
        %v1689 = vpop.f32.mrb[0].mxu0
        %v1690 = vadd.f32 %v1465, %v1689
        %v1691 = vpop.f32.mrb[0].mxu0
        %1692 = vmatprep.mubr.f32.mxu0 %v828
        %1693 = vmatmul.mubr.f32.gmra.mrb[0].mxu0 %v827
        %v1694 = vpop.f32.mrb[0].mxu0
        %v1695 = vadd.f32 %v1470, %v1694
        %v1696 = vpop.f32.mrb[0].mxu0
        %1697 = vmatprep.mubr.f32.mxu0 %v837
        %1698 = vmatmul.mubr.f32.gmra.mrb[0].mxu0 %v836
        %v1699 = vpop.f32.mrb[0].mxu0
        %v1700 = vadd.f32 %v1475, %v1699
        %v1701 = vpop.f32.mrb[0].mxu0
        %1702 = vmatprep.mubr.f32.mxu0 %v846
        %1703 = vmatmul.mubr.f32.gmra.mrb[0].mxu0 %v845
        %v1704 = vpop.f32.mrb[0].mxu0
        %v1705 = vadd.f32 %v1480, %v1704
        %v1706 = vpop.f32.mrb[0].mxu0
        %1707 = vmatprep.mubr.f32.mxu0 %v855
        %1708 = vmatmul.mubr.f32.gmra.mrb[0].mxu0 %v854
        %v1709 = vpop.f32.mrb[0].mxu0
        %v1710 = vadd.f32 %v1485, %v1709
        %v1711 = vpop.f32.mrb[0].mxu0
        %1712 = vmatprep.mubr.f32.mxu0 %v864
        %1713 = vmatmul.mubr.f32.gmra.mrb[0].mxu0 %v863
        %v1714 = vpop.f32.mrb[0].mxu0
        %v1715 = vadd.f32 %v1490, %v1714
        %v1716 = vpop.f32.mrb[0].mxu0
        %1717 = vmatprep.mubr.f32.mxu0 %v873
        %1718 = vmatmul.mubr.f32.gmra.mrb[0].mxu0 %v872
        %v1719 = vpop.f32.mrb[0].mxu0
        %v1720 = vadd.f32 %v1495, %v1719
        %v1721 = vpop.f32.mrb[0].mxu0
        %1722 = vmatprep.mubr.f32.mxu0 %v882
        %1723 = vmatmul.mubr.f32.gmra.mrb[0].mxu0 %v881
        %v1724 = vpop.f32.mrb[0].mxu0
        %v1725 = vadd.f32 %v1500, %v1724
        %v1726 = vpop.f32.mrb[0].mxu0
        %1727 = vmatprep.mubr.f32.mxu0 %v891
        %1728 = vmatmul.mubr.f32.gmra.mrb[0].mxu0 %v890
        %v1729 = vpop.f32.mrb[0].mxu0
        %v1730 = vadd.f32 %v1505, %v1729
        %v1731 = vpop.f32.mrb[0].mxu0
        %1732 = vmatprep.mubr.f32.mxu0 %v900
        %1733 = vmatmul.mubr.f32.gmra.mrb[0].mxu0 %v899
        %v1734 = vpop.f32.mrb[0].mxu0
        %v1735 = vadd.f32 %v1510, %v1734
        %v1736 = vpop.f32.mrb[0].mxu0
        %1737 = vmatprep.mubr.f32.mxu0 %v909
        %1738 = vmatmul.mubr.f32.gmra.mrb[0].mxu0 %v908
        %v1739 = vpop.f32.mrb[0].mxu0
        %v1740 = vadd.f32 %v1515, %v1739
        %v1741 = vpop.f32.mrb[0].mxu0
        %1742 = vmatprep.mubr.f32.mxu0 %v918
        %1743 = vmatmul.mubr.f32.gmra.mrb[0].mxu0 %v917
        %v1744 = vpop.f32.mrb[0].mxu0
        %v1745 = vadd.f32 %v1520, %v1744
        %v1746 = vpop.f32.mrb[0].mxu0
        %1747 = vdwg.mxu0
        %1748 = vmatprep.subr.mxu0 0.0
        %1749 = vmatpush1.msra.mxu0 %v1018
        %1750 = vmatprep.subr.mxu0 0.0
        %1751 = vmatpush1.msra.mxu0 %v1019
        %1752 = vmatprep.subr.mxu0 0.0
        %1753 = vmatpush1.msra.mxu0 %v1020
        %1754 = vmatprep.subr.mxu0 0.0
        %1755 = vmatpush1.msra.mxu0 %v1021
        %1756 = vmatprep.subr.mxu0 0.0
        %1757 = vmatpush1.msra.mxu0 %v1022
        %1758 = vmatprep.subr.mxu0 0.0
        %1759 = vmatpush1.msra.mxu0 %v1023
        %1760 = vmatprep.subr.mxu0 0.0
        %1761 = vmatpush1.msra.mxu0 %v1024
        %1762 = vmatprep.subr.mxu0 0.0
        %1763 = vmatpush1.msra.mxu0 %v1025
        %1764 = vmatprep.subr.mxu0 0.0
        %1765 = vmatpush1.msra.mxu0 %v1026
        %1766 = vmatprep.subr.mxu0 0.0
        %1767 = vmatpush1.msra.mxu0 %v1027
        %1768 = vmatprep.subr.mxu0 0.0
        %1769 = vmatpush1.msra.mxu0 %v1028
        %1770 = vmatprep.subr.mxu0 0.0
        %1771 = vmatpush1.msra.mxu0 %v1029
        %1772 = vmatprep.subr.mxu0 0.0
        %1773 = vmatpush1.msra.mxu0 %v1030
        %1774 = vmatprep.subr.mxu0 0.0
        %1775 = vmatpush1.msra.mxu0 %v1031
        %1776 = vmatprep.subr.mxu0 0.0
        %1777 = vmatpush1.msra.mxu0 %v1032
        %1778 = vmatprep.subr.mxu0 0.0
        %1779 = vmatpush1.msra.mxu0 %v1033
        %1780 = vmatprep.subr.mxu0 0.0
        %1781 = vmatpush1.msra.mxu0 %v1034
        %1782 = vmatprep.subr.mxu0 0.0
        %1783 = vmatpush1.msra.mxu0 %v1035
        %1784 = vmatprep.subr.mxu0 0.0
        %1785 = vmatpush1.msra.mxu0 %v1036
        %1786 = vmatprep.subr.mxu0 0.0
        %1787 = vmatpush1.msra.mxu0 %v1037
        %1788 = vmatprep.subr.mxu0 0.0
        %1789 = vmatpush1.msra.mxu0 %v1038
        %1790 = vmatprep.subr.mxu0 0.0
        %1791 = vmatpush1.msra.mxu0 %v1039
        %1792 = vmatprep.subr.mxu0 0.0
        %1793 = vmatpush1.msra.mxu0 %v1040
        %1794 = vmatprep.subr.mxu0 0.0
        %1795 = vmatpush1.msra.mxu0 %v1041
        %1796 = vmatprep.subr.mxu0 0.0
        %1797 = vmatpush1.msra.mxu0 %v1042
        %1798 = vmatprep.subr.mxu0 0.0
        %1799 = vmatpush1.msra.mxu0 %v1043
        %1800 = vmatprep.subr.mxu0 0.0
        %1801 = vmatpush1.msra.mxu0 %v1044
        %1802 = vmatprep.subr.mxu0 0.0
        %1803 = vmatpush1.msra.mxu0 %v1045
        %1804 = vmatprep.subr.mxu0 0.0
        %1805 = vmatpush1.msra.mxu0 %v1046
        %1806 = vmatprep.subr.mxu0 0.0
        %1807 = vmatpush1.msra.mxu0 %v1047
        %1808 = vmatprep.subr.mxu0 0.0
        %1809 = vmatpush1.msra.mxu0 %v1048
        %1810 = vmatprep.subr.mxu0 0.0
        %1811 = vmatpush1.msra.mxu0 %v1049
        %1812 = vmatprep.mubr.f32.mxu0 %v641
        %1813 = vmatmul.mubr.f32.gmra.mrb[0].mxu0 %v640
        %v1814 = vpop.f32.mrb[0].mxu0
        %v1815 = vadd.f32 %v1590, %v1814
        %v1816 = vpop.f32.mrb[0].mxu0
        %1817 = vmatprep.mubr.f32.mxu0 %v650
        %1818 = vmatmul.mubr.f32.gmra.mrb[0].mxu0 %v649
        %v1819 = vpop.f32.mrb[0].mxu0
        %v1820 = vadd.f32 %v1595, %v1819
        %v1821 = vpop.f32.mrb[0].mxu0
        %1822 = vmatprep.mubr.f32.mxu0 %v659
        %1823 = vmatmul.mubr.f32.gmra.mrb[0].mxu0 %v658
        %v1824 = vpop.f32.mrb[0].mxu0
        %v1825 = vadd.f32 %v1600, %v1824
        %v1826 = vpop.f32.mrb[0].mxu0
        %1827 = vmatprep.mubr.f32.mxu0 %v668
        %1828 = vmatmul.mubr.f32.gmra.mrb[0].mxu0 %v667
        %v1829 = vpop.f32.mrb[0].mxu0
        %v1830 = vadd.f32 %v1605, %v1829
        %v1831 = vpop.f32.mrb[0].mxu0
        %1832 = vmatprep.mubr.f32.mxu0 %v677
        %1833 = vmatmul.mubr.f32.gmra.mrb[0].mxu0 %v676
        %v1834 = vpop.f32.mrb[0].mxu0
        %v1835 = vadd.f32 %v1610, %v1834
        %v1836 = vpop.f32.mrb[0].mxu0
        %1837 = vmatprep.mubr.f32.mxu0 %v686
        %1838 = vmatmul.mubr.f32.gmra.mrb[0].mxu0 %v685
        %v1839 = vpop.f32.mrb[0].mxu0
        %v1840 = vadd.f32 %v1615, %v1839
        %v1841 = vpop.f32.mrb[0].mxu0
        %1842 = vmatprep.mubr.f32.mxu0 %v695
        %1843 = vmatmul.mubr.f32.gmra.mrb[0].mxu0 %v694
        %v1844 = vpop.f32.mrb[0].mxu0
        %v1845 = vadd.f32 %v1620, %v1844
        %v1846 = vpop.f32.mrb[0].mxu0
        %1847 = vmatprep.mubr.f32.mxu0 %v704
        %1848 = vmatmul.mubr.f32.gmra.mrb[0].mxu0 %v703
        %v1849 = vpop.f32.mrb[0].mxu0
        %v1850 = vadd.f32 %v1625, %v1849
        %v1851 = vpop.f32.mrb[0].mxu0
        %1852 = vmatprep.mubr.f32.mxu0 %v713
        %1853 = vmatmul.mubr.f32.gmra.mrb[0].mxu0 %v712
        %v1854 = vpop.f32.mrb[0].mxu0
        %v1855 = vadd.f32 %v1630, %v1854
        %v1856 = vpop.f32.mrb[0].mxu0
        %1857 = vmatprep.mubr.f32.mxu0 %v722
        %1858 = vmatmul.mubr.f32.gmra.mrb[0].mxu0 %v721
        %v1859 = vpop.f32.mrb[0].mxu0
        %v1860 = vadd.f32 %v1635, %v1859
        %v1861 = vpop.f32.mrb[0].mxu0
        %1862 = vmatprep.mubr.f32.mxu0 %v731
        %1863 = vmatmul.mubr.f32.gmra.mrb[0].mxu0 %v730
        %v1864 = vpop.f32.mrb[0].mxu0
        %v1865 = vadd.f32 %v1640, %v1864
        %v1866 = vpop.f32.mrb[0].mxu0
        %1867 = vmatprep.mubr.f32.mxu0 %v740
        %1868 = vmatmul.mubr.f32.gmra.mrb[0].mxu0 %v739
        %v1869 = vpop.f32.mrb[0].mxu0
        %v1870 = vadd.f32 %v1645, %v1869
        %v1871 = vpop.f32.mrb[0].mxu0
        %1872 = vmatprep.mubr.f32.mxu0 %v749
        %1873 = vmatmul.mubr.f32.gmra.mrb[0].mxu0 %v748
        %v1874 = vpop.f32.mrb[0].mxu0
        %v1875 = vadd.f32 %v1650, %v1874
        %v1876 = vpop.f32.mrb[0].mxu0
        %1877 = vmatprep.mubr.f32.mxu0 %v758
        %1878 = vmatmul.mubr.f32.gmra.mrb[0].mxu0 %v757
        %v1879 = vpop.f32.mrb[0].mxu0
        %v1880 = vadd.f32 %v1655, %v1879
        %v1881 = vpop.f32.mrb[0].mxu0
        %1882 = vmatprep.mubr.f32.mxu0 %v767
        %1883 = vmatmul.mubr.f32.gmra.mrb[0].mxu0 %v766
        %v1884 = vpop.f32.mrb[0].mxu0
        %v1885 = vadd.f32 %v1660, %v1884
        %v1886 = vpop.f32.mrb[0].mxu0
        %1887 = vmatprep.mubr.f32.mxu0 %v776
        %1888 = vmatmul.mubr.f32.gmra.mrb[0].mxu0 %v775
        %v1889 = vpop.f32.mrb[0].mxu0
        %v1890 = vadd.f32 %v1665, %v1889
        %v1891 = vpop.f32.mrb[0].mxu0
        %1892 = vmatprep.mubr.f32.mxu0 %v785
        %1893 = vmatmul.mubr.f32.gmra.mrb[0].mxu0 %v784
        %v1894 = vpop.f32.mrb[0].mxu0
        %v1895 = vadd.f32 %v1670, %v1894
        %v1896 = vpop.f32.mrb[0].mxu0
        %1897 = vmatprep.mubr.f32.mxu0 %v794
        %1898 = vmatmul.mubr.f32.gmra.mrb[0].mxu0 %v793
        %v1899 = vpop.f32.mrb[0].mxu0
        %v1900 = vadd.f32 %v1675, %v1899
        %v1901 = vpop.f32.mrb[0].mxu0
        %1902 = vmatprep.mubr.f32.mxu0 %v803
        %1903 = vmatmul.mubr.f32.gmra.mrb[0].mxu0 %v802
        %v1904 = vpop.f32.mrb[0].mxu0
        %v1905 = vadd.f32 %v1680, %v1904
        %v1906 = vpop.f32.mrb[0].mxu0
        %1907 = vmatprep.mubr.f32.mxu0 %v812
        %1908 = vmatmul.mubr.f32.gmra.mrb[0].mxu0 %v811
        %v1909 = vpop.f32.mrb[0].mxu0
        %v1910 = vadd.f32 %v1685, %v1909
        %v1911 = vpop.f32.mrb[0].mxu0
        %1912 = vmatprep.mubr.f32.mxu0 %v821
        %1913 = vmatmul.mubr.f32.gmra.mrb[0].mxu0 %v820
        %v1914 = vpop.f32.mrb[0].mxu0
        %v1915 = vadd.f32 %v1690, %v1914
        %v1916 = vpop.f32.mrb[0].mxu0
        %1917 = vmatprep.mubr.f32.mxu0 %v830
        %1918 = vmatmul.mubr.f32.gmra.mrb[0].mxu0 %v829
        %v1919 = vpop.f32.mrb[0].mxu0
        %v1920 = vadd.f32 %v1695, %v1919
        %v1921 = vpop.f32.mrb[0].mxu0
        %1922 = vmatprep.mubr.f32.mxu0 %v839
        %1923 = vmatmul.mubr.f32.gmra.mrb[0].mxu0 %v838
        %v1924 = vpop.f32.mrb[0].mxu0
        %v1925 = vadd.f32 %v1700, %v1924
        %v1926 = vpop.f32.mrb[0].mxu0
        %1927 = vmatprep.mubr.f32.mxu0 %v848
        %1928 = vmatmul.mubr.f32.gmra.mrb[0].mxu0 %v847
        %v1929 = vpop.f32.mrb[0].mxu0
        %v1930 = vadd.f32 %v1705, %v1929
        %v1931 = vpop.f32.mrb[0].mxu0
        %1932 = vmatprep.mubr.f32.mxu0 %v857
        %1933 = vmatmul.mubr.f32.gmra.mrb[0].mxu0 %v856
        %v1934 = vpop.f32.mrb[0].mxu0
        %v1935 = vadd.f32 %v1710, %v1934
        %v1936 = vpop.f32.mrb[0].mxu0
        %1937 = vmatprep.mubr.f32.mxu0 %v866
        %1938 = vmatmul.mubr.f32.gmra.mrb[0].mxu0 %v865
        %v1939 = vpop.f32.mrb[0].mxu0
        %v1940 = vadd.f32 %v1715, %v1939
        %v1941 = vpop.f32.mrb[0].mxu0
        %1942 = vmatprep.mubr.f32.mxu0 %v875
        %1943 = vmatmul.mubr.f32.gmra.mrb[0].mxu0 %v874
        %v1944 = vpop.f32.mrb[0].mxu0
        %v1945 = vadd.f32 %v1720, %v1944
        %v1946 = vpop.f32.mrb[0].mxu0
        %1947 = vmatprep.mubr.f32.mxu0 %v884
        %1948 = vmatmul.mubr.f32.gmra.mrb[0].mxu0 %v883
        %v1949 = vpop.f32.mrb[0].mxu0
        %v1950 = vadd.f32 %v1725, %v1949
        %v1951 = vpop.f32.mrb[0].mxu0
        %1952 = vmatprep.mubr.f32.mxu0 %v893
        %1953 = vmatmul.mubr.f32.gmra.mrb[0].mxu0 %v892
        %v1954 = vpop.f32.mrb[0].mxu0
        %v1955 = vadd.f32 %v1730, %v1954
        %v1956 = vpop.f32.mrb[0].mxu0
        %1957 = vmatprep.mubr.f32.mxu0 %v902
        %1958 = vmatmul.mubr.f32.gmra.mrb[0].mxu0 %v901
        %v1959 = vpop.f32.mrb[0].mxu0
        %v1960 = vadd.f32 %v1735, %v1959
        %v1961 = vpop.f32.mrb[0].mxu0
        %1962 = vmatprep.mubr.f32.mxu0 %v911
        %1963 = vmatmul.mubr.f32.gmra.mrb[0].mxu0 %v910
        %v1964 = vpop.f32.mrb[0].mxu0
        %v1965 = vadd.f32 %v1740, %v1964
        %v1966 = vpop.f32.mrb[0].mxu0
        %1967 = vmatprep.mubr.f32.mxu0 %v920
        %1968 = vmatmul.mubr.f32.gmra.mrb[0].mxu0 %v919
        %v1969 = vpop.f32.mrb[0].mxu0
        %v1970 = vadd.f32 %v1745, %v1969
        %v1971 = vpop.f32.mrb[0].mxu0
        %1972 = vdwg.mxu0
        %1973 = vmatprep.subr.mxu0 0.0
        %1974 = vmatpush1.msra.mxu0 %v1050
        %1975 = vmatprep.subr.mxu0 0.0
        %1976 = vmatpush1.msra.mxu0 %v1051
        %1977 = vmatprep.subr.mxu0 0.0
        %1978 = vmatpush1.msra.mxu0 %v1052
        %1979 = vmatprep.subr.mxu0 0.0
        %1980 = vmatpush1.msra.mxu0 %v1053
        %1981 = vmatprep.subr.mxu0 0.0
        %1982 = vmatpush1.msra.mxu0 %v1054
        %1983 = vmatprep.subr.mxu0 0.0
        %1984 = vmatpush1.msra.mxu0 %v1055
        %1985 = vmatprep.subr.mxu0 0.0
        %1986 = vmatpush1.msra.mxu0 %v1056
        %1987 = vmatprep.subr.mxu0 0.0
        %1988 = vmatpush1.msra.mxu0 %v1057
        %1989 = vmatprep.subr.mxu0 0.0
        %1990 = vmatpush1.msra.mxu0 %v1058
        %1991 = vmatprep.subr.mxu0 0.0
        %1992 = vmatpush1.msra.mxu0 %v1059
        %1993 = vmatprep.subr.mxu0 0.0
        %1994 = vmatpush1.msra.mxu0 %v1060
        %1995 = vmatprep.subr.mxu0 0.0
        %1996 = vmatpush1.msra.mxu0 %v1061
        %1997 = vmatprep.subr.mxu0 0.0
        %1998 = vmatpush1.msra.mxu0 %v1062
        %1999 = vmatprep.subr.mxu0 0.0
        %2000 = vmatpush1.msra.mxu0 %v1063
        %2001 = vmatprep.subr.mxu0 0.0
        %2002 = vmatpush1.msra.mxu0 %v1064
        %2003 = vmatprep.subr.mxu0 0.0
        %2004 = vmatpush1.msra.mxu0 %v1065
        %2005 = vmatprep.subr.mxu0 0.0
        %2006 = vmatpush1.msra.mxu0 0.0
        %2007 = vmatprep.subr.mxu0 0.0
        %2008 = vmatpush1.msra.mxu0 0.0
        %2009 = vmatprep.subr.mxu0 0.0
        %2010 = vmatpush1.msra.mxu0 0.0
        %2011 = vmatprep.subr.mxu0 0.0
        %2012 = vmatpush1.msra.mxu0 0.0
        %2013 = vmatprep.subr.mxu0 0.0
        %2014 = vmatpush1.msra.mxu0 0.0
        %2015 = vmatprep.subr.mxu0 0.0
        %2016 = vmatpush1.msra.mxu0 0.0
        %2017 = vmatprep.subr.mxu0 0.0
        %2018 = vmatpush1.msra.mxu0 0.0
        %2019 = vmatprep.subr.mxu0 0.0
        %2020 = vmatpush1.msra.mxu0 0.0
        %2021 = vmatprep.subr.mxu0 0.0
        %2022 = vmatpush1.msra.mxu0 0.0
        %2023 = vmatprep.subr.mxu0 0.0
        %2024 = vmatpush1.msra.mxu0 0.0
        %2025 = vmatprep.subr.mxu0 0.0
        %2026 = vmatpush1.msra.mxu0 0.0
        %2027 = vmatprep.subr.mxu0 0.0
        %2028 = vmatpush1.msra.mxu0 0.0
        %2029 = vmatprep.subr.mxu0 0.0
        %2030 = vmatpush1.msra.mxu0 0.0
        %2031 = vmatprep.subr.mxu0 0.0
        %2032 = vmatpush1.msra.mxu0 0.0
        %2033 = vmatprep.subr.mxu0 0.0
        %2034 = vmatpush1.msra.mxu0 0.0
        %2035 = vmatprep.subr.mxu0 0.0
        %2036 = vmatpush1.msra.mxu0 0.0
        %2037 = vmatprep.mubr.f32.mxu0 0.0
        %2038 = vmatmul.mubr.f32.gmra.mrb[0].mxu0 %v642
        %v2039 = vpop.f32.mrb[0].mxu0
        %v2040 = vadd.f32 %v1815, %v2039
        %v2041 = vpop.f32.mrb[0].mxu0
        %2042 = vmatprep.mubr.f32.mxu0 0.0
        %2043 = vmatmul.mubr.f32.gmra.mrb[0].mxu0 %v651
        %v2044 = vpop.f32.mrb[0].mxu0
        %v2045 = vadd.f32 %v1820, %v2044
        %v2046 = vpop.f32.mrb[0].mxu0
        %2047 = vmatprep.mubr.f32.mxu0 0.0
        %2048 = vmatmul.mubr.f32.gmra.mrb[0].mxu0 %v660
        %v2049 = vpop.f32.mrb[0].mxu0
        %v2050 = vadd.f32 %v1825, %v2049
        %v2051 = vpop.f32.mrb[0].mxu0
        %2052 = vmatprep.mubr.f32.mxu0 0.0
        %2053 = vmatmul.mubr.f32.gmra.mrb[0].mxu0 %v669
        %v2054 = vpop.f32.mrb[0].mxu0
        %v2055 = vadd.f32 %v1830, %v2054
        %v2056 = vpop.f32.mrb[0].mxu0
        %2057 = vmatprep.mubr.f32.mxu0 0.0
        %2058 = vmatmul.mubr.f32.gmra.mrb[0].mxu0 %v678
        %v2059 = vpop.f32.mrb[0].mxu0
        %v2060 = vadd.f32 %v1835, %v2059
        %v2061 = vpop.f32.mrb[0].mxu0
        %2062 = vmatprep.mubr.f32.mxu0 0.0
        %2063 = vmatmul.mubr.f32.gmra.mrb[0].mxu0 %v687
        %v2064 = vpop.f32.mrb[0].mxu0
        %v2065 = vadd.f32 %v1840, %v2064
        %v2066 = vpop.f32.mrb[0].mxu0
        %2067 = vmatprep.mubr.f32.mxu0 0.0
        %2068 = vmatmul.mubr.f32.gmra.mrb[0].mxu0 %v696
        %v2069 = vpop.f32.mrb[0].mxu0
        %v2070 = vadd.f32 %v1845, %v2069
        %v2071 = vpop.f32.mrb[0].mxu0
        %2072 = vmatprep.mubr.f32.mxu0 0.0
        %2073 = vmatmul.mubr.f32.gmra.mrb[0].mxu0 %v705
        %v2074 = vpop.f32.mrb[0].mxu0
        %v2075 = vadd.f32 %v1850, %v2074
        %v2076 = vpop.f32.mrb[0].mxu0
        %2077 = vmatprep.mubr.f32.mxu0 0.0
        %2078 = vmatmul.mubr.f32.gmra.mrb[0].mxu0 %v714
        %v2079 = vpop.f32.mrb[0].mxu0
        %v2080 = vadd.f32 %v1855, %v2079
        %v2081 = vpop.f32.mrb[0].mxu0
        %2082 = vmatprep.mubr.f32.mxu0 0.0
        %2083 = vmatmul.mubr.f32.gmra.mrb[0].mxu0 %v723
        %v2084 = vpop.f32.mrb[0].mxu0
        %v2085 = vadd.f32 %v1860, %v2084
        %v2086 = vpop.f32.mrb[0].mxu0
        %2087 = vmatprep.mubr.f32.mxu0 0.0
        %2088 = vmatmul.mubr.f32.gmra.mrb[0].mxu0 %v732
        %v2089 = vpop.f32.mrb[0].mxu0
        %v2090 = vadd.f32 %v1865, %v2089
        %v2091 = vpop.f32.mrb[0].mxu0
        %2092 = vmatprep.mubr.f32.mxu0 0.0
        %2093 = vmatmul.mubr.f32.gmra.mrb[0].mxu0 %v741
        %v2094 = vpop.f32.mrb[0].mxu0
        %v2095 = vadd.f32 %v1870, %v2094
        %v2096 = vpop.f32.mrb[0].mxu0
        %2097 = vmatprep.mubr.f32.mxu0 0.0
        %2098 = vmatmul.mubr.f32.gmra.mrb[0].mxu0 %v750
        %v2099 = vpop.f32.mrb[0].mxu0
        %v2100 = vadd.f32 %v1875, %v2099
        %v2101 = vpop.f32.mrb[0].mxu0
        %2102 = vmatprep.mubr.f32.mxu0 0.0
        %2103 = vmatmul.mubr.f32.gmra.mrb[0].mxu0 %v759
        %v2104 = vpop.f32.mrb[0].mxu0
        %v2105 = vadd.f32 %v1880, %v2104
        %v2106 = vpop.f32.mrb[0].mxu0
        %2107 = vmatprep.mubr.f32.mxu0 0.0
        %2108 = vmatmul.mubr.f32.gmra.mrb[0].mxu0 %v768
        %v2109 = vpop.f32.mrb[0].mxu0
        %v2110 = vadd.f32 %v1885, %v2109
        %v2111 = vpop.f32.mrb[0].mxu0
        %2112 = vmatprep.mubr.f32.mxu0 0.0
        %2113 = vmatmul.mubr.f32.gmra.mrb[0].mxu0 %v777
        %v2114 = vpop.f32.mrb[0].mxu0
        %v2115 = vadd.f32 %v1890, %v2114
        %v2116 = vpop.f32.mrb[0].mxu0
        %2117 = vmatprep.mubr.f32.mxu0 0.0
        %2118 = vmatmul.mubr.f32.gmra.mrb[0].mxu0 %v786
        %v2119 = vpop.f32.mrb[0].mxu0
        %v2120 = vadd.f32 %v1895, %v2119
        %v2121 = vpop.f32.mrb[0].mxu0
        %2122 = vmatprep.mubr.f32.mxu0 0.0
        %2123 = vmatmul.mubr.f32.gmra.mrb[0].mxu0 %v795
        %v2124 = vpop.f32.mrb[0].mxu0
        %v2125 = vadd.f32 %v1900, %v2124
        %v2126 = vpop.f32.mrb[0].mxu0
        %2127 = vmatprep.mubr.f32.mxu0 0.0
        %2128 = vmatmul.mubr.f32.gmra.mrb[0].mxu0 %v804
        %v2129 = vpop.f32.mrb[0].mxu0
        %v2130 = vadd.f32 %v1905, %v2129
        %v2131 = vpop.f32.mrb[0].mxu0
        %2132 = vmatprep.mubr.f32.mxu0 0.0
        %2133 = vmatmul.mubr.f32.gmra.mrb[0].mxu0 %v813
        %v2134 = vpop.f32.mrb[0].mxu0
        %v2135 = vadd.f32 %v1910, %v2134
        %v2136 = vpop.f32.mrb[0].mxu0
        %2137 = vmatprep.mubr.f32.mxu0 0.0
        %2138 = vmatmul.mubr.f32.gmra.mrb[0].mxu0 %v822
        %v2139 = vpop.f32.mrb[0].mxu0
        %v2140 = vadd.f32 %v1915, %v2139
        %v2141 = vpop.f32.mrb[0].mxu0
        %2142 = vmatprep.mubr.f32.mxu0 0.0
        %2143 = vmatmul.mubr.f32.gmra.mrb[0].mxu0 %v831
        %v2144 = vpop.f32.mrb[0].mxu0
        %v2145 = vadd.f32 %v1920, %v2144
        %v2146 = vpop.f32.mrb[0].mxu0
        %2147 = vmatprep.mubr.f32.mxu0 0.0
        %2148 = vmatmul.mubr.f32.gmra.mrb[0].mxu0 %v840
        %v2149 = vpop.f32.mrb[0].mxu0
        %v2150 = vadd.f32 %v1925, %v2149
        %v2151 = vpop.f32.mrb[0].mxu0
        %2152 = vmatprep.mubr.f32.mxu0 0.0
        %2153 = vmatmul.mubr.f32.gmra.mrb[0].mxu0 %v849
        %v2154 = vpop.f32.mrb[0].mxu0
        %v2155 = vadd.f32 %v1930, %v2154
        %v2156 = vpop.f32.mrb[0].mxu0
        %2157 = vmatprep.mubr.f32.mxu0 0.0
        %2158 = vmatmul.mubr.f32.gmra.mrb[0].mxu0 %v858
        %v2159 = vpop.f32.mrb[0].mxu0
        %v2160 = vadd.f32 %v1935, %v2159
        %v2161 = vpop.f32.mrb[0].mxu0
        %2162 = vmatprep.mubr.f32.mxu0 0.0
        %2163 = vmatmul.mubr.f32.gmra.mrb[0].mxu0 %v867
        %v2164 = vpop.f32.mrb[0].mxu0
        %v2165 = vadd.f32 %v1940, %v2164
        %v2166 = vpop.f32.mrb[0].mxu0
        %2167 = vmatprep.mubr.f32.mxu0 0.0
        %2168 = vmatmul.mubr.f32.gmra.mrb[0].mxu0 %v876
        %v2169 = vpop.f32.mrb[0].mxu0
        %v2170 = vadd.f32 %v1945, %v2169
        %v2171 = vpop.f32.mrb[0].mxu0
        %2172 = vmatprep.mubr.f32.mxu0 0.0
        %2173 = vmatmul.mubr.f32.gmra.mrb[0].mxu0 %v885
        %v2174 = vpop.f32.mrb[0].mxu0
        %v2175 = vadd.f32 %v1950, %v2174
        %v2176 = vpop.f32.mrb[0].mxu0
        %2177 = vmatprep.mubr.f32.mxu0 0.0
        %2178 = vmatmul.mubr.f32.gmra.mrb[0].mxu0 %v894
        %v2179 = vpop.f32.mrb[0].mxu0
        %v2180 = vadd.f32 %v1955, %v2179
        %v2181 = vpop.f32.mrb[0].mxu0
        %2182 = vmatprep.mubr.f32.mxu0 0.0
        %2183 = vmatmul.mubr.f32.gmra.mrb[0].mxu0 %v903
        %v2184 = vpop.f32.mrb[0].mxu0
        %v2185 = vadd.f32 %v1960, %v2184
        %v2186 = vpop.f32.mrb[0].mxu0
        %2187 = vmatprep.mubr.f32.mxu0 0.0
        %2188 = vmatmul.mubr.f32.gmra.mrb[0].mxu0 %v912
        %v2189 = vpop.f32.mrb[0].mxu0
        %v2190 = vadd.f32 %v1965, %v2189
        %v2191 = vpop.f32.mrb[0].mxu0
        %2192 = vmatprep.mubr.f32.mxu0 0.0
        %2193 = vmatmul.mubr.f32.gmra.mrb[0].mxu0 %v921
        %v2194 = vpop.f32.mrb[0].mxu0
        %v2195 = vadd.f32 %v1970, %v2194
        %v2196 = vpop.f32.mrb[0].mxu0
        %2197 = vdwg.mxu0
        %v2198 = vmax.f32 %v2040, 0.0
        %v2199 = vmax.f32 %v2045, 0.0
        %v2200 = vmax.f32 %v2050, 0.0
        %v2201 = vmax.f32 %v2055, 0.0
        %v2202 = vmax.f32 %v2060, 0.0
        %v2203 = vmax.f32 %v2065, 0.0
        %v2204 = vmax.f32 %v2070, 0.0
        %v2205 = vmax.f32 %v2075, 0.0
        %v2206 = vmax.f32 %v2080, 0.0
        %v2207 = vmax.f32 %v2085, 0.0
        %v2208 = vmax.f32 %v2090, 0.0
        %v2209 = vmax.f32 %v2095, 0.0
        %v2210 = vmax.f32 %v2100, 0.0
        %v2211 = vmax.f32 %v2105, 0.0
        %v2212 = vmax.f32 %v2110, 0.0
        %v2213 = vmax.f32 %v2115, 0.0
        %v2214 = vmax.f32 %v2120, 0.0
        %v2215 = vmax.f32 %v2125, 0.0
        %v2216 = vmax.f32 %v2130, 0.0
        %v2217 = vmax.f32 %v2135, 0.0
        %v2218 = vmax.f32 %v2140, 0.0
        %v2219 = vmax.f32 %v2145, 0.0
        %v2220 = vmax.f32 %v2150, 0.0
        %v2221 = vmax.f32 %v2155, 0.0
        %v2222 = vmax.f32 %v2160, 0.0
        %v2223 = vmax.f32 %v2165, 0.0
        %v2224 = vmax.f32 %v2170, 0.0
        %v2225 = vmax.f32 %v2175, 0.0
        %v2226 = vmax.f32 %v2180, 0.0
        %v2227 = vmax.f32 %v2185, 0.0
        %v2228 = vmax.f32 %v2190, 0.0
        %v2229 = vmax.f32 %v2195, 0.0
        %2230 = vst [vmem:[#allocation3] sm:$0xff] 0.0
        %2231 = vst [vmem:[#allocation3 + $0x8] sm:$0xff] 0.0
        %2232 = vst [vmem:[#allocation3 + $0x10] sm:$0x3] 0.0
        %s2233 = scalar_lea.vmem [#allocation3], 408
        %2234 = vst [vmem:[%s2233] sm:$0xff] 0.0
        %2235 = vst [vmem:[%s2233 + $0x8] sm:$0xff] 0.0
        %2236 = vst [vmem:[%s2233 + $0x10] sm:$0x3] 0.0
        %2237 = vst [vmem:[#allocation3] sm:$0x1] 0.0
        %2238 = vst [vmem:[#allocation3 + $0x18] sm:$0x1] 0.0
        %2239 = vst [vmem:[#allocation3 + $0x30] sm:$0x1] 0.0
        %2240 = vst [vmem:[#allocation3 + $0x48] sm:$0x1] 0.0
        %2241 = vst [vmem:[#allocation3 + $0x60] sm:$0x1] 0.0
        %2242 = vst [vmem:[#allocation3 + $0x78] sm:$0x1] 0.0
        %2243 = vst [vmem:[#allocation3 + $0x90] sm:$0x1] 0.0
        %2244 = vst [vmem:[#allocation3 + $0xa8] sm:$0x1] 0.0
        %2245 = vst [vmem:[#allocation3 + $0xc0] sm:$0x1] 0.0
        %2246 = vst [vmem:[#allocation3 + $0xd8] sm:$0x1] 0.0
        %2247 = vst [vmem:[#allocation3 + $0xf0] sm:$0x1] 0.0
        %2248 = vst [vmem:[#allocation3 + $0x108] sm:$0x1] 0.0
        %2249 = vst [vmem:[#allocation3 + $0x120] sm:$0x1] 0.0
        %2250 = vst [vmem:[#allocation3 + $0x138] sm:$0x1] 0.0
        %2251 = vst [vmem:[#allocation3 + $0x150] sm:$0x1] 0.0
        %2252 = vst [vmem:[#allocation3 + $0x168] sm:$0x1] 0.0
        %2253 = vst [vmem:[#allocation3 + $0x180] sm:$0x1] 0.0
        %2254 = vst [vmem:[#allocation3 + $0x198] sm:$0x1] 0.0
        %2255 = vst [vmem:[#allocation3 + $0x11] sm:$0x1] 0.0
        %2256 = vst [vmem:[#allocation3 + $0x29] sm:$0x1] 0.0
        %2257 = vst [vmem:[#allocation3 + $0x41] sm:$0x1] 0.0
        %2258 = vst [vmem:[#allocation3 + $0x59] sm:$0x1] 0.0
        %2259 = vst [vmem:[#allocation3 + $0x71] sm:$0x1] 0.0
        %2260 = vst [vmem:[#allocation3 + $0x89] sm:$0x1] 0.0
        %2261 = vst [vmem:[#allocation3 + $0xa1] sm:$0x1] 0.0
        %2262 = vst [vmem:[#allocation3 + $0xb9] sm:$0x1] 0.0
        %2263 = vst [vmem:[#allocation3 + $0xd1] sm:$0x1] 0.0
        %2264 = vst [vmem:[#allocation3 + $0xe9] sm:$0x1] 0.0
        %2265 = vst [vmem:[#allocation3 + $0x101] sm:$0x1] 0.0
        %2266 = vst [vmem:[#allocation3 + $0x119] sm:$0x1] 0.0
        %2267 = vst [vmem:[#allocation3 + $0x131] sm:$0x1] 0.0
        %2268 = vst [vmem:[#allocation3 + $0x149] sm:$0x1] 0.0
        %2269 = vst [vmem:[#allocation3 + $0x161] sm:$0x1] 0.0
        %2270 = vst [vmem:[#allocation3 + $0x179] sm:$0x1] 0.0
        %2271 = vst [vmem:[#allocation3 + $0x191] sm:$0x1] 0.0
        %2272 = vst [vmem:[#allocation3 + $0x1a9] sm:$0x1] 0.0
        %s2273 = scalar_lea.vmem [#allocation3], 24
        %2274 = vst [vmem:[%s2273 + $0x1] sm:$0xff] %v2198
        %2275 = vst [vmem:[%s2273 + $0x9] sm:$0xff] %v2199
        %2276 = vst [vmem:[%s2273 + $0x19] sm:$0xff] %v2200
        %2277 = vst [vmem:[%s2273 + $0x21] sm:$0xff] %v2201
        %2278 = vst [vmem:[%s2273 + $0x31] sm:$0xff] %v2202
        %2279 = vst [vmem:[%s2273 + $0x39] sm:$0xff] %v2203
        %2280 = vst [vmem:[%s2273 + $0x49] sm:$0xff] %v2204
        %2281 = vst [vmem:[%s2273 + $0x51] sm:$0xff] %v2205
        %2282 = vst [vmem:[%s2273 + $0x61] sm:$0xff] %v2206
        %2283 = vst [vmem:[%s2273 + $0x69] sm:$0xff] %v2207
        %2284 = vst [vmem:[%s2273 + $0x79] sm:$0xff] %v2208
        %2285 = vst [vmem:[%s2273 + $0x81] sm:$0xff] %v2209
        %2286 = vst [vmem:[%s2273 + $0x91] sm:$0xff] %v2210
        %2287 = vst [vmem:[%s2273 + $0x99] sm:$0xff] %v2211
        %2288 = vst [vmem:[%s2273 + $0xa9] sm:$0xff] %v2212
        %2289 = vst [vmem:[%s2273 + $0xb1] sm:$0xff] %v2213
        %2290 = vst [vmem:[%s2273 + $0xc1] sm:$0xff] %v2214
        %2291 = vst [vmem:[%s2273 + $0xc9] sm:$0xff] %v2215
        %2292 = vst [vmem:[%s2273 + $0xd9] sm:$0xff] %v2216
        %2293 = vst [vmem:[%s2273 + $0xe1] sm:$0xff] %v2217
        %2294 = vst [vmem:[%s2273 + $0xf1] sm:$0xff] %v2218
        %2295 = vst [vmem:[%s2273 + $0xf9] sm:$0xff] %v2219
        %2296 = vst [vmem:[%s2273 + $0x109] sm:$0xff] %v2220
        %2297 = vst [vmem:[%s2273 + $0x111] sm:$0xff] %v2221
        %2298 = vst [vmem:[%s2273 + $0x121] sm:$0xff] %v2222
        %2299 = vst [vmem:[%s2273 + $0x129] sm:$0xff] %v2223
        %2300 = vst [vmem:[%s2273 + $0x139] sm:$0xff] %v2224
        %2301 = vst [vmem:[%s2273 + $0x141] sm:$0xff] %v2225
        %2302 = vst [vmem:[%s2273 + $0x151] sm:$0xff] %v2226
        %2303 = vst [vmem:[%s2273 + $0x159] sm:$0xff] %v2227
        %2304 = vst [vmem:[%s2273 + $0x169] sm:$0xff] %v2228
        %2305 = vst [vmem:[%s2273 + $0x171] sm:$0xff] %v2229
        %v2306 = vld [vmem:[#allocation3] sm:$0xff]
        %v2307 = vld [vmem:[#allocation3 + $0x8] sm:$0xff]
        %v2308 = vld [vmem:[#allocation3 + $0x18] sm:$0xff]
        %v2309 = vld [vmem:[#allocation3 + $0x20] sm:$0xff]
        %v2310 = vld [vmem:[#allocation3 + $0x30] sm:$0xff]
        %v2311 = vld [vmem:[#allocation3 + $0x38] sm:$0xff]
        %v2312 = vld [vmem:[#allocation3 + $0x48] sm:$0xff]
        %v2313 = vld [vmem:[#allocation3 + $0x50] sm:$0xff]
        %v2314 = vld [vmem:[#allocation3 + $0x60] sm:$0xff]
        %v2315 = vld [vmem:[#allocation3 + $0x68] sm:$0xff]
        %v2316 = vld [vmem:[#allocation3 + $0x78] sm:$0xff]
        %v2317 = vld [vmem:[#allocation3 + $0x80] sm:$0xff]
        %v2318 = vld [vmem:[#allocation3 + $0x90] sm:$0xff]
        %v2319 = vld [vmem:[#allocation3 + $0x98] sm:$0xff]
        %v2320 = vld [vmem:[#allocation3 + $0xa8] sm:$0xff]
        %v2321 = vld [vmem:[#allocation3 + $0xb0] sm:$0xff]
        %v2322 = vld [vmem:[#allocation3 + $0xc0] sm:$0xff]
        %v2323 = vld [vmem:[#allocation3 + $0xc8] sm:$0xff]
        %v2324 = vld [vmem:[#allocation3 + $0xd8] sm:$0xff]
        %v2325 = vld [vmem:[#allocation3 + $0xe0] sm:$0xff]
        %v2326 = vld [vmem:[#allocation3 + $0xf0] sm:$0xff]
        %v2327 = vld [vmem:[#allocation3 + $0xf8] sm:$0xff]
        %v2328 = vld [vmem:[#allocation3 + $0x108] sm:$0xff]
        %v2329 = vld [vmem:[#allocation3 + $0x110] sm:$0xff]
        %v2330 = vld [vmem:[#allocation3 + $0x120] sm:$0xff]
        %v2331 = vld [vmem:[#allocation3 + $0x128] sm:$0xff]
        %v2332 = vld [vmem:[#allocation3 + $0x138] sm:$0xff]
        %v2333 = vld [vmem:[#allocation3 + $0x140] sm:$0xff]
        %v2334 = vld [vmem:[#allocation3 + $0x150] sm:$0xff]
        %v2335 = vld [vmem:[#allocation3 + $0x158] sm:$0xff]
        %v2336 = vld [vmem:[#allocation3 + $0x168] sm:$0xff]
        %v2337 = vld [vmem:[#allocation3 + $0x170] sm:$0xff]
        %v2338 = vld [vmem:[#allocation3 + $0x180] sm:$0xff]
        %v2339 = vld [vmem:[#allocation3 + $0x188] sm:$0xff]
        %v2340 = vld [vmem:[#allocation3 + $0x198] sm:$0xff]
        %v2341 = vld [vmem:[#allocation3 + $0x1a0] sm:$0xff]
        %2342 = vst [vmem:[#allocation2] sm:$0xff] %v2306
        %2343 = vst [vmem:[#allocation2 + $0x48] sm:$0xff] %v2307
        %2344 = vst [vmem:[#allocation2 + $0x90] sm:$0xff] %v2308
        %2345 = vst [vmem:[#allocation2 + $0xd8] sm:$0xff] %v2309
        %2346 = vst [vmem:[#allocation2 + $0x120] sm:$0xff] %v2310
        %2347 = vst [vmem:[#allocation2 + $0x168] sm:$0xff] %v2311
        %2348 = vst [vmem:[#allocation2 + $0x1b0] sm:$0xff] %v2312
        %2349 = vst [vmem:[#allocation2 + $0x1f8] sm:$0xff] %v2313
        %2350 = vst [vmem:[#allocation2 + $0x240] sm:$0xff] %v2314
        %2351 = vst [vmem:[#allocation2 + $0x288] sm:$0xff] %v2315
        %2352 = vst [vmem:[#allocation2 + $0x2d0] sm:$0xff] %v2316
        %2353 = vst [vmem:[#allocation2 + $0x318] sm:$0xff] %v2317
        %2354 = vst [vmem:[#allocation2 + $0x360] sm:$0xff] %v2318
        %2355 = vst [vmem:[#allocation2 + $0x3a8] sm:$0xff] %v2319
        %2356 = vst [vmem:[#allocation2 + $0x3f0] sm:$0xff] %v2320
        %2357 = vst [vmem:[#allocation2 + $0x438] sm:$0xff] %v2321
        %2358 = vst [vmem:[#allocation2 + $0x480] sm:$0xff] %v2322
        %2359 = vst [vmem:[#allocation2 + $0x4c8] sm:$0xff] %v2323
        %2360 = vst [vmem:[#allocation2 + $0x510] sm:$0xff] %v2324
        %2361 = vst [vmem:[#allocation2 + $0x558] sm:$0xff] %v2325
        %2362 = vst [vmem:[#allocation2 + $0x5a0] sm:$0xff] %v2326
        %2363 = vst [vmem:[#allocation2 + $0x5e8] sm:$0xff] %v2327
        %2364 = vst [vmem:[#allocation2 + $0x630] sm:$0xff] %v2328
        %2365 = vst [vmem:[#allocation2 + $0x678] sm:$0xff] %v2329
        %2366 = vst [vmem:[#allocation2 + $0x6c0] sm:$0xff] %v2330
        %2367 = vst [vmem:[#allocation2 + $0x708] sm:$0xff] %v2331
        %2368 = vst [vmem:[#allocation2 + $0x750] sm:$0xff] %v2332
        %2369 = vst [vmem:[#allocation2 + $0x798] sm:$0xff] %v2333
        %2370 = vst [vmem:[#allocation2 + $0x7e0] sm:$0xff] %v2334
        %2371 = vst [vmem:[#allocation2 + $0x828] sm:$0xff] %v2335
        %2372 = vst [vmem:[#allocation2 + $0x870] sm:$0xff] %v2336
        %2373 = vst [vmem:[#allocation2 + $0x8b8] sm:$0xff] %v2337
        %2374 = vst [vmem:[#allocation2 + $0x18] sm:$0xff] %v2308
        %2375 = vst [vmem:[#allocation2 + $0x60] sm:$0xff] %v2309
        %2376 = vst [vmem:[#allocation2 + $0xa8] sm:$0xff] %v2310
        %2377 = vst [vmem:[#allocation2 + $0xf0] sm:$0xff] %v2311
        %2378 = vst [vmem:[#allocation2 + $0x138] sm:$0xff] %v2312
        %2379 = vst [vmem:[#allocation2 + $0x180] sm:$0xff] %v2313
        %2380 = vst [vmem:[#allocation2 + $0x1c8] sm:$0xff] %v2314
        %2381 = vst [vmem:[#allocation2 + $0x210] sm:$0xff] %v2315
        %2382 = vst [vmem:[#allocation2 + $0x258] sm:$0xff] %v2316
        %2383 = vst [vmem:[#allocation2 + $0x2a0] sm:$0xff] %v2317
        %2384 = vst [vmem:[#allocation2 + $0x2e8] sm:$0xff] %v2318
        %2385 = vst [vmem:[#allocation2 + $0x330] sm:$0xff] %v2319
        %2386 = vst [vmem:[#allocation2 + $0x378] sm:$0xff] %v2320
        %2387 = vst [vmem:[#allocation2 + $0x3c0] sm:$0xff] %v2321
        %2388 = vst [vmem:[#allocation2 + $0x408] sm:$0xff] %v2322
        %2389 = vst [vmem:[#allocation2 + $0x450] sm:$0xff] %v2323
        %2390 = vst [vmem:[#allocation2 + $0x498] sm:$0xff] %v2324
        %2391 = vst [vmem:[#allocation2 + $0x4e0] sm:$0xff] %v2325
        %2392 = vst [vmem:[#allocation2 + $0x528] sm:$0xff] %v2326
        %2393 = vst [vmem:[#allocation2 + $0x570] sm:$0xff] %v2327
        %2394 = vst [vmem:[#allocation2 + $0x5b8] sm:$0xff] %v2328
        %2395 = vst [vmem:[#allocation2 + $0x600] sm:$0xff] %v2329
        %2396 = vst [vmem:[#allocation2 + $0x648] sm:$0xff] %v2330
        %2397 = vst [vmem:[#allocation2 + $0x690] sm:$0xff] %v2331
        %2398 = vst [vmem:[#allocation2 + $0x6d8] sm:$0xff] %v2332
        %2399 = vst [vmem:[#allocation2 + $0x720] sm:$0xff] %v2333
        %2400 = vst [vmem:[#allocation2 + $0x768] sm:$0xff] %v2334
        %2401 = vst [vmem:[#allocation2 + $0x7b0] sm:$0xff] %v2335
        %2402 = vst [vmem:[#allocation2 + $0x7f8] sm:$0xff] %v2336
        %2403 = vst [vmem:[#allocation2 + $0x840] sm:$0xff] %v2337
        %2404 = vst [vmem:[#allocation2 + $0x888] sm:$0xff] %v2338
        %2405 = vst [vmem:[#allocation2 + $0x8d0] sm:$0xff] %v2339
        %2406 = vst [vmem:[#allocation2 + $0x30] sm:$0xff] %v2310
        %2407 = vst [vmem:[#allocation2 + $0x78] sm:$0xff] %v2311
        %2408 = vst [vmem:[#allocation2 + $0xc0] sm:$0xff] %v2312
        %2409 = vst [vmem:[#allocation2 + $0x108] sm:$0xff] %v2313
        %2410 = vst [vmem:[#allocation2 + $0x150] sm:$0xff] %v2314
        %2411 = vst [vmem:[#allocation2 + $0x198] sm:$0xff] %v2315
        %2412 = vst [vmem:[#allocation2 + $0x1e0] sm:$0xff] %v2316
        %2413 = vst [vmem:[#allocation2 + $0x228] sm:$0xff] %v2317
        %2414 = vst [vmem:[#allocation2 + $0x270] sm:$0xff] %v2318
        %2415 = vst [vmem:[#allocation2 + $0x2b8] sm:$0xff] %v2319
        %2416 = vst [vmem:[#allocation2 + $0x300] sm:$0xff] %v2320
        %2417 = vst [vmem:[#allocation2 + $0x348] sm:$0xff] %v2321
        %2418 = vst [vmem:[#allocation2 + $0x390] sm:$0xff] %v2322
        %2419 = vst [vmem:[#allocation2 + $0x3d8] sm:$0xff] %v2323
        %2420 = vst [vmem:[#allocation2 + $0x420] sm:$0xff] %v2324
        %2421 = vst [vmem:[#allocation2 + $0x468] sm:$0xff] %v2325
        %2422 = vst [vmem:[#allocation2 + $0x4b0] sm:$0xff] %v2326
        %2423 = vst [vmem:[#allocation2 + $0x4f8] sm:$0xff] %v2327
        %2424 = vst [vmem:[#allocation2 + $0x540] sm:$0xff] %v2328
        %2425 = vst [vmem:[#allocation2 + $0x588] sm:$0xff] %v2329
        %2426 = vst [vmem:[#allocation2 + $0x5d0] sm:$0xff] %v2330
        %2427 = vst [vmem:[#allocation2 + $0x618] sm:$0xff] %v2331
        %2428 = vst [vmem:[#allocation2 + $0x660] sm:$0xff] %v2332
        %2429 = vst [vmem:[#allocation2 + $0x6a8] sm:$0xff] %v2333
        %2430 = vst [vmem:[#allocation2 + $0x6f0] sm:$0xff] %v2334
        %2431 = vst [vmem:[#allocation2 + $0x738] sm:$0xff] %v2335
        %2432 = vst [vmem:[#allocation2 + $0x780] sm:$0xff] %v2336
        %2433 = vst [vmem:[#allocation2 + $0x7c8] sm:$0xff] %v2337
        %2434 = vst [vmem:[#allocation2 + $0x810] sm:$0xff] %v2338
        %2435 = vst [vmem:[#allocation2 + $0x858] sm:$0xff] %v2339
        %2436 = vst [vmem:[#allocation2 + $0x8a0] sm:$0xff] %v2340
        %2437 = vst [vmem:[#allocation2 + $0x8e8] sm:$0xff] %v2341
        %v2438 = vld [vmem:[#allocation3 + $0x1] sm:$0xff]
        %v2439 = vld [vmem:[#allocation3 + $0x9] sm:$0xff]
        %v2440 = vld [vmem:[#allocation3 + $0x19] sm:$0xff]
        %v2441 = vld [vmem:[#allocation3 + $0x21] sm:$0xff]
        %v2442 = vld [vmem:[#allocation3 + $0x31] sm:$0xff]
        %v2443 = vld [vmem:[#allocation3 + $0x39] sm:$0xff]
        %v2444 = vld [vmem:[#allocation3 + $0x49] sm:$0xff]
        %v2445 = vld [vmem:[#allocation3 + $0x51] sm:$0xff]
        %v2446 = vld [vmem:[#allocation3 + $0x61] sm:$0xff]
        %v2447 = vld [vmem:[#allocation3 + $0x69] sm:$0xff]
        %v2448 = vld [vmem:[#allocation3 + $0x79] sm:$0xff]
        %v2449 = vld [vmem:[#allocation3 + $0x81] sm:$0xff]
        %v2450 = vld [vmem:[#allocation3 + $0x91] sm:$0xff]
        %v2451 = vld [vmem:[#allocation3 + $0x99] sm:$0xff]
        %v2452 = vld [vmem:[#allocation3 + $0xa9] sm:$0xff]
        %v2453 = vld [vmem:[#allocation3 + $0xb1] sm:$0xff]
        %v2454 = vld [vmem:[#allocation3 + $0xc1] sm:$0xff]
        %v2455 = vld [vmem:[#allocation3 + $0xc9] sm:$0xff]
        %v2456 = vld [vmem:[#allocation3 + $0xd9] sm:$0xff]
        %v2457 = vld [vmem:[#allocation3 + $0xe1] sm:$0xff]
        %v2458 = vld [vmem:[#allocation3 + $0xf1] sm:$0xff]
        %v2459 = vld [vmem:[#allocation3 + $0xf9] sm:$0xff]
        %v2460 = vld [vmem:[#allocation3 + $0x109] sm:$0xff]
        %v2461 = vld [vmem:[#allocation3 + $0x111] sm:$0xff]
        %v2462 = vld [vmem:[#allocation3 + $0x121] sm:$0xff]
        %v2463 = vld [vmem:[#allocation3 + $0x129] sm:$0xff]
        %v2464 = vld [vmem:[#allocation3 + $0x139] sm:$0xff]
        %v2465 = vld [vmem:[#allocation3 + $0x141] sm:$0xff]
        %v2466 = vld [vmem:[#allocation3 + $0x151] sm:$0xff]
        %v2467 = vld [vmem:[#allocation3 + $0x159] sm:$0xff]
        %v2468 = vld [vmem:[#allocation3 + $0x169] sm:$0xff]
        %v2469 = vld [vmem:[#allocation3 + $0x171] sm:$0xff]
        %v2470 = vld [vmem:[#allocation3 + $0x181] sm:$0xff]
        %v2471 = vld [vmem:[#allocation3 + $0x189] sm:$0xff]
        %v2472 = vld [vmem:[#allocation3 + $0x199] sm:$0xff]
        %v2473 = vld [vmem:[#allocation3 + $0x1a1] sm:$0xff]
        %2474 = vst [vmem:[#allocation2 + $0x8] sm:$0xff] %v2438
        %2475 = vst [vmem:[#allocation2 + $0x50] sm:$0xff] %v2439
        %2476 = vst [vmem:[#allocation2 + $0x98] sm:$0xff] %v2440
        %2477 = vst [vmem:[#allocation2 + $0xe0] sm:$0xff] %v2441
        %2478 = vst [vmem:[#allocation2 + $0x128] sm:$0xff] %v2442
        %2479 = vst [vmem:[#allocation2 + $0x170] sm:$0xff] %v2443
        %2480 = vst [vmem:[#allocation2 + $0x1b8] sm:$0xff] %v2444
        %2481 = vst [vmem:[#allocation2 + $0x200] sm:$0xff] %v2445
        %2482 = vst [vmem:[#allocation2 + $0x248] sm:$0xff] %v2446
        %2483 = vst [vmem:[#allocation2 + $0x290] sm:$0xff] %v2447
        %2484 = vst [vmem:[#allocation2 + $0x2d8] sm:$0xff] %v2448
        %2485 = vst [vmem:[#allocation2 + $0x320] sm:$0xff] %v2449
        %2486 = vst [vmem:[#allocation2 + $0x368] sm:$0xff] %v2450
        %2487 = vst [vmem:[#allocation2 + $0x3b0] sm:$0xff] %v2451
        %2488 = vst [vmem:[#allocation2 + $0x3f8] sm:$0xff] %v2452
        %2489 = vst [vmem:[#allocation2 + $0x440] sm:$0xff] %v2453
        %2490 = vst [vmem:[#allocation2 + $0x488] sm:$0xff] %v2454
        %2491 = vst [vmem:[#allocation2 + $0x4d0] sm:$0xff] %v2455
        %2492 = vst [vmem:[#allocation2 + $0x518] sm:$0xff] %v2456
        %2493 = vst [vmem:[#allocation2 + $0x560] sm:$0xff] %v2457
        %2494 = vst [vmem:[#allocation2 + $0x5a8] sm:$0xff] %v2458
        %2495 = vst [vmem:[#allocation2 + $0x5f0] sm:$0xff] %v2459
        %2496 = vst [vmem:[#allocation2 + $0x638] sm:$0xff] %v2460
        %2497 = vst [vmem:[#allocation2 + $0x680] sm:$0xff] %v2461
        %2498 = vst [vmem:[#allocation2 + $0x6c8] sm:$0xff] %v2462
        %2499 = vst [vmem:[#allocation2 + $0x710] sm:$0xff] %v2463
        %2500 = vst [vmem:[#allocation2 + $0x758] sm:$0xff] %v2464
        %2501 = vst [vmem:[#allocation2 + $0x7a0] sm:$0xff] %v2465
        %2502 = vst [vmem:[#allocation2 + $0x7e8] sm:$0xff] %v2466
        %2503 = vst [vmem:[#allocation2 + $0x830] sm:$0xff] %v2467
        %2504 = vst [vmem:[#allocation2 + $0x878] sm:$0xff] %v2468
        %2505 = vst [vmem:[#allocation2 + $0x8c0] sm:$0xff] %v2469
        %2506 = vst [vmem:[#allocation2 + $0x20] sm:$0xff] %v2440
        %2507 = vst [vmem:[#allocation2 + $0x68] sm:$0xff] %v2441
        %2508 = vst [vmem:[#allocation2 + $0xb0] sm:$0xff] %v2442
        %2509 = vst [vmem:[#allocation2 + $0xf8] sm:$0xff] %v2443
        %2510 = vst [vmem:[#allocation2 + $0x140] sm:$0xff] %v2444
        %2511 = vst [vmem:[#allocation2 + $0x188] sm:$0xff] %v2445
        %2512 = vst [vmem:[#allocation2 + $0x1d0] sm:$0xff] %v2446
        %2513 = vst [vmem:[#allocation2 + $0x218] sm:$0xff] %v2447
        %2514 = vst [vmem:[#allocation2 + $0x260] sm:$0xff] %v2448
        %2515 = vst [vmem:[#allocation2 + $0x2a8] sm:$0xff] %v2449
        %2516 = vst [vmem:[#allocation2 + $0x2f0] sm:$0xff] %v2450
        %2517 = vst [vmem:[#allocation2 + $0x338] sm:$0xff] %v2451
        %2518 = vst [vmem:[#allocation2 + $0x380] sm:$0xff] %v2452
        %2519 = vst [vmem:[#allocation2 + $0x3c8] sm:$0xff] %v2453
        %2520 = vst [vmem:[#allocation2 + $0x410] sm:$0xff] %v2454
        %2521 = vst [vmem:[#allocation2 + $0x458] sm:$0xff] %v2455
        %2522 = vst [vmem:[#allocation2 + $0x4a0] sm:$0xff] %v2456
        %2523 = vst [vmem:[#allocation2 + $0x4e8] sm:$0xff] %v2457
        %2524 = vst [vmem:[#allocation2 + $0x530] sm:$0xff] %v2458
        %2525 = vst [vmem:[#allocation2 + $0x578] sm:$0xff] %v2459
        %2526 = vst [vmem:[#allocation2 + $0x5c0] sm:$0xff] %v2460
        %2527 = vst [vmem:[#allocation2 + $0x608] sm:$0xff] %v2461
        %2528 = vst [vmem:[#allocation2 + $0x650] sm:$0xff] %v2462
        %2529 = vst [vmem:[#allocation2 + $0x698] sm:$0xff] %v2463
        %2530 = vst [vmem:[#allocation2 + $0x6e0] sm:$0xff] %v2464
        %2531 = vst [vmem:[#allocation2 + $0x728] sm:$0xff] %v2465
        %2532 = vst [vmem:[#allocation2 + $0x770] sm:$0xff] %v2466
        %2533 = vst [vmem:[#allocation2 + $0x7b8] sm:$0xff] %v2467
        %2534 = vst [vmem:[#allocation2 + $0x800] sm:$0xff] %v2468
        %2535 = vst [vmem:[#allocation2 + $0x848] sm:$0xff] %v2469
        %2536 = vst [vmem:[#allocation2 + $0x890] sm:$0xff] %v2470
        %2537 = vst [vmem:[#allocation2 + $0x8d8] sm:$0xff] %v2471
        %2538 = vst [vmem:[#allocation2 + $0x38] sm:$0xff] %v2442
        %2539 = vst [vmem:[#allocation2 + $0x80] sm:$0xff] %v2443
        %2540 = vst [vmem:[#allocation2 + $0xc8] sm:$0xff] %v2444
        %2541 = vst [vmem:[#allocation2 + $0x110] sm:$0xff] %v2445
        %2542 = vst [vmem:[#allocation2 + $0x158] sm:$0xff] %v2446
        %2543 = vst [vmem:[#allocation2 + $0x1a0] sm:$0xff] %v2447
        %2544 = vst [vmem:[#allocation2 + $0x1e8] sm:$0xff] %v2448
        %2545 = vst [vmem:[#allocation2 + $0x230] sm:$0xff] %v2449
        %2546 = vst [vmem:[#allocation2 + $0x278] sm:$0xff] %v2450
        %2547 = vst [vmem:[#allocation2 + $0x2c0] sm:$0xff] %v2451
        %2548 = vst [vmem:[#allocation2 + $0x308] sm:$0xff] %v2452
        %2549 = vst [vmem:[#allocation2 + $0x350] sm:$0xff] %v2453
        %2550 = vst [vmem:[#allocation2 + $0x398] sm:$0xff] %v2454
        %2551 = vst [vmem:[#allocation2 + $0x3e0] sm:$0xff] %v2455
        %2552 = vst [vmem:[#allocation2 + $0x428] sm:$0xff] %v2456
        %2553 = vst [vmem:[#allocation2 + $0x470] sm:$0xff] %v2457
        %2554 = vst [vmem:[#allocation2 + $0x4b8] sm:$0xff] %v2458
        %2555 = vst [vmem:[#allocation2 + $0x500] sm:$0xff] %v2459
        %2556 = vst [vmem:[#allocation2 + $0x548] sm:$0xff] %v2460
        %2557 = vst [vmem:[#allocation2 + $0x590] sm:$0xff] %v2461
        %2558 = vst [vmem:[#allocation2 + $0x5d8] sm:$0xff] %v2462
        %2559 = vst [vmem:[#allocation2 + $0x620] sm:$0xff] %v2463
        %2560 = vst [vmem:[#allocation2 + $0x668] sm:$0xff] %v2464
        %2561 = vst [vmem:[#allocation2 + $0x6b0] sm:$0xff] %v2465
        %2562 = vst [vmem:[#allocation2 + $0x6f8] sm:$0xff] %v2466
        %2563 = vst [vmem:[#allocation2 + $0x740] sm:$0xff] %v2467
        %2564 = vst [vmem:[#allocation2 + $0x788] sm:$0xff] %v2468
        %2565 = vst [vmem:[#allocation2 + $0x7d0] sm:$0xff] %v2469
        %2566 = vst [vmem:[#allocation2 + $0x818] sm:$0xff] %v2470
        %2567 = vst [vmem:[#allocation2 + $0x860] sm:$0xff] %v2471
        %2568 = vst [vmem:[#allocation2 + $0x8a8] sm:$0xff] %v2472
        %2569 = vst [vmem:[#allocation2 + $0x8f0] sm:$0xff] %v2473
        %v2570 = vld [vmem:[#allocation3 + $0x2] sm:$0xff]
        %v2571 = vld [vmem:[#allocation3 + $0xa] sm:$0xff]
        %v2572 = vld [vmem:[#allocation3 + $0x1a] sm:$0xff]
        %v2573 = vld [vmem:[#allocation3 + $0x22] sm:$0xff]
        %v2574 = vld [vmem:[#allocation3 + $0x32] sm:$0xff]
        %v2575 = vld [vmem:[#allocation3 + $0x3a] sm:$0xff]
        %v2576 = vld [vmem:[#allocation3 + $0x4a] sm:$0xff]
        %v2577 = vld [vmem:[#allocation3 + $0x52] sm:$0xff]
        %v2578 = vld [vmem:[#allocation3 + $0x62] sm:$0xff]
        %v2579 = vld [vmem:[#allocation3 + $0x6a] sm:$0xff]
        %v2580 = vld [vmem:[#allocation3 + $0x7a] sm:$0xff]
        %v2581 = vld [vmem:[#allocation3 + $0x82] sm:$0xff]
        %v2582 = vld [vmem:[#allocation3 + $0x92] sm:$0xff]
        %v2583 = vld [vmem:[#allocation3 + $0x9a] sm:$0xff]
        %v2584 = vld [vmem:[#allocation3 + $0xaa] sm:$0xff]
        %v2585 = vld [vmem:[#allocation3 + $0xb2] sm:$0xff]
        %v2586 = vld [vmem:[#allocation3 + $0xc2] sm:$0xff]
        %v2587 = vld [vmem:[#allocation3 + $0xca] sm:$0xff]
        %v2588 = vld [vmem:[#allocation3 + $0xda] sm:$0xff]
        %v2589 = vld [vmem:[#allocation3 + $0xe2] sm:$0xff]
        %v2590 = vld [vmem:[#allocation3 + $0xf2] sm:$0xff]
        %v2591 = vld [vmem:[#allocation3 + $0xfa] sm:$0xff]
        %v2592 = vld [vmem:[#allocation3 + $0x10a] sm:$0xff]
        %v2593 = vld [vmem:[#allocation3 + $0x112] sm:$0xff]
        %v2594 = vld [vmem:[#allocation3 + $0x122] sm:$0xff]
        %v2595 = vld [vmem:[#allocation3 + $0x12a] sm:$0xff]
        %v2596 = vld [vmem:[#allocation3 + $0x13a] sm:$0xff]
        %v2597 = vld [vmem:[#allocation3 + $0x142] sm:$0xff]
        %v2598 = vld [vmem:[#allocation3 + $0x152] sm:$0xff]
        %v2599 = vld [vmem:[#allocation3 + $0x15a] sm:$0xff]
        %v2600 = vld [vmem:[#allocation3 + $0x16a] sm:$0xff]
        %v2601 = vld [vmem:[#allocation3 + $0x172] sm:$0xff]
        %v2602 = vld [vmem:[#allocation3 + $0x182] sm:$0xff]
        %v2603 = vld [vmem:[#allocation3 + $0x18a] sm:$0xff]
        %v2604 = vld [vmem:[#allocation3 + $0x19a] sm:$0xff]
        %v2605 = vld [vmem:[#allocation3 + $0x1a2] sm:$0xff]
        %2606 = vst [vmem:[#allocation2 + $0x10] sm:$0xff] %v2570
        %2607 = vst [vmem:[#allocation2 + $0x58] sm:$0xff] %v2571
        %2608 = vst [vmem:[#allocation2 + $0xa0] sm:$0xff] %v2572
        %2609 = vst [vmem:[#allocation2 + $0xe8] sm:$0xff] %v2573
        %2610 = vst [vmem:[#allocation2 + $0x130] sm:$0xff] %v2574
        %2611 = vst [vmem:[#allocation2 + $0x178] sm:$0xff] %v2575
        %2612 = vst [vmem:[#allocation2 + $0x1c0] sm:$0xff] %v2576
        %2613 = vst [vmem:[#allocation2 + $0x208] sm:$0xff] %v2577
        %2614 = vst [vmem:[#allocation2 + $0x250] sm:$0xff] %v2578
        %2615 = vst [vmem:[#allocation2 + $0x298] sm:$0xff] %v2579
        %2616 = vst [vmem:[#allocation2 + $0x2e0] sm:$0xff] %v2580
        %2617 = vst [vmem:[#allocation2 + $0x328] sm:$0xff] %v2581
        %2618 = vst [vmem:[#allocation2 + $0x370] sm:$0xff] %v2582
        %2619 = vst [vmem:[#allocation2 + $0x3b8] sm:$0xff] %v2583
        %2620 = vst [vmem:[#allocation2 + $0x400] sm:$0xff] %v2584
        %2621 = vst [vmem:[#allocation2 + $0x448] sm:$0xff] %v2585
        %2622 = vst [vmem:[#allocation2 + $0x490] sm:$0xff] %v2586
        %2623 = vst [vmem:[#allocation2 + $0x4d8] sm:$0xff] %v2587
        %2624 = vst [vmem:[#allocation2 + $0x520] sm:$0xff] %v2588
        %2625 = vst [vmem:[#allocation2 + $0x568] sm:$0xff] %v2589
        %2626 = vst [vmem:[#allocation2 + $0x5b0] sm:$0xff] %v2590
        %2627 = vst [vmem:[#allocation2 + $0x5f8] sm:$0xff] %v2591
        %2628 = vst [vmem:[#allocation2 + $0x640] sm:$0xff] %v2592
        %2629 = vst [vmem:[#allocation2 + $0x688] sm:$0xff] %v2593
        %2630 = vst [vmem:[#allocation2 + $0x6d0] sm:$0xff] %v2594
        %2631 = vst [vmem:[#allocation2 + $0x718] sm:$0xff] %v2595
        %2632 = vst [vmem:[#allocation2 + $0x760] sm:$0xff] %v2596
        %2633 = vst [vmem:[#allocation2 + $0x7a8] sm:$0xff] %v2597
        %2634 = vst [vmem:[#allocation2 + $0x7f0] sm:$0xff] %v2598
        %2635 = vst [vmem:[#allocation2 + $0x838] sm:$0xff] %v2599
        %2636 = vst [vmem:[#allocation2 + $0x880] sm:$0xff] %v2600
        %2637 = vst [vmem:[#allocation2 + $0x8c8] sm:$0xff] %v2601
        %2638 = vst [vmem:[#allocation2 + $0x28] sm:$0xff] %v2572
        %2639 = vst [vmem:[#allocation2 + $0x70] sm:$0xff] %v2573
        %2640 = vst [vmem:[#allocation2 + $0xb8] sm:$0xff] %v2574
        %2641 = vst [vmem:[#allocation2 + $0x100] sm:$0xff] %v2575
        %2642 = vst [vmem:[#allocation2 + $0x148] sm:$0xff] %v2576
        %2643 = vst [vmem:[#allocation2 + $0x190] sm:$0xff] %v2577
        %2644 = vst [vmem:[#allocation2 + $0x1d8] sm:$0xff] %v2578
        %2645 = vst [vmem:[#allocation2 + $0x220] sm:$0xff] %v2579
        %2646 = vst [vmem:[#allocation2 + $0x268] sm:$0xff] %v2580
        %2647 = vst [vmem:[#allocation2 + $0x2b0] sm:$0xff] %v2581
        %2648 = vst [vmem:[#allocation2 + $0x2f8] sm:$0xff] %v2582
        %2649 = vst [vmem:[#allocation2 + $0x340] sm:$0xff] %v2583
        %2650 = vst [vmem:[#allocation2 + $0x388] sm:$0xff] %v2584
        %2651 = vst [vmem:[#allocation2 + $0x3d0] sm:$0xff] %v2585
        %2652 = vst [vmem:[#allocation2 + $0x418] sm:$0xff] %v2586
        %2653 = vst [vmem:[#allocation2 + $0x460] sm:$0xff] %v2587
        %2654 = vst [vmem:[#allocation2 + $0x4a8] sm:$0xff] %v2588
        %2655 = vst [vmem:[#allocation2 + $0x4f0] sm:$0xff] %v2589
        %2656 = vst [vmem:[#allocation2 + $0x538] sm:$0xff] %v2590
        %2657 = vst [vmem:[#allocation2 + $0x580] sm:$0xff] %v2591
        %2658 = vst [vmem:[#allocation2 + $0x5c8] sm:$0xff] %v2592
        %2659 = vst [vmem:[#allocation2 + $0x610] sm:$0xff] %v2593
        %2660 = vst [vmem:[#allocation2 + $0x658] sm:$0xff] %v2594
        %2661 = vst [vmem:[#allocation2 + $0x6a0] sm:$0xff] %v2595
        %2662 = vst [vmem:[#allocation2 + $0x6e8] sm:$0xff] %v2596
        %2663 = vst [vmem:[#allocation2 + $0x730] sm:$0xff] %v2597
        %2664 = vst [vmem:[#allocation2 + $0x778] sm:$0xff] %v2598
        %2665 = vst [vmem:[#allocation2 + $0x7c0] sm:$0xff] %v2599
        %2666 = vst [vmem:[#allocation2 + $0x808] sm:$0xff] %v2600
        %2667 = vst [vmem:[#allocation2 + $0x850] sm:$0xff] %v2601
        %2668 = vst [vmem:[#allocation2 + $0x898] sm:$0xff] %v2602
        %2669 = vst [vmem:[#allocation2 + $0x8e0] sm:$0xff] %v2603
        %2670 = vst [vmem:[#allocation2 + $0x40] sm:$0xff] %v2574
        %2671 = vst [vmem:[#allocation2 + $0x88] sm:$0xff] %v2575
        %2672 = vst [vmem:[#allocation2 + $0xd0] sm:$0xff] %v2576
        %2673 = vst [vmem:[#allocation2 + $0x118] sm:$0xff] %v2577
        %2674 = vst [vmem:[#allocation2 + $0x160] sm:$0xff] %v2578
        %2675 = vst [vmem:[#allocation2 + $0x1a8] sm:$0xff] %v2579
        %2676 = vst [vmem:[#allocation2 + $0x1f0] sm:$0xff] %v2580
        %2677 = vst [vmem:[#allocation2 + $0x238] sm:$0xff] %v2581
        %2678 = vst [vmem:[#allocation2 + $0x280] sm:$0xff] %v2582
        %2679 = vst [vmem:[#allocation2 + $0x2c8] sm:$0xff] %v2583
        %2680 = vst [vmem:[#allocation2 + $0x310] sm:$0xff] %v2584
        %2681 = vst [vmem:[#allocation2 + $0x358] sm:$0xff] %v2585
        %2682 = vst [vmem:[#allocation2 + $0x3a0] sm:$0xff] %v2586
        %2683 = vst [vmem:[#allocation2 + $0x3e8] sm:$0xff] %v2587
        %2684 = vst [vmem:[#allocation2 + $0x430] sm:$0xff] %v2588
        %2685 = vst [vmem:[#allocation2 + $0x478] sm:$0xff] %v2589
        %2686 = vst [vmem:[#allocation2 + $0x4c0] sm:$0xff] %v2590
        %2687 = vst [vmem:[#allocation2 + $0x508] sm:$0xff] %v2591
        %2688 = vst [vmem:[#allocation2 + $0x550] sm:$0xff] %v2592
        %2689 = vst [vmem:[#allocation2 + $0x598] sm:$0xff] %v2593
        %2690 = vst [vmem:[#allocation2 + $0x5e0] sm:$0xff] %v2594
        %2691 = vst [vmem:[#allocation2 + $0x628] sm:$0xff] %v2595
        %2692 = vst [vmem:[#allocation2 + $0x670] sm:$0xff] %v2596
        %2693 = vst [vmem:[#allocation2 + $0x6b8] sm:$0xff] %v2597
        %2694 = vst [vmem:[#allocation2 + $0x700] sm:$0xff] %v2598
        %2695 = vst [vmem:[#allocation2 + $0x748] sm:$0xff] %v2599
        %2696 = vst [vmem:[#allocation2 + $0x790] sm:$0xff] %v2600
        %2697 = vst [vmem:[#allocation2 + $0x7d8] sm:$0xff] %v2601
        %2698 = vst [vmem:[#allocation2 + $0x820] sm:$0xff] %v2602
        %2699 = vst [vmem:[#allocation2 + $0x868] sm:$0xff] %v2603
        %2700 = vst [vmem:[#allocation2 + $0x8b0] sm:$0xff] %v2604
        %2701 = vst [vmem:[#allocation2 + $0x8f8] sm:$0xff] %v2605
        %v2702 = vld [vmem:[#allocation2] sm:$0xff]
        %v2703 = vld [vmem:[#allocation2 + $0x8] sm:$0xff]
        %v2704 = vld [vmem:[#allocation2 + $0x10] sm:$0xff]
        %v2705 = vld [vmem:[#allocation2 + $0x18] sm:$0xff]
        %v2706 = vld [vmem:[#allocation2 + $0x20] sm:$0xff]
        %v2707 = vld [vmem:[#allocation2 + $0x28] sm:$0xff]
        %v2708 = vld [vmem:[#allocation2 + $0x30] sm:$0xff]
        %v2709 = vld [vmem:[#allocation2 + $0x38] sm:$0xff]
        %v2710 = vld [vmem:[#allocation2 + $0x40] sm:$0xff]
        %v2711 = vld [vmem:[#allocation2 + $0x48] sm:$0xff]
        %v2712 = vld [vmem:[#allocation2 + $0x50] sm:$0xff]
        %v2713 = vld [vmem:[#allocation2 + $0x58] sm:$0xff]
        %v2714 = vld [vmem:[#allocation2 + $0x60] sm:$0xff]
        %v2715 = vld [vmem:[#allocation2 + $0x68] sm:$0xff]
        %v2716 = vld [vmem:[#allocation2 + $0x70] sm:$0xff]
        %v2717 = vld [vmem:[#allocation2 + $0x78] sm:$0xff]
        %v2718 = vld [vmem:[#allocation2 + $0x80] sm:$0xff]
        %v2719 = vld [vmem:[#allocation2 + $0x88] sm:$0xff]
        %v2720 = vld [vmem:[#allocation2 + $0x90] sm:$0xff]
        %v2721 = vld [vmem:[#allocation2 + $0x98] sm:$0xff]
        %v2722 = vld [vmem:[#allocation2 + $0xa0] sm:$0xff]
        %v2723 = vld [vmem:[#allocation2 + $0xa8] sm:$0xff]
        %v2724 = vld [vmem:[#allocation2 + $0xb0] sm:$0xff]
        %v2725 = vld [vmem:[#allocation2 + $0xb8] sm:$0xff]
        %v2726 = vld [vmem:[#allocation2 + $0xc0] sm:$0xff]
        %v2727 = vld [vmem:[#allocation2 + $0xc8] sm:$0xff]
        %v2728 = vld [vmem:[#allocation2 + $0xd0] sm:$0xff]
        %v2729 = vld [vmem:[#allocation2 + $0xd8] sm:$0xff]
        %v2730 = vld [vmem:[#allocation2 + $0xe0] sm:$0xff]
        %v2731 = vld [vmem:[#allocation2 + $0xe8] sm:$0xff]
        %v2732 = vld [vmem:[#allocation2 + $0xf0] sm:$0xff]
        %v2733 = vld [vmem:[#allocation2 + $0xf8] sm:$0xff]
        %v2734 = vld [vmem:[#allocation2 + $0x100] sm:$0xff]
        %v2735 = vld [vmem:[#allocation2 + $0x108] sm:$0xff]
        %v2736 = vld [vmem:[#allocation2 + $0x110] sm:$0xff]
        %v2737 = vld [vmem:[#allocation2 + $0x118] sm:$0xff]
        %v2738 = vld [vmem:[#allocation2 + $0x120] sm:$0xff]
        %v2739 = vld [vmem:[#allocation2 + $0x128] sm:$0xff]
        %v2740 = vld [vmem:[#allocation2 + $0x130] sm:$0xff]
        %v2741 = vld [vmem:[#allocation2 + $0x138] sm:$0xff]
        %v2742 = vld [vmem:[#allocation2 + $0x140] sm:$0xff]
        %v2743 = vld [vmem:[#allocation2 + $0x148] sm:$0xff]
        %v2744 = vld [vmem:[#allocation2 + $0x150] sm:$0xff]
        %v2745 = vld [vmem:[#allocation2 + $0x158] sm:$0xff]
        %v2746 = vld [vmem:[#allocation2 + $0x160] sm:$0xff]
        %v2747 = vld [vmem:[#allocation2 + $0x168] sm:$0xff]
        %v2748 = vld [vmem:[#allocation2 + $0x170] sm:$0xff]
        %v2749 = vld [vmem:[#allocation2 + $0x178] sm:$0xff]
        %v2750 = vld [vmem:[#allocation2 + $0x180] sm:$0xff]
        %v2751 = vld [vmem:[#allocation2 + $0x188] sm:$0xff]
        %v2752 = vld [vmem:[#allocation2 + $0x190] sm:$0xff]
        %v2753 = vld [vmem:[#allocation2 + $0x198] sm:$0xff]
        %v2754 = vld [vmem:[#allocation2 + $0x1a0] sm:$0xff]
        %v2755 = vld [vmem:[#allocation2 + $0x1a8] sm:$0xff]
        %v2756 = vld [vmem:[#allocation2 + $0x1b0] sm:$0xff]
        %v2757 = vld [vmem:[#allocation2 + $0x1b8] sm:$0xff]
        %v2758 = vld [vmem:[#allocation2 + $0x1c0] sm:$0xff]
        %v2759 = vld [vmem:[#allocation2 + $0x1c8] sm:$0xff]
        %v2760 = vld [vmem:[#allocation2 + $0x1d0] sm:$0xff]
        %v2761 = vld [vmem:[#allocation2 + $0x1d8] sm:$0xff]
        %v2762 = vld [vmem:[#allocation2 + $0x1e0] sm:$0xff]
        %v2763 = vld [vmem:[#allocation2 + $0x1e8] sm:$0xff]
        %v2764 = vld [vmem:[#allocation2 + $0x1f0] sm:$0xff]
        %v2765 = vld [vmem:[#allocation2 + $0x1f8] sm:$0xff]
        %v2766 = vld [vmem:[#allocation2 + $0x200] sm:$0xff]
        %v2767 = vld [vmem:[#allocation2 + $0x208] sm:$0xff]
        %v2768 = vld [vmem:[#allocation2 + $0x210] sm:$0xff]
        %v2769 = vld [vmem:[#allocation2 + $0x218] sm:$0xff]
        %v2770 = vld [vmem:[#allocation2 + $0x220] sm:$0xff]
        %v2771 = vld [vmem:[#allocation2 + $0x228] sm:$0xff]
        %v2772 = vld [vmem:[#allocation2 + $0x230] sm:$0xff]
        %v2773 = vld [vmem:[#allocation2 + $0x238] sm:$0xff]
        %v2774 = vld [vmem:[#allocation2 + $0x240] sm:$0xff]
        %v2775 = vld [vmem:[#allocation2 + $0x248] sm:$0xff]
        %v2776 = vld [vmem:[#allocation2 + $0x250] sm:$0xff]
        %v2777 = vld [vmem:[#allocation2 + $0x258] sm:$0xff]
        %v2778 = vld [vmem:[#allocation2 + $0x260] sm:$0xff]
        %v2779 = vld [vmem:[#allocation2 + $0x268] sm:$0xff]
        %v2780 = vld [vmem:[#allocation2 + $0x270] sm:$0xff]
        %v2781 = vld [vmem:[#allocation2 + $0x278] sm:$0xff]
        %v2782 = vld [vmem:[#allocation2 + $0x280] sm:$0xff]
        %v2783 = vld [vmem:[#allocation2 + $0x288] sm:$0xff]
        %v2784 = vld [vmem:[#allocation2 + $0x290] sm:$0xff]
        %v2785 = vld [vmem:[#allocation2 + $0x298] sm:$0xff]
        %v2786 = vld [vmem:[#allocation2 + $0x2a0] sm:$0xff]
        %v2787 = vld [vmem:[#allocation2 + $0x2a8] sm:$0xff]
        %v2788 = vld [vmem:[#allocation2 + $0x2b0] sm:$0xff]
        %v2789 = vld [vmem:[#allocation2 + $0x2b8] sm:$0xff]
        %v2790 = vld [vmem:[#allocation2 + $0x2c0] sm:$0xff]
        %v2791 = vld [vmem:[#allocation2 + $0x2c8] sm:$0xff]
        %v2792 = vld [vmem:[#allocation2 + $0x2d0] sm:$0xff]
        %v2793 = vld [vmem:[#allocation2 + $0x2d8] sm:$0xff]
        %v2794 = vld [vmem:[#allocation2 + $0x2e0] sm:$0xff]
        %v2795 = vld [vmem:[#allocation2 + $0x2e8] sm:$0xff]
        %v2796 = vld [vmem:[#allocation2 + $0x2f0] sm:$0xff]
        %v2797 = vld [vmem:[#allocation2 + $0x2f8] sm:$0xff]
        %v2798 = vld [vmem:[#allocation2 + $0x300] sm:$0xff]
        %v2799 = vld [vmem:[#allocation2 + $0x308] sm:$0xff]
        %v2800 = vld [vmem:[#allocation2 + $0x310] sm:$0xff]
        %v2801 = vld [vmem:[#allocation2 + $0x318] sm:$0xff]
        %v2802 = vld [vmem:[#allocation2 + $0x320] sm:$0xff]
        %v2803 = vld [vmem:[#allocation2 + $0x328] sm:$0xff]
        %v2804 = vld [vmem:[#allocation2 + $0x330] sm:$0xff]
        %v2805 = vld [vmem:[#allocation2 + $0x338] sm:$0xff]
        %v2806 = vld [vmem:[#allocation2 + $0x340] sm:$0xff]
        %v2807 = vld [vmem:[#allocation2 + $0x348] sm:$0xff]
        %v2808 = vld [vmem:[#allocation2 + $0x350] sm:$0xff]
        %v2809 = vld [vmem:[#allocation2 + $0x358] sm:$0xff]
        %v2810 = vld [vmem:[#allocation2 + $0x360] sm:$0xff]
        %v2811 = vld [vmem:[#allocation2 + $0x368] sm:$0xff]
        %v2812 = vld [vmem:[#allocation2 + $0x370] sm:$0xff]
        %v2813 = vld [vmem:[#allocation2 + $0x378] sm:$0xff]
        %v2814 = vld [vmem:[#allocation2 + $0x380] sm:$0xff]
        %v2815 = vld [vmem:[#allocation2 + $0x388] sm:$0xff]
        %v2816 = vld [vmem:[#allocation2 + $0x390] sm:$0xff]
        %v2817 = vld [vmem:[#allocation2 + $0x398] sm:$0xff]
        %v2818 = vld [vmem:[#allocation2 + $0x3a0] sm:$0xff]
        %v2819 = vld [vmem:[#allocation2 + $0x3a8] sm:$0xff]
        %v2820 = vld [vmem:[#allocation2 + $0x3b0] sm:$0xff]
        %v2821 = vld [vmem:[#allocation2 + $0x3b8] sm:$0xff]
        %v2822 = vld [vmem:[#allocation2 + $0x3c0] sm:$0xff]
        %v2823 = vld [vmem:[#allocation2 + $0x3c8] sm:$0xff]
        %v2824 = vld [vmem:[#allocation2 + $0x3d0] sm:$0xff]
        %v2825 = vld [vmem:[#allocation2 + $0x3d8] sm:$0xff]
        %v2826 = vld [vmem:[#allocation2 + $0x3e0] sm:$0xff]
        %v2827 = vld [vmem:[#allocation2 + $0x3e8] sm:$0xff]
        %v2828 = vld [vmem:[#allocation2 + $0x3f0] sm:$0xff]
        %v2829 = vld [vmem:[#allocation2 + $0x3f8] sm:$0xff]
        %v2830 = vld [vmem:[#allocation2 + $0x400] sm:$0xff]
        %v2831 = vld [vmem:[#allocation2 + $0x408] sm:$0xff]
        %v2832 = vld [vmem:[#allocation2 + $0x410] sm:$0xff]
        %v2833 = vld [vmem:[#allocation2 + $0x418] sm:$0xff]
        %v2834 = vld [vmem:[#allocation2 + $0x420] sm:$0xff]
        %v2835 = vld [vmem:[#allocation2 + $0x428] sm:$0xff]
        %v2836 = vld [vmem:[#allocation2 + $0x430] sm:$0xff]
        %v2837 = vld [vmem:[#allocation2 + $0x438] sm:$0xff]
        %v2838 = vld [vmem:[#allocation2 + $0x440] sm:$0xff]
        %v2839 = vld [vmem:[#allocation2 + $0x448] sm:$0xff]
        %v2840 = vld [vmem:[#allocation2 + $0x450] sm:$0xff]
        %v2841 = vld [vmem:[#allocation2 + $0x458] sm:$0xff]
        %v2842 = vld [vmem:[#allocation2 + $0x460] sm:$0xff]
        %v2843 = vld [vmem:[#allocation2 + $0x468] sm:$0xff]
        %v2844 = vld [vmem:[#allocation2 + $0x470] sm:$0xff]
        %v2845 = vld [vmem:[#allocation2 + $0x478] sm:$0xff]
        %v2846 = vld [vmem:[#allocation2 + $0x480] sm:$0xff]
        %v2847 = vld [vmem:[#allocation2 + $0x488] sm:$0xff]
        %v2848 = vld [vmem:[#allocation2 + $0x490] sm:$0xff]
        %v2849 = vld [vmem:[#allocation2 + $0x498] sm:$0xff]
        %v2850 = vld [vmem:[#allocation2 + $0x4a0] sm:$0xff]
        %v2851 = vld [vmem:[#allocation2 + $0x4a8] sm:$0xff]
        %v2852 = vld [vmem:[#allocation2 + $0x4b0] sm:$0xff]
        %v2853 = vld [vmem:[#allocation2 + $0x4b8] sm:$0xff]
        %v2854 = vld [vmem:[#allocation2 + $0x4c0] sm:$0xff]
        %v2855 = vld [vmem:[#allocation2 + $0x4c8] sm:$0xff]
        %v2856 = vld [vmem:[#allocation2 + $0x4d0] sm:$0xff]
        %v2857 = vld [vmem:[#allocation2 + $0x4d8] sm:$0xff]
        %v2858 = vld [vmem:[#allocation2 + $0x4e0] sm:$0xff]
        %v2859 = vld [vmem:[#allocation2 + $0x4e8] sm:$0xff]
        %v2860 = vld [vmem:[#allocation2 + $0x4f0] sm:$0xff]
        %v2861 = vld [vmem:[#allocation2 + $0x4f8] sm:$0xff]
        %v2862 = vld [vmem:[#allocation2 + $0x500] sm:$0xff]
        %v2863 = vld [vmem:[#allocation2 + $0x508] sm:$0xff]
        %v2864 = vld [vmem:[#allocation2 + $0x510] sm:$0xff]
        %v2865 = vld [vmem:[#allocation2 + $0x518] sm:$0xff]
        %v2866 = vld [vmem:[#allocation2 + $0x520] sm:$0xff]
        %v2867 = vld [vmem:[#allocation2 + $0x528] sm:$0xff]
        %v2868 = vld [vmem:[#allocation2 + $0x530] sm:$0xff]
        %v2869 = vld [vmem:[#allocation2 + $0x538] sm:$0xff]
        %v2870 = vld [vmem:[#allocation2 + $0x540] sm:$0xff]
        %v2871 = vld [vmem:[#allocation2 + $0x548] sm:$0xff]
        %v2872 = vld [vmem:[#allocation2 + $0x550] sm:$0xff]
        %v2873 = vld [vmem:[#allocation2 + $0x558] sm:$0xff]
        %v2874 = vld [vmem:[#allocation2 + $0x560] sm:$0xff]
        %v2875 = vld [vmem:[#allocation2 + $0x568] sm:$0xff]
        %v2876 = vld [vmem:[#allocation2 + $0x570] sm:$0xff]
        %v2877 = vld [vmem:[#allocation2 + $0x578] sm:$0xff]
        %v2878 = vld [vmem:[#allocation2 + $0x580] sm:$0xff]
        %v2879 = vld [vmem:[#allocation2 + $0x588] sm:$0xff]
        %v2880 = vld [vmem:[#allocation2 + $0x590] sm:$0xff]
        %v2881 = vld [vmem:[#allocation2 + $0x598] sm:$0xff]
        %v2882 = vld [vmem:[#allocation2 + $0x5a0] sm:$0xff]
        %v2883 = vld [vmem:[#allocation2 + $0x5a8] sm:$0xff]
        %v2884 = vld [vmem:[#allocation2 + $0x5b0] sm:$0xff]
        %v2885 = vld [vmem:[#allocation2 + $0x5b8] sm:$0xff]
        %v2886 = vld [vmem:[#allocation2 + $0x5c0] sm:$0xff]
        %v2887 = vld [vmem:[#allocation2 + $0x5c8] sm:$0xff]
        %v2888 = vld [vmem:[#allocation2 + $0x5d0] sm:$0xff]
        %v2889 = vld [vmem:[#allocation2 + $0x5d8] sm:$0xff]
        %v2890 = vld [vmem:[#allocation2 + $0x5e0] sm:$0xff]
        %v2891 = vld [vmem:[#allocation2 + $0x5e8] sm:$0xff]
        %v2892 = vld [vmem:[#allocation2 + $0x5f0] sm:$0xff]
        %v2893 = vld [vmem:[#allocation2 + $0x5f8] sm:$0xff]
        %v2894 = vld [vmem:[#allocation2 + $0x600] sm:$0xff]
        %v2895 = vld [vmem:[#allocation2 + $0x608] sm:$0xff]
        %v2896 = vld [vmem:[#allocation2 + $0x610] sm:$0xff]
        %v2897 = vld [vmem:[#allocation2 + $0x618] sm:$0xff]
        %v2898 = vld [vmem:[#allocation2 + $0x620] sm:$0xff]
        %v2899 = vld [vmem:[#allocation2 + $0x628] sm:$0xff]
        %v2900 = vld [vmem:[#allocation2 + $0x630] sm:$0xff]
        %v2901 = vld [vmem:[#allocation2 + $0x638] sm:$0xff]
        %v2902 = vld [vmem:[#allocation2 + $0x640] sm:$0xff]
        %v2903 = vld [vmem:[#allocation2 + $0x648] sm:$0xff]
        %v2904 = vld [vmem:[#allocation2 + $0x650] sm:$0xff]
        %v2905 = vld [vmem:[#allocation2 + $0x658] sm:$0xff]
        %v2906 = vld [vmem:[#allocation2 + $0x660] sm:$0xff]
        %v2907 = vld [vmem:[#allocation2 + $0x668] sm:$0xff]
        %v2908 = vld [vmem:[#allocation2 + $0x670] sm:$0xff]
        %v2909 = vld [vmem:[#allocation2 + $0x678] sm:$0xff]
        %v2910 = vld [vmem:[#allocation2 + $0x680] sm:$0xff]
        %v2911 = vld [vmem:[#allocation2 + $0x688] sm:$0xff]
        %v2912 = vld [vmem:[#allocation2 + $0x690] sm:$0xff]
        %v2913 = vld [vmem:[#allocation2 + $0x698] sm:$0xff]
        %v2914 = vld [vmem:[#allocation2 + $0x6a0] sm:$0xff]
        %v2915 = vld [vmem:[#allocation2 + $0x6a8] sm:$0xff]
        %v2916 = vld [vmem:[#allocation2 + $0x6b0] sm:$0xff]
        %v2917 = vld [vmem:[#allocation2 + $0x6b8] sm:$0xff]
        %v2918 = vld [vmem:[#allocation2 + $0x6c0] sm:$0xff]
        %v2919 = vld [vmem:[#allocation2 + $0x6c8] sm:$0xff]
        %v2920 = vld [vmem:[#allocation2 + $0x6d0] sm:$0xff]
        %v2921 = vld [vmem:[#allocation2 + $0x6d8] sm:$0xff]
        %v2922 = vld [vmem:[#allocation2 + $0x6e0] sm:$0xff]
        %v2923 = vld [vmem:[#allocation2 + $0x6e8] sm:$0xff]
        %v2924 = vld [vmem:[#allocation2 + $0x6f0] sm:$0xff]
        %v2925 = vld [vmem:[#allocation2 + $0x6f8] sm:$0xff]
        %v2926 = vld [vmem:[#allocation2 + $0x700] sm:$0xff]
        %v2927 = vld [vmem:[#allocation2 + $0x708] sm:$0xff]
        %v2928 = vld [vmem:[#allocation2 + $0x710] sm:$0xff]
        %v2929 = vld [vmem:[#allocation2 + $0x718] sm:$0xff]
        %v2930 = vld [vmem:[#allocation2 + $0x720] sm:$0xff]
        %v2931 = vld [vmem:[#allocation2 + $0x728] sm:$0xff]
        %v2932 = vld [vmem:[#allocation2 + $0x730] sm:$0xff]
        %v2933 = vld [vmem:[#allocation2 + $0x738] sm:$0xff]
        %v2934 = vld [vmem:[#allocation2 + $0x740] sm:$0xff]
        %v2935 = vld [vmem:[#allocation2 + $0x748] sm:$0xff]
        %v2936 = vld [vmem:[#allocation2 + $0x750] sm:$0xff]
        %v2937 = vld [vmem:[#allocation2 + $0x758] sm:$0xff]
        %v2938 = vld [vmem:[#allocation2 + $0x760] sm:$0xff]
        %v2939 = vld [vmem:[#allocation2 + $0x768] sm:$0xff]
        %v2940 = vld [vmem:[#allocation2 + $0x770] sm:$0xff]
        %v2941 = vld [vmem:[#allocation2 + $0x778] sm:$0xff]
        %v2942 = vld [vmem:[#allocation2 + $0x780] sm:$0xff]
        %v2943 = vld [vmem:[#allocation2 + $0x788] sm:$0xff]
        %v2944 = vld [vmem:[#allocation2 + $0x790] sm:$0xff]
        %v2945 = vld [vmem:[#allocation2 + $0x798] sm:$0xff]
        %v2946 = vld [vmem:[#allocation2 + $0x7a0] sm:$0xff]
        %v2947 = vld [vmem:[#allocation2 + $0x7a8] sm:$0xff]
        %v2948 = vld [vmem:[#allocation2 + $0x7b0] sm:$0xff]
        %v2949 = vld [vmem:[#allocation2 + $0x7b8] sm:$0xff]
        %v2950 = vld [vmem:[#allocation2 + $0x7c0] sm:$0xff]
        %v2951 = vld [vmem:[#allocation2 + $0x7c8] sm:$0xff]
        %v2952 = vld [vmem:[#allocation2 + $0x7d0] sm:$0xff]
        %v2953 = vld [vmem:[#allocation2 + $0x7d8] sm:$0xff]
        %v2954 = vld [vmem:[#allocation2 + $0x7e0] sm:$0xff]
        %v2955 = vld [vmem:[#allocation2 + $0x7e8] sm:$0xff]
        %v2956 = vld [vmem:[#allocation2 + $0x7f0] sm:$0xff]
        %v2957 = vld [vmem:[#allocation2 + $0x7f8] sm:$0xff]
        %v2958 = vld [vmem:[#allocation2 + $0x800] sm:$0xff]
        %v2959 = vld [vmem:[#allocation2 + $0x808] sm:$0xff]
        %v2960 = vld [vmem:[#allocation2 + $0x810] sm:$0xff]
        %v2961 = vld [vmem:[#allocation2 + $0x818] sm:$0xff]
        %v2962 = vld [vmem:[#allocation2 + $0x820] sm:$0xff]
        %v2963 = vld [vmem:[#allocation2 + $0x828] sm:$0xff]
        %v2964 = vld [vmem:[#allocation2 + $0x830] sm:$0xff]
        %v2965 = vld [vmem:[#allocation2 + $0x838] sm:$0xff]
        %v2966 = vld [vmem:[#allocation2 + $0x840] sm:$0xff]
        %v2967 = vld [vmem:[#allocation2 + $0x848] sm:$0xff]
        %v2968 = vld [vmem:[#allocation2 + $0x850] sm:$0xff]
        %v2969 = vld [vmem:[#allocation2 + $0x858] sm:$0xff]
        %v2970 = vld [vmem:[#allocation2 + $0x860] sm:$0xff]
        %v2971 = vld [vmem:[#allocation2 + $0x868] sm:$0xff]
        %v2972 = vld [vmem:[#allocation2 + $0x870] sm:$0xff]
        %v2973 = vld [vmem:[#allocation2 + $0x878] sm:$0xff]
        %v2974 = vld [vmem:[#allocation2 + $0x880] sm:$0xff]
        %v2975 = vld [vmem:[#allocation2 + $0x888] sm:$0xff]
        %v2976 = vld [vmem:[#allocation2 + $0x890] sm:$0xff]
        %v2977 = vld [vmem:[#allocation2 + $0x898] sm:$0xff]
        %v2978 = vld [vmem:[#allocation2 + $0x8a0] sm:$0xff]
        %v2979 = vld [vmem:[#allocation2 + $0x8a8] sm:$0xff]
        %v2980 = vld [vmem:[#allocation2 + $0x8b0] sm:$0xff]
        %v2981 = vld [vmem:[#allocation2 + $0x8b8] sm:$0xff]
        %v2982 = vld [vmem:[#allocation2 + $0x8c0] sm:$0xff]
        %v2983 = vld [vmem:[#allocation2 + $0x8c8] sm:$0xff]
        %v2984 = vld [vmem:[#allocation2 + $0x8d0] sm:$0xff]
        %v2985 = vld [vmem:[#allocation2 + $0x8d8] sm:$0xff]
        %v2986 = vld [vmem:[#allocation2 + $0x8e0] sm:$0xff]
        %v2987 = vld [vmem:[#allocation2 + $0x8e8] sm:$0xff]
        %v2988 = vld [vmem:[#allocation2 + $0x8f0] sm:$0xff]
        %v2989 = vld [vmem:[#allocation2 + $0x8f8] sm:$0xff]
        %v2990 = vld [vmem:[#allocation4] sm:$0xff]
        %v2991 = vld [vmem:[#allocation4 + $0x8] sm:$0xff]
        %v2992 = vld [vmem:[#allocation4 + $0x10] sm:$0xff]
        %v2993 = vld [vmem:[#allocation4 + $0x18] sm:$0xff]
        %v2994 = vld [vmem:[#allocation4 + $0x20] sm:$0xff]
        %v2995 = vld [vmem:[#allocation4 + $0x28] sm:$0xff]
        %v2996 = vld [vmem:[#allocation4 + $0x30] sm:$0xff]
        %v2997 = vld [vmem:[#allocation4 + $0x38] sm:$0xff]
        %v2998 = vld [vmem:[#allocation4 + $0x40] sm:$0xff]
        %v2999 = vld [vmem:[#allocation4 + $0x48] sm:$0xff]
        %v3000 = vld [vmem:[#allocation4 + $0x50] sm:$0xff]
        %v3001 = vld [vmem:[#allocation4 + $0x58] sm:$0xff]
        %v3002 = vld [vmem:[#allocation4 + $0x60] sm:$0xff]
        %v3003 = vld [vmem:[#allocation4 + $0x68] sm:$0xff]
        %v3004 = vld [vmem:[#allocation4 + $0x70] sm:$0xff]
        %v3005 = vld [vmem:[#allocation4 + $0x78] sm:$0xff]
        %v3006 = vld [vmem:[#allocation4 + $0x80] sm:$0xff]
        %v3007 = vld [vmem:[#allocation4 + $0x88] sm:$0xff]
        %v3008 = vld [vmem:[#allocation4 + $0x90] sm:$0xff]
        %v3009 = vld [vmem:[#allocation4 + $0x98] sm:$0xff]
        %v3010 = vld [vmem:[#allocation4 + $0xa0] sm:$0xff]
        %v3011 = vld [vmem:[#allocation4 + $0xa8] sm:$0xff]
        %v3012 = vld [vmem:[#allocation4 + $0xb0] sm:$0xff]
        %v3013 = vld [vmem:[#allocation4 + $0xb8] sm:$0xff]
        %v3014 = vld [vmem:[#allocation4 + $0xc0] sm:$0xff]
        %v3015 = vld [vmem:[#allocation4 + $0xc8] sm:$0xff]
        %v3016 = vld [vmem:[#allocation4 + $0xd0] sm:$0xff]
        %v3017 = vld [vmem:[#allocation4 + $0xd8] sm:$0xff]
        %v3018 = vld [vmem:[#allocation4 + $0xe0] sm:$0xff]
        %v3019 = vld [vmem:[#allocation4 + $0xe8] sm:$0xff]
        %v3020 = vld [vmem:[#allocation4 + $0xf0] sm:$0xff]
        %v3021 = vld [vmem:[#allocation4 + $0xf8] sm:$0xff]
        %v3022 = vld [vmem:[#allocation4 + $0x100] sm:$0xff]
        %v3023 = vld [vmem:[#allocation4 + $0x108] sm:$0xff]
        %v3024 = vld [vmem:[#allocation4 + $0x110] sm:$0xff]
        %v3025 = vld [vmem:[#allocation4 + $0x118] sm:$0xff]
        %v3026 = vld [vmem:[#allocation4 + $0x120] sm:$0xff]
        %v3027 = vld [vmem:[#allocation4 + $0x128] sm:$0xff]
        %v3028 = vld [vmem:[#allocation4 + $0x130] sm:$0xff]
        %v3029 = vld [vmem:[#allocation4 + $0x138] sm:$0xff]
        %v3030 = vld [vmem:[#allocation4 + $0x140] sm:$0xff]
        %v3031 = vld [vmem:[#allocation4 + $0x148] sm:$0xff]
        %v3032 = vld [vmem:[#allocation4 + $0x150] sm:$0xff]
        %v3033 = vld [vmem:[#allocation4 + $0x158] sm:$0xff]
        %v3034 = vld [vmem:[#allocation4 + $0x160] sm:$0xff]
        %v3035 = vld [vmem:[#allocation4 + $0x168] sm:$0xff]
        %v3036 = vld [vmem:[#allocation4 + $0x170] sm:$0xff]
        %v3037 = vld [vmem:[#allocation4 + $0x178] sm:$0xff]
        %v3038 = vld [vmem:[#allocation4 + $0x180] sm:$0xff]
        %v3039 = vld [vmem:[#allocation4 + $0x188] sm:$0xff]
        %v3040 = vld [vmem:[#allocation4 + $0x190] sm:$0xff]
        %v3041 = vld [vmem:[#allocation4 + $0x198] sm:$0xff]
        %v3042 = vld [vmem:[#allocation4 + $0x1a0] sm:$0xff]
        %v3043 = vld [vmem:[#allocation4 + $0x1a8] sm:$0xff]
        %v3044 = vld [vmem:[#allocation4 + $0x1b0] sm:$0xff]
        %v3045 = vld [vmem:[#allocation4 + $0x1b8] sm:$0xff]
        %v3046 = vld [vmem:[#allocation4 + $0x1c0] sm:$0xff]
        %v3047 = vld [vmem:[#allocation4 + $0x1c8] sm:$0xff]
        %v3048 = vld [vmem:[#allocation4 + $0x1d0] sm:$0xff]
        %v3049 = vld [vmem:[#allocation4 + $0x1d8] sm:$0xff]
        %v3050 = vld [vmem:[#allocation4 + $0x1e0] sm:$0xff]
        %v3051 = vld [vmem:[#allocation4 + $0x1e8] sm:$0xff]
        %v3052 = vld [vmem:[#allocation4 + $0x1f0] sm:$0xff]
        %v3053 = vld [vmem:[#allocation4 + $0x1f8] sm:$0xff]
        %v3054 = vld [vmem:[#allocation4 + $0x200] sm:$0xff]
        %v3055 = vld [vmem:[#allocation4 + $0x208] sm:$0xff]
        %v3056 = vld [vmem:[#allocation4 + $0x210] sm:$0xff]
        %v3057 = vld [vmem:[#allocation4 + $0x218] sm:$0xff]
        %v3058 = vld [vmem:[#allocation4 + $0x220] sm:$0xff]
        %v3059 = vld [vmem:[#allocation4 + $0x228] sm:$0xff]
        %v3060 = vld [vmem:[#allocation4 + $0x230] sm:$0xff]
        %v3061 = vld [vmem:[#allocation4 + $0x238] sm:$0xff]
        %v3062 = vld [vmem:[#allocation4 + $0x240] sm:$0xff]
        %v3063 = vld [vmem:[#allocation4 + $0x248] sm:$0xff]
        %v3064 = vld [vmem:[#allocation4 + $0x250] sm:$0xff]
        %v3065 = vld [vmem:[#allocation4 + $0x258] sm:$0xff]
        %v3066 = vld [vmem:[#allocation4 + $0x260] sm:$0xff]
        %v3067 = vld [vmem:[#allocation4 + $0x268] sm:$0xff]
        %v3068 = vld [vmem:[#allocation4 + $0x270] sm:$0xff]
        %v3069 = vld [vmem:[#allocation4 + $0x278] sm:$0xff]
        %v3070 = vld [vmem:[#allocation4 + $0x280] sm:$0xff]
        %v3071 = vld [vmem:[#allocation4 + $0x288] sm:$0xff]
        %v3072 = vld [vmem:[#allocation4 + $0x290] sm:$0xff]
        %v3073 = vld [vmem:[#allocation4 + $0x298] sm:$0xff]
        %v3074 = vld [vmem:[#allocation4 + $0x2a0] sm:$0xff]
        %v3075 = vld [vmem:[#allocation4 + $0x2a8] sm:$0xff]
        %v3076 = vld [vmem:[#allocation4 + $0x2b0] sm:$0xff]
        %v3077 = vld [vmem:[#allocation4 + $0x2b8] sm:$0xff]
        %v3078 = vld [vmem:[#allocation4 + $0x2c0] sm:$0xff]
        %v3079 = vld [vmem:[#allocation4 + $0x2c8] sm:$0xff]
        %v3080 = vld [vmem:[#allocation4 + $0x2d0] sm:$0xff]
        %v3081 = vld [vmem:[#allocation4 + $0x2d8] sm:$0xff]
        %v3082 = vld [vmem:[#allocation4 + $0x2e0] sm:$0xff]
        %v3083 = vld [vmem:[#allocation4 + $0x2e8] sm:$0xff]
        %v3084 = vld [vmem:[#allocation4 + $0x2f0] sm:$0xff]
        %v3085 = vld [vmem:[#allocation4 + $0x2f8] sm:$0xff]
        %v3086 = vld [vmem:[#allocation4 + $0x300] sm:$0xff]
        %v3087 = vld [vmem:[#allocation4 + $0x308] sm:$0xff]
        %v3088 = vld [vmem:[#allocation4 + $0x310] sm:$0xff]
        %v3089 = vld [vmem:[#allocation4 + $0x318] sm:$0xff]
        %v3090 = vld [vmem:[#allocation4 + $0x320] sm:$0xff]
        %v3091 = vld [vmem:[#allocation4 + $0x328] sm:$0xff]
        %v3092 = vld [vmem:[#allocation4 + $0x330] sm:$0xff]
        %v3093 = vld [vmem:[#allocation4 + $0x338] sm:$0xff]
        %v3094 = vld [vmem:[#allocation4 + $0x340] sm:$0xff]
        %v3095 = vld [vmem:[#allocation4 + $0x348] sm:$0xff]
        %v3096 = vld [vmem:[#allocation4 + $0x350] sm:$0xff]
        %v3097 = vld [vmem:[#allocation4 + $0x358] sm:$0xff]
        %v3098 = vld [vmem:[#allocation4 + $0x360] sm:$0xff]
        %v3099 = vld [vmem:[#allocation4 + $0x368] sm:$0xff]
        %v3100 = vld [vmem:[#allocation4 + $0x370] sm:$0xff]
        %v3101 = vld [vmem:[#allocation4 + $0x378] sm:$0xff]
        %v3102 = vld [vmem:[#allocation4 + $0x380] sm:$0xff]
        %v3103 = vld [vmem:[#allocation4 + $0x388] sm:$0xff]
        %v3104 = vld [vmem:[#allocation4 + $0x390] sm:$0xff]
        %v3105 = vld [vmem:[#allocation4 + $0x398] sm:$0xff]
        %v3106 = vld [vmem:[#allocation4 + $0x3a0] sm:$0xff]
        %v3107 = vld [vmem:[#allocation4 + $0x3a8] sm:$0xff]
        %v3108 = vld [vmem:[#allocation4 + $0x3b0] sm:$0xff]
        %v3109 = vld [vmem:[#allocation4 + $0x3b8] sm:$0xff]
        %v3110 = vld [vmem:[#allocation4 + $0x3c0] sm:$0xff]
        %v3111 = vld [vmem:[#allocation4 + $0x3c8] sm:$0xff]
        %v3112 = vld [vmem:[#allocation4 + $0x3d0] sm:$0xff]
        %v3113 = vld [vmem:[#allocation4 + $0x3d8] sm:$0xff]
        %v3114 = vld [vmem:[#allocation4 + $0x3e0] sm:$0xff]
        %v3115 = vld [vmem:[#allocation4 + $0x3e8] sm:$0xff]
        %v3116 = vld [vmem:[#allocation4 + $0x3f0] sm:$0xff]
        %v3117 = vld [vmem:[#allocation4 + $0x3f8] sm:$0xff]
        %v3118 = vld [vmem:[#allocation4 + $0x400] sm:$0xff]
        %v3119 = vld [vmem:[#allocation4 + $0x408] sm:$0xff]
        %v3120 = vld [vmem:[#allocation4 + $0x410] sm:$0xff]
        %v3121 = vld [vmem:[#allocation4 + $0x418] sm:$0xff]
        %v3122 = vld [vmem:[#allocation4 + $0x420] sm:$0xff]
        %v3123 = vld [vmem:[#allocation4 + $0x428] sm:$0xff]
        %v3124 = vld [vmem:[#allocation4 + $0x430] sm:$0xff]
        %v3125 = vld [vmem:[#allocation4 + $0x438] sm:$0xff]
        %v3126 = vld [vmem:[#allocation4 + $0x440] sm:$0xff]
        %v3127 = vld [vmem:[#allocation4 + $0x448] sm:$0xff]
        %v3128 = vld [vmem:[#allocation4 + $0x450] sm:$0xff]
        %v3129 = vld [vmem:[#allocation4 + $0x458] sm:$0xff]
        %v3130 = vld [vmem:[#allocation4 + $0x460] sm:$0xff]
        %v3131 = vld [vmem:[#allocation4 + $0x468] sm:$0xff]
        %v3132 = vld [vmem:[#allocation4 + $0x470] sm:$0xff]
        %v3133 = vld [vmem:[#allocation4 + $0x478] sm:$0xff]
        %v3134 = vld [vmem:[%s4] sm:$0x1]
        %v3136 = vlaneseq
        %v3137 = vshrl.u32 %v3136, 7
        %v3138 = vsub.s32 0, %v3137
        %v3139 = vrot.slane %v3134, %v3138
        %3141 = vmatprep.subr.mxu0 0.0
        %3142 = vmatpush1.msra.mxu0 %v2990
        %3143 = vmatprep.subr.mxu0 0.0
        %3144 = vmatpush1.msra.mxu0 %v2991
        %3145 = vmatprep.subr.mxu0 0.0
        %3146 = vmatpush1.msra.mxu0 %v2992
        %3147 = vmatprep.subr.mxu0 0.0
        %3148 = vmatpush1.msra.mxu0 %v2993
        %3149 = vmatprep.subr.mxu0 0.0
        %3150 = vmatpush1.msra.mxu0 %v2994
        %3151 = vmatprep.subr.mxu0 0.0
        %3152 = vmatpush1.msra.mxu0 %v2995
        %3153 = vmatprep.subr.mxu0 0.0
        %3154 = vmatpush1.msra.mxu0 %v2996
        %3155 = vmatprep.subr.mxu0 0.0
        %3156 = vmatpush1.msra.mxu0 %v2997
        %3157 = vmatprep.subr.mxu0 0.0
        %3158 = vmatpush1.msra.mxu0 %v2998
        %3159 = vmatprep.subr.mxu0 0.0
        %3160 = vmatpush1.msra.mxu0 %v2999
        %3161 = vmatprep.subr.mxu0 0.0
        %3162 = vmatpush1.msra.mxu0 %v3000
        %3163 = vmatprep.subr.mxu0 0.0
        %3164 = vmatpush1.msra.mxu0 %v3001
        %3165 = vmatprep.subr.mxu0 0.0
        %3166 = vmatpush1.msra.mxu0 %v3002
        %3167 = vmatprep.subr.mxu0 0.0
        %3168 = vmatpush1.msra.mxu0 %v3003
        %3169 = vmatprep.subr.mxu0 0.0
        %3170 = vmatpush1.msra.mxu0 %v3004
        %3171 = vmatprep.subr.mxu0 0.0
        %3172 = vmatpush1.msra.mxu0 %v3005
        %3173 = vmatprep.subr.mxu0 0.0
        %3174 = vmatpush1.msra.mxu0 %v3006
        %3175 = vmatprep.subr.mxu0 0.0
        %3176 = vmatpush1.msra.mxu0 %v3007
        %3177 = vmatprep.subr.mxu0 0.0
        %3178 = vmatpush1.msra.mxu0 %v3008
        %3179 = vmatprep.subr.mxu0 0.0
        %3180 = vmatpush1.msra.mxu0 %v3009
        %3181 = vmatprep.subr.mxu0 0.0
        %3182 = vmatpush1.msra.mxu0 %v3010
        %3183 = vmatprep.subr.mxu0 0.0
        %3184 = vmatpush1.msra.mxu0 %v3011
        %3185 = vmatprep.subr.mxu0 0.0
        %3186 = vmatpush1.msra.mxu0 %v3012
        %3187 = vmatprep.subr.mxu0 0.0
        %3188 = vmatpush1.msra.mxu0 %v3013
        %3189 = vmatprep.subr.mxu0 0.0
        %3190 = vmatpush1.msra.mxu0 %v3014
        %3191 = vmatprep.subr.mxu0 0.0
        %3192 = vmatpush1.msra.mxu0 %v3015
        %3193 = vmatprep.subr.mxu0 0.0
        %3194 = vmatpush1.msra.mxu0 %v3016
        %3195 = vmatprep.subr.mxu0 0.0
        %3196 = vmatpush1.msra.mxu0 %v3017
        %3197 = vmatprep.subr.mxu0 0.0
        %3198 = vmatpush1.msra.mxu0 %v3018
        %3199 = vmatprep.subr.mxu0 0.0
        %3200 = vmatpush1.msra.mxu0 %v3019
        %3201 = vmatprep.subr.mxu0 0.0
        %3202 = vmatpush1.msra.mxu0 %v3020
        %3203 = vmatprep.subr.mxu0 0.0
        %3204 = vmatpush1.msra.mxu0 %v3021
        %3205 = vmatprep.mubr.f32.mxu0 %v2703
        %3206 = vmatmul.mubr.f32.gmra.mrb[0].mxu0 %v2702
        %v3207 = vpop.f32.mrb[0].mxu0
        %v3208 = vadd.f32 %v3139, %v3207
        %v3209 = vpop.f32.mrb[0].mxu0
        %3210 = vmatprep.mubr.f32.mxu0 %v2712
        %3211 = vmatmul.mubr.f32.gmra.mrb[0].mxu0 %v2711
        %v3212 = vpop.f32.mrb[0].mxu0
        %v3213 = vadd.f32 %v3139, %v3212
        %v3214 = vpop.f32.mrb[0].mxu0
        %3215 = vmatprep.mubr.f32.mxu0 %v2721
        %3216 = vmatmul.mubr.f32.gmra.mrb[0].mxu0 %v2720
        %v3217 = vpop.f32.mrb[0].mxu0
        %v3218 = vadd.f32 %v3139, %v3217
        %v3219 = vpop.f32.mrb[0].mxu0
        %3220 = vmatprep.mubr.f32.mxu0 %v2730
        %3221 = vmatmul.mubr.f32.gmra.mrb[0].mxu0 %v2729
        %v3222 = vpop.f32.mrb[0].mxu0
        %v3223 = vadd.f32 %v3139, %v3222
        %v3224 = vpop.f32.mrb[0].mxu0
        %3225 = vmatprep.mubr.f32.mxu0 %v2739
        %3226 = vmatmul.mubr.f32.gmra.mrb[0].mxu0 %v2738
        %v3227 = vpop.f32.mrb[0].mxu0
        %v3228 = vadd.f32 %v3139, %v3227
        %v3229 = vpop.f32.mrb[0].mxu0
        %3230 = vmatprep.mubr.f32.mxu0 %v2748
        %3231 = vmatmul.mubr.f32.gmra.mrb[0].mxu0 %v2747
        %v3232 = vpop.f32.mrb[0].mxu0
        %v3233 = vadd.f32 %v3139, %v3232
        %v3234 = vpop.f32.mrb[0].mxu0
        %3235 = vmatprep.mubr.f32.mxu0 %v2757
        %3236 = vmatmul.mubr.f32.gmra.mrb[0].mxu0 %v2756
        %v3237 = vpop.f32.mrb[0].mxu0
        %v3238 = vadd.f32 %v3139, %v3237
        %v3239 = vpop.f32.mrb[0].mxu0
        %3240 = vmatprep.mubr.f32.mxu0 %v2766
        %3241 = vmatmul.mubr.f32.gmra.mrb[0].mxu0 %v2765
        %v3242 = vpop.f32.mrb[0].mxu0
        %v3243 = vadd.f32 %v3139, %v3242
        %v3244 = vpop.f32.mrb[0].mxu0
        %3245 = vmatprep.mubr.f32.mxu0 %v2775
        %3246 = vmatmul.mubr.f32.gmra.mrb[0].mxu0 %v2774
        %v3247 = vpop.f32.mrb[0].mxu0
        %v3248 = vadd.f32 %v3139, %v3247
        %v3249 = vpop.f32.mrb[0].mxu0
        %3250 = vmatprep.mubr.f32.mxu0 %v2784
        %3251 = vmatmul.mubr.f32.gmra.mrb[0].mxu0 %v2783
        %v3252 = vpop.f32.mrb[0].mxu0
        %v3253 = vadd.f32 %v3139, %v3252
        %v3254 = vpop.f32.mrb[0].mxu0
        %3255 = vmatprep.mubr.f32.mxu0 %v2793
        %3256 = vmatmul.mubr.f32.gmra.mrb[0].mxu0 %v2792
        %v3257 = vpop.f32.mrb[0].mxu0
        %v3258 = vadd.f32 %v3139, %v3257
        %v3259 = vpop.f32.mrb[0].mxu0
        %3260 = vmatprep.mubr.f32.mxu0 %v2802
        %3261 = vmatmul.mubr.f32.gmra.mrb[0].mxu0 %v2801
        %v3262 = vpop.f32.mrb[0].mxu0
        %v3263 = vadd.f32 %v3139, %v3262
        %v3264 = vpop.f32.mrb[0].mxu0
        %3265 = vmatprep.mubr.f32.mxu0 %v2811
        %3266 = vmatmul.mubr.f32.gmra.mrb[0].mxu0 %v2810
        %v3267 = vpop.f32.mrb[0].mxu0
        %v3268 = vadd.f32 %v3139, %v3267
        %v3269 = vpop.f32.mrb[0].mxu0
        %3270 = vmatprep.mubr.f32.mxu0 %v2820
        %3271 = vmatmul.mubr.f32.gmra.mrb[0].mxu0 %v2819
        %v3272 = vpop.f32.mrb[0].mxu0
        %v3273 = vadd.f32 %v3139, %v3272
        %v3274 = vpop.f32.mrb[0].mxu0
        %3275 = vmatprep.mubr.f32.mxu0 %v2829
        %3276 = vmatmul.mubr.f32.gmra.mrb[0].mxu0 %v2828
        %v3277 = vpop.f32.mrb[0].mxu0
        %v3278 = vadd.f32 %v3139, %v3277
        %v3279 = vpop.f32.mrb[0].mxu0
        %3280 = vmatprep.mubr.f32.mxu0 %v2838
        %3281 = vmatmul.mubr.f32.gmra.mrb[0].mxu0 %v2837
        %v3282 = vpop.f32.mrb[0].mxu0
        %v3283 = vadd.f32 %v3139, %v3282
        %v3284 = vpop.f32.mrb[0].mxu0
        %3285 = vmatprep.mubr.f32.mxu0 %v2847
        %3286 = vmatmul.mubr.f32.gmra.mrb[0].mxu0 %v2846
        %v3287 = vpop.f32.mrb[0].mxu0
        %v3288 = vadd.f32 %v3139, %v3287
        %v3289 = vpop.f32.mrb[0].mxu0
        %3290 = vmatprep.mubr.f32.mxu0 %v2856
        %3291 = vmatmul.mubr.f32.gmra.mrb[0].mxu0 %v2855
        %v3292 = vpop.f32.mrb[0].mxu0
        %v3293 = vadd.f32 %v3139, %v3292
        %v3294 = vpop.f32.mrb[0].mxu0
        %3295 = vmatprep.mubr.f32.mxu0 %v2865
        %3296 = vmatmul.mubr.f32.gmra.mrb[0].mxu0 %v2864
        %v3297 = vpop.f32.mrb[0].mxu0
        %v3298 = vadd.f32 %v3139, %v3297
        %v3299 = vpop.f32.mrb[0].mxu0
        %3300 = vmatprep.mubr.f32.mxu0 %v2874
        %3301 = vmatmul.mubr.f32.gmra.mrb[0].mxu0 %v2873
        %v3302 = vpop.f32.mrb[0].mxu0
        %v3303 = vadd.f32 %v3139, %v3302
        %v3304 = vpop.f32.mrb[0].mxu0
        %3305 = vmatprep.mubr.f32.mxu0 %v2883
        %3306 = vmatmul.mubr.f32.gmra.mrb[0].mxu0 %v2882
        %v3307 = vpop.f32.mrb[0].mxu0
        %v3308 = vadd.f32 %v3139, %v3307
        %v3309 = vpop.f32.mrb[0].mxu0
        %3310 = vmatprep.mubr.f32.mxu0 %v2892
        %3311 = vmatmul.mubr.f32.gmra.mrb[0].mxu0 %v2891
        %v3312 = vpop.f32.mrb[0].mxu0
        %v3313 = vadd.f32 %v3139, %v3312
        %v3314 = vpop.f32.mrb[0].mxu0
        %3315 = vmatprep.mubr.f32.mxu0 %v2901
        %3316 = vmatmul.mubr.f32.gmra.mrb[0].mxu0 %v2900
        %v3317 = vpop.f32.mrb[0].mxu0
        %v3318 = vadd.f32 %v3139, %v3317
        %v3319 = vpop.f32.mrb[0].mxu0
        %3320 = vmatprep.mubr.f32.mxu0 %v2910
        %3321 = vmatmul.mubr.f32.gmra.mrb[0].mxu0 %v2909
        %v3322 = vpop.f32.mrb[0].mxu0
        %v3323 = vadd.f32 %v3139, %v3322
        %v3324 = vpop.f32.mrb[0].mxu0
        %3325 = vmatprep.mubr.f32.mxu0 %v2919
        %3326 = vmatmul.mubr.f32.gmra.mrb[0].mxu0 %v2918
        %v3327 = vpop.f32.mrb[0].mxu0
        %v3328 = vadd.f32 %v3139, %v3327
        %v3329 = vpop.f32.mrb[0].mxu0
        %3330 = vmatprep.mubr.f32.mxu0 %v2928
        %3331 = vmatmul.mubr.f32.gmra.mrb[0].mxu0 %v2927
        %v3332 = vpop.f32.mrb[0].mxu0
        %v3333 = vadd.f32 %v3139, %v3332
        %v3334 = vpop.f32.mrb[0].mxu0
        %3335 = vmatprep.mubr.f32.mxu0 %v2937
        %3336 = vmatmul.mubr.f32.gmra.mrb[0].mxu0 %v2936
        %v3337 = vpop.f32.mrb[0].mxu0
        %v3338 = vadd.f32 %v3139, %v3337
        %v3339 = vpop.f32.mrb[0].mxu0
        %3340 = vmatprep.mubr.f32.mxu0 %v2946
        %3341 = vmatmul.mubr.f32.gmra.mrb[0].mxu0 %v2945
        %v3342 = vpop.f32.mrb[0].mxu0
        %v3343 = vadd.f32 %v3139, %v3342
        %v3344 = vpop.f32.mrb[0].mxu0
        %3345 = vmatprep.mubr.f32.mxu0 %v2955
        %3346 = vmatmul.mubr.f32.gmra.mrb[0].mxu0 %v2954
        %v3347 = vpop.f32.mrb[0].mxu0
        %v3348 = vadd.f32 %v3139, %v3347
        %v3349 = vpop.f32.mrb[0].mxu0
        %3350 = vmatprep.mubr.f32.mxu0 %v2964
        %3351 = vmatmul.mubr.f32.gmra.mrb[0].mxu0 %v2963
        %v3352 = vpop.f32.mrb[0].mxu0
        %v3353 = vadd.f32 %v3139, %v3352
        %v3354 = vpop.f32.mrb[0].mxu0
        %3355 = vmatprep.mubr.f32.mxu0 %v2973
        %3356 = vmatmul.mubr.f32.gmra.mrb[0].mxu0 %v2972
        %v3357 = vpop.f32.mrb[0].mxu0
        %v3358 = vadd.f32 %v3139, %v3357
        %v3359 = vpop.f32.mrb[0].mxu0
        %3360 = vmatprep.mubr.f32.mxu0 %v2982
        %3361 = vmatmul.mubr.f32.gmra.mrb[0].mxu0 %v2981
        %v3362 = vpop.f32.mrb[0].mxu0
        %v3363 = vadd.f32 %v3139, %v3362
        %v3364 = vpop.f32.mrb[0].mxu0
        %3365 = vdwg.mxu0
        %3366 = vmatprep.subr.mxu0 0.0
        %3367 = vmatpush1.msra.mxu0 %v3022
        %3368 = vmatprep.subr.mxu0 0.0
        %3369 = vmatpush1.msra.mxu0 %v3023
        %3370 = vmatprep.subr.mxu0 0.0
        %3371 = vmatpush1.msra.mxu0 %v3024
        %3372 = vmatprep.subr.mxu0 0.0
        %3373 = vmatpush1.msra.mxu0 %v3025
        %3374 = vmatprep.subr.mxu0 0.0
        %3375 = vmatpush1.msra.mxu0 %v3026
        %3376 = vmatprep.subr.mxu0 0.0
        %3377 = vmatpush1.msra.mxu0 %v3027
        %3378 = vmatprep.subr.mxu0 0.0
        %3379 = vmatpush1.msra.mxu0 %v3028
        %3380 = vmatprep.subr.mxu0 0.0
        %3381 = vmatpush1.msra.mxu0 %v3029
        %3382 = vmatprep.subr.mxu0 0.0
        %3383 = vmatpush1.msra.mxu0 %v3030
        %3384 = vmatprep.subr.mxu0 0.0
        %3385 = vmatpush1.msra.mxu0 %v3031
        %3386 = vmatprep.subr.mxu0 0.0
        %3387 = vmatpush1.msra.mxu0 %v3032
        %3388 = vmatprep.subr.mxu0 0.0
        %3389 = vmatpush1.msra.mxu0 %v3033
        %3390 = vmatprep.subr.mxu0 0.0
        %3391 = vmatpush1.msra.mxu0 %v3034
        %3392 = vmatprep.subr.mxu0 0.0
        %3393 = vmatpush1.msra.mxu0 %v3035
        %3394 = vmatprep.subr.mxu0 0.0
        %3395 = vmatpush1.msra.mxu0 %v3036
        %3396 = vmatprep.subr.mxu0 0.0
        %3397 = vmatpush1.msra.mxu0 %v3037
        %3398 = vmatprep.subr.mxu0 0.0
        %3399 = vmatpush1.msra.mxu0 %v3038
        %3400 = vmatprep.subr.mxu0 0.0
        %3401 = vmatpush1.msra.mxu0 %v3039
        %3402 = vmatprep.subr.mxu0 0.0
        %3403 = vmatpush1.msra.mxu0 %v3040
        %3404 = vmatprep.subr.mxu0 0.0
        %3405 = vmatpush1.msra.mxu0 %v3041
        %3406 = vmatprep.subr.mxu0 0.0
        %3407 = vmatpush1.msra.mxu0 %v3042
        %3408 = vmatprep.subr.mxu0 0.0
        %3409 = vmatpush1.msra.mxu0 %v3043
        %3410 = vmatprep.subr.mxu0 0.0
        %3411 = vmatpush1.msra.mxu0 %v3044
        %3412 = vmatprep.subr.mxu0 0.0
        %3413 = vmatpush1.msra.mxu0 %v3045
        %3414 = vmatprep.subr.mxu0 0.0
        %3415 = vmatpush1.msra.mxu0 %v3046
        %3416 = vmatprep.subr.mxu0 0.0
        %3417 = vmatpush1.msra.mxu0 %v3047
        %3418 = vmatprep.subr.mxu0 0.0
        %3419 = vmatpush1.msra.mxu0 %v3048
        %3420 = vmatprep.subr.mxu0 0.0
        %3421 = vmatpush1.msra.mxu0 %v3049
        %3422 = vmatprep.subr.mxu0 0.0
        %3423 = vmatpush1.msra.mxu0 %v3050
        %3424 = vmatprep.subr.mxu0 0.0
        %3425 = vmatpush1.msra.mxu0 %v3051
        %3426 = vmatprep.subr.mxu0 0.0
        %3427 = vmatpush1.msra.mxu0 %v3052
        %3428 = vmatprep.subr.mxu0 0.0
        %3429 = vmatpush1.msra.mxu0 %v3053
        %3430 = vmatprep.mubr.f32.mxu0 %v2705
        %3431 = vmatmul.mubr.f32.gmra.mrb[0].mxu0 %v2704
        %v3432 = vpop.f32.mrb[0].mxu0
        %v3433 = vadd.f32 %v3208, %v3432
        %v3434 = vpop.f32.mrb[0].mxu0
        %3435 = vmatprep.mubr.f32.mxu0 %v2714
        %3436 = vmatmul.mubr.f32.gmra.mrb[0].mxu0 %v2713
        %v3437 = vpop.f32.mrb[0].mxu0
        %v3438 = vadd.f32 %v3213, %v3437
        %v3439 = vpop.f32.mrb[0].mxu0
        %3440 = vmatprep.mubr.f32.mxu0 %v2723
        %3441 = vmatmul.mubr.f32.gmra.mrb[0].mxu0 %v2722
        %v3442 = vpop.f32.mrb[0].mxu0
        %v3443 = vadd.f32 %v3218, %v3442
        %v3444 = vpop.f32.mrb[0].mxu0
        %3445 = vmatprep.mubr.f32.mxu0 %v2732
        %3446 = vmatmul.mubr.f32.gmra.mrb[0].mxu0 %v2731
        %v3447 = vpop.f32.mrb[0].mxu0
        %v3448 = vadd.f32 %v3223, %v3447
        %v3449 = vpop.f32.mrb[0].mxu0
        %3450 = vmatprep.mubr.f32.mxu0 %v2741
        %3451 = vmatmul.mubr.f32.gmra.mrb[0].mxu0 %v2740
        %v3452 = vpop.f32.mrb[0].mxu0
        %v3453 = vadd.f32 %v3228, %v3452
        %v3454 = vpop.f32.mrb[0].mxu0
        %3455 = vmatprep.mubr.f32.mxu0 %v2750
        %3456 = vmatmul.mubr.f32.gmra.mrb[0].mxu0 %v2749
        %v3457 = vpop.f32.mrb[0].mxu0
        %v3458 = vadd.f32 %v3233, %v3457
        %v3459 = vpop.f32.mrb[0].mxu0
        %3460 = vmatprep.mubr.f32.mxu0 %v2759
        %3461 = vmatmul.mubr.f32.gmra.mrb[0].mxu0 %v2758
        %v3462 = vpop.f32.mrb[0].mxu0
        %v3463 = vadd.f32 %v3238, %v3462
        %v3464 = vpop.f32.mrb[0].mxu0
        %3465 = vmatprep.mubr.f32.mxu0 %v2768
        %3466 = vmatmul.mubr.f32.gmra.mrb[0].mxu0 %v2767
        %v3467 = vpop.f32.mrb[0].mxu0
        %v3468 = vadd.f32 %v3243, %v3467
        %v3469 = vpop.f32.mrb[0].mxu0
        %3470 = vmatprep.mubr.f32.mxu0 %v2777
        %3471 = vmatmul.mubr.f32.gmra.mrb[0].mxu0 %v2776
        %v3472 = vpop.f32.mrb[0].mxu0
        %v3473 = vadd.f32 %v3248, %v3472
        %v3474 = vpop.f32.mrb[0].mxu0
        %3475 = vmatprep.mubr.f32.mxu0 %v2786
        %3476 = vmatmul.mubr.f32.gmra.mrb[0].mxu0 %v2785
        %v3477 = vpop.f32.mrb[0].mxu0
        %v3478 = vadd.f32 %v3253, %v3477
        %v3479 = vpop.f32.mrb[0].mxu0
        %3480 = vmatprep.mubr.f32.mxu0 %v2795
        %3481 = vmatmul.mubr.f32.gmra.mrb[0].mxu0 %v2794
        %v3482 = vpop.f32.mrb[0].mxu0
        %v3483 = vadd.f32 %v3258, %v3482
        %v3484 = vpop.f32.mrb[0].mxu0
        %3485 = vmatprep.mubr.f32.mxu0 %v2804
        %3486 = vmatmul.mubr.f32.gmra.mrb[0].mxu0 %v2803
        %v3487 = vpop.f32.mrb[0].mxu0
        %v3488 = vadd.f32 %v3263, %v3487
        %v3489 = vpop.f32.mrb[0].mxu0
        %3490 = vmatprep.mubr.f32.mxu0 %v2813
        %3491 = vmatmul.mubr.f32.gmra.mrb[0].mxu0 %v2812
        %v3492 = vpop.f32.mrb[0].mxu0
        %v3493 = vadd.f32 %v3268, %v3492
        %v3494 = vpop.f32.mrb[0].mxu0
        %3495 = vmatprep.mubr.f32.mxu0 %v2822
        %3496 = vmatmul.mubr.f32.gmra.mrb[0].mxu0 %v2821
        %v3497 = vpop.f32.mrb[0].mxu0
        %v3498 = vadd.f32 %v3273, %v3497
        %v3499 = vpop.f32.mrb[0].mxu0
        %3500 = vmatprep.mubr.f32.mxu0 %v2831
        %3501 = vmatmul.mubr.f32.gmra.mrb[0].mxu0 %v2830
        %v3502 = vpop.f32.mrb[0].mxu0
        %v3503 = vadd.f32 %v3278, %v3502
        %v3504 = vpop.f32.mrb[0].mxu0
        %3505 = vmatprep.mubr.f32.mxu0 %v2840
        %3506 = vmatmul.mubr.f32.gmra.mrb[0].mxu0 %v2839
        %v3507 = vpop.f32.mrb[0].mxu0
        %v3508 = vadd.f32 %v3283, %v3507
        %v3509 = vpop.f32.mrb[0].mxu0
        %3510 = vmatprep.mubr.f32.mxu0 %v2849
        %3511 = vmatmul.mubr.f32.gmra.mrb[0].mxu0 %v2848
        %v3512 = vpop.f32.mrb[0].mxu0
        %v3513 = vadd.f32 %v3288, %v3512
        %v3514 = vpop.f32.mrb[0].mxu0
        %3515 = vmatprep.mubr.f32.mxu0 %v2858
        %3516 = vmatmul.mubr.f32.gmra.mrb[0].mxu0 %v2857
        %v3517 = vpop.f32.mrb[0].mxu0
        %v3518 = vadd.f32 %v3293, %v3517
        %v3519 = vpop.f32.mrb[0].mxu0
        %3520 = vmatprep.mubr.f32.mxu0 %v2867
        %3521 = vmatmul.mubr.f32.gmra.mrb[0].mxu0 %v2866
        %v3522 = vpop.f32.mrb[0].mxu0
        %v3523 = vadd.f32 %v3298, %v3522
        %v3524 = vpop.f32.mrb[0].mxu0
        %3525 = vmatprep.mubr.f32.mxu0 %v2876
        %3526 = vmatmul.mubr.f32.gmra.mrb[0].mxu0 %v2875
        %v3527 = vpop.f32.mrb[0].mxu0
        %v3528 = vadd.f32 %v3303, %v3527
        %v3529 = vpop.f32.mrb[0].mxu0
        %3530 = vmatprep.mubr.f32.mxu0 %v2885
        %3531 = vmatmul.mubr.f32.gmra.mrb[0].mxu0 %v2884
        %v3532 = vpop.f32.mrb[0].mxu0
        %v3533 = vadd.f32 %v3308, %v3532
        %v3534 = vpop.f32.mrb[0].mxu0
        %3535 = vmatprep.mubr.f32.mxu0 %v2894
        %3536 = vmatmul.mubr.f32.gmra.mrb[0].mxu0 %v2893
        %v3537 = vpop.f32.mrb[0].mxu0
        %v3538 = vadd.f32 %v3313, %v3537
        %v3539 = vpop.f32.mrb[0].mxu0
        %3540 = vmatprep.mubr.f32.mxu0 %v2903
        %3541 = vmatmul.mubr.f32.gmra.mrb[0].mxu0 %v2902
        %v3542 = vpop.f32.mrb[0].mxu0
        %v3543 = vadd.f32 %v3318, %v3542
        %v3544 = vpop.f32.mrb[0].mxu0
        %3545 = vmatprep.mubr.f32.mxu0 %v2912
        %3546 = vmatmul.mubr.f32.gmra.mrb[0].mxu0 %v2911
        %v3547 = vpop.f32.mrb[0].mxu0
        %v3548 = vadd.f32 %v3323, %v3547
        %v3549 = vpop.f32.mrb[0].mxu0
        %3550 = vmatprep.mubr.f32.mxu0 %v2921
        %3551 = vmatmul.mubr.f32.gmra.mrb[0].mxu0 %v2920
        %v3552 = vpop.f32.mrb[0].mxu0
        %v3553 = vadd.f32 %v3328, %v3552
        %v3554 = vpop.f32.mrb[0].mxu0
        %3555 = vmatprep.mubr.f32.mxu0 %v2930
        %3556 = vmatmul.mubr.f32.gmra.mrb[0].mxu0 %v2929
        %v3557 = vpop.f32.mrb[0].mxu0
        %v3558 = vadd.f32 %v3333, %v3557
        %v3559 = vpop.f32.mrb[0].mxu0
        %3560 = vmatprep.mubr.f32.mxu0 %v2939
        %3561 = vmatmul.mubr.f32.gmra.mrb[0].mxu0 %v2938
        %v3562 = vpop.f32.mrb[0].mxu0
        %v3563 = vadd.f32 %v3338, %v3562
        %v3564 = vpop.f32.mrb[0].mxu0
        %3565 = vmatprep.mubr.f32.mxu0 %v2948
        %3566 = vmatmul.mubr.f32.gmra.mrb[0].mxu0 %v2947
        %v3567 = vpop.f32.mrb[0].mxu0
        %v3568 = vadd.f32 %v3343, %v3567
        %v3569 = vpop.f32.mrb[0].mxu0
        %3570 = vmatprep.mubr.f32.mxu0 %v2957
        %3571 = vmatmul.mubr.f32.gmra.mrb[0].mxu0 %v2956
        %v3572 = vpop.f32.mrb[0].mxu0
        %v3573 = vadd.f32 %v3348, %v3572
        %v3574 = vpop.f32.mrb[0].mxu0
        %3575 = vmatprep.mubr.f32.mxu0 %v2966
        %3576 = vmatmul.mubr.f32.gmra.mrb[0].mxu0 %v2965
        %v3577 = vpop.f32.mrb[0].mxu0
        %v3578 = vadd.f32 %v3353, %v3577
        %v3579 = vpop.f32.mrb[0].mxu0
        %3580 = vmatprep.mubr.f32.mxu0 %v2975
        %3581 = vmatmul.mubr.f32.gmra.mrb[0].mxu0 %v2974
        %v3582 = vpop.f32.mrb[0].mxu0
        %v3583 = vadd.f32 %v3358, %v3582
        %v3584 = vpop.f32.mrb[0].mxu0
        %3585 = vmatprep.mubr.f32.mxu0 %v2984
        %3586 = vmatmul.mubr.f32.gmra.mrb[0].mxu0 %v2983
        %v3587 = vpop.f32.mrb[0].mxu0
        %v3588 = vadd.f32 %v3363, %v3587
        %v3589 = vpop.f32.mrb[0].mxu0
        %3590 = vdwg.mxu0
        %3591 = vmatprep.subr.mxu0 0.0
        %3592 = vmatpush1.msra.mxu0 %v3054
        %3593 = vmatprep.subr.mxu0 0.0
        %3594 = vmatpush1.msra.mxu0 %v3055
        %3595 = vmatprep.subr.mxu0 0.0
        %3596 = vmatpush1.msra.mxu0 %v3056
        %3597 = vmatprep.subr.mxu0 0.0
        %3598 = vmatpush1.msra.mxu0 %v3057
        %3599 = vmatprep.subr.mxu0 0.0
        %3600 = vmatpush1.msra.mxu0 %v3058
        %3601 = vmatprep.subr.mxu0 0.0
        %3602 = vmatpush1.msra.mxu0 %v3059
        %3603 = vmatprep.subr.mxu0 0.0
        %3604 = vmatpush1.msra.mxu0 %v3060
        %3605 = vmatprep.subr.mxu0 0.0
        %3606 = vmatpush1.msra.mxu0 %v3061
        %3607 = vmatprep.subr.mxu0 0.0
        %3608 = vmatpush1.msra.mxu0 %v3062
        %3609 = vmatprep.subr.mxu0 0.0
        %3610 = vmatpush1.msra.mxu0 %v3063
        %3611 = vmatprep.subr.mxu0 0.0
        %3612 = vmatpush1.msra.mxu0 %v3064
        %3613 = vmatprep.subr.mxu0 0.0
        %3614 = vmatpush1.msra.mxu0 %v3065
        %3615 = vmatprep.subr.mxu0 0.0
        %3616 = vmatpush1.msra.mxu0 %v3066
        %3617 = vmatprep.subr.mxu0 0.0
        %3618 = vmatpush1.msra.mxu0 %v3067
        %3619 = vmatprep.subr.mxu0 0.0
        %3620 = vmatpush1.msra.mxu0 %v3068
        %3621 = vmatprep.subr.mxu0 0.0
        %3622 = vmatpush1.msra.mxu0 %v3069
        %3623 = vmatprep.subr.mxu0 0.0
        %3624 = vmatpush1.msra.mxu0 %v3070
        %3625 = vmatprep.subr.mxu0 0.0
        %3626 = vmatpush1.msra.mxu0 %v3071
        %3627 = vmatprep.subr.mxu0 0.0
        %3628 = vmatpush1.msra.mxu0 %v3072
        %3629 = vmatprep.subr.mxu0 0.0
        %3630 = vmatpush1.msra.mxu0 %v3073
        %3631 = vmatprep.subr.mxu0 0.0
        %3632 = vmatpush1.msra.mxu0 %v3074
        %3633 = vmatprep.subr.mxu0 0.0
        %3634 = vmatpush1.msra.mxu0 %v3075
        %3635 = vmatprep.subr.mxu0 0.0
        %3636 = vmatpush1.msra.mxu0 %v3076
        %3637 = vmatprep.subr.mxu0 0.0
        %3638 = vmatpush1.msra.mxu0 %v3077
        %3639 = vmatprep.subr.mxu0 0.0
        %3640 = vmatpush1.msra.mxu0 %v3078
        %3641 = vmatprep.subr.mxu0 0.0
        %3642 = vmatpush1.msra.mxu0 %v3079
        %3643 = vmatprep.subr.mxu0 0.0
        %3644 = vmatpush1.msra.mxu0 %v3080
        %3645 = vmatprep.subr.mxu0 0.0
        %3646 = vmatpush1.msra.mxu0 %v3081
        %3647 = vmatprep.subr.mxu0 0.0
        %3648 = vmatpush1.msra.mxu0 %v3082
        %3649 = vmatprep.subr.mxu0 0.0
        %3650 = vmatpush1.msra.mxu0 %v3083
        %3651 = vmatprep.subr.mxu0 0.0
        %3652 = vmatpush1.msra.mxu0 %v3084
        %3653 = vmatprep.subr.mxu0 0.0
        %3654 = vmatpush1.msra.mxu0 %v3085
        %3655 = vmatprep.mubr.f32.mxu0 %v2707
        %3656 = vmatmul.mubr.f32.gmra.mrb[0].mxu0 %v2706
        %v3657 = vpop.f32.mrb[0].mxu0
        %v3658 = vadd.f32 %v3433, %v3657
        %v3659 = vpop.f32.mrb[0].mxu0
        %3660 = vmatprep.mubr.f32.mxu0 %v2716
        %3661 = vmatmul.mubr.f32.gmra.mrb[0].mxu0 %v2715
        %v3662 = vpop.f32.mrb[0].mxu0
        %v3663 = vadd.f32 %v3438, %v3662
        %v3664 = vpop.f32.mrb[0].mxu0
        %3665 = vmatprep.mubr.f32.mxu0 %v2725
        %3666 = vmatmul.mubr.f32.gmra.mrb[0].mxu0 %v2724
        %v3667 = vpop.f32.mrb[0].mxu0
        %v3668 = vadd.f32 %v3443, %v3667
        %v3669 = vpop.f32.mrb[0].mxu0
        %3670 = vmatprep.mubr.f32.mxu0 %v2734
        %3671 = vmatmul.mubr.f32.gmra.mrb[0].mxu0 %v2733
        %v3672 = vpop.f32.mrb[0].mxu0
        %v3673 = vadd.f32 %v3448, %v3672
        %v3674 = vpop.f32.mrb[0].mxu0
        %3675 = vmatprep.mubr.f32.mxu0 %v2743
        %3676 = vmatmul.mubr.f32.gmra.mrb[0].mxu0 %v2742
        %v3677 = vpop.f32.mrb[0].mxu0
        %v3678 = vadd.f32 %v3453, %v3677
        %v3679 = vpop.f32.mrb[0].mxu0
        %3680 = vmatprep.mubr.f32.mxu0 %v2752
        %3681 = vmatmul.mubr.f32.gmra.mrb[0].mxu0 %v2751
        %v3682 = vpop.f32.mrb[0].mxu0
        %v3683 = vadd.f32 %v3458, %v3682
        %v3684 = vpop.f32.mrb[0].mxu0
        %3685 = vmatprep.mubr.f32.mxu0 %v2761
        %3686 = vmatmul.mubr.f32.gmra.mrb[0].mxu0 %v2760
        %v3687 = vpop.f32.mrb[0].mxu0
        %v3688 = vadd.f32 %v3463, %v3687
        %v3689 = vpop.f32.mrb[0].mxu0
        %3690 = vmatprep.mubr.f32.mxu0 %v2770
        %3691 = vmatmul.mubr.f32.gmra.mrb[0].mxu0 %v2769
        %v3692 = vpop.f32.mrb[0].mxu0
        %v3693 = vadd.f32 %v3468, %v3692
        %v3694 = vpop.f32.mrb[0].mxu0
        %3695 = vmatprep.mubr.f32.mxu0 %v2779
        %3696 = vmatmul.mubr.f32.gmra.mrb[0].mxu0 %v2778
        %v3697 = vpop.f32.mrb[0].mxu0
        %v3698 = vadd.f32 %v3473, %v3697
        %v3699 = vpop.f32.mrb[0].mxu0
        %3700 = vmatprep.mubr.f32.mxu0 %v2788
        %3701 = vmatmul.mubr.f32.gmra.mrb[0].mxu0 %v2787
        %v3702 = vpop.f32.mrb[0].mxu0
        %v3703 = vadd.f32 %v3478, %v3702
        %v3704 = vpop.f32.mrb[0].mxu0
        %3705 = vmatprep.mubr.f32.mxu0 %v2797
        %3706 = vmatmul.mubr.f32.gmra.mrb[0].mxu0 %v2796
        %v3707 = vpop.f32.mrb[0].mxu0
        %v3708 = vadd.f32 %v3483, %v3707
        %v3709 = vpop.f32.mrb[0].mxu0
        %3710 = vmatprep.mubr.f32.mxu0 %v2806
        %3711 = vmatmul.mubr.f32.gmra.mrb[0].mxu0 %v2805
        %v3712 = vpop.f32.mrb[0].mxu0
        %v3713 = vadd.f32 %v3488, %v3712
        %v3714 = vpop.f32.mrb[0].mxu0
        %3715 = vmatprep.mubr.f32.mxu0 %v2815
        %3716 = vmatmul.mubr.f32.gmra.mrb[0].mxu0 %v2814
        %v3717 = vpop.f32.mrb[0].mxu0
        %v3718 = vadd.f32 %v3493, %v3717
        %v3719 = vpop.f32.mrb[0].mxu0
        %3720 = vmatprep.mubr.f32.mxu0 %v2824
        %3721 = vmatmul.mubr.f32.gmra.mrb[0].mxu0 %v2823
        %v3722 = vpop.f32.mrb[0].mxu0
        %v3723 = vadd.f32 %v3498, %v3722
        %v3724 = vpop.f32.mrb[0].mxu0
        %3725 = vmatprep.mubr.f32.mxu0 %v2833
        %3726 = vmatmul.mubr.f32.gmra.mrb[0].mxu0 %v2832
        %v3727 = vpop.f32.mrb[0].mxu0
        %v3728 = vadd.f32 %v3503, %v3727
        %v3729 = vpop.f32.mrb[0].mxu0
        %3730 = vmatprep.mubr.f32.mxu0 %v2842
        %3731 = vmatmul.mubr.f32.gmra.mrb[0].mxu0 %v2841
        %v3732 = vpop.f32.mrb[0].mxu0
        %v3733 = vadd.f32 %v3508, %v3732
        %v3734 = vpop.f32.mrb[0].mxu0
        %3735 = vmatprep.mubr.f32.mxu0 %v2851
        %3736 = vmatmul.mubr.f32.gmra.mrb[0].mxu0 %v2850
        %v3737 = vpop.f32.mrb[0].mxu0
        %v3738 = vadd.f32 %v3513, %v3737
        %v3739 = vpop.f32.mrb[0].mxu0
        %3740 = vmatprep.mubr.f32.mxu0 %v2860
        %3741 = vmatmul.mubr.f32.gmra.mrb[0].mxu0 %v2859
        %v3742 = vpop.f32.mrb[0].mxu0
        %v3743 = vadd.f32 %v3518, %v3742
        %v3744 = vpop.f32.mrb[0].mxu0
        %3745 = vmatprep.mubr.f32.mxu0 %v2869
        %3746 = vmatmul.mubr.f32.gmra.mrb[0].mxu0 %v2868
        %v3747 = vpop.f32.mrb[0].mxu0
        %v3748 = vadd.f32 %v3523, %v3747
        %v3749 = vpop.f32.mrb[0].mxu0
        %3750 = vmatprep.mubr.f32.mxu0 %v2878
        %3751 = vmatmul.mubr.f32.gmra.mrb[0].mxu0 %v2877
        %v3752 = vpop.f32.mrb[0].mxu0
        %v3753 = vadd.f32 %v3528, %v3752
        %v3754 = vpop.f32.mrb[0].mxu0
        %3755 = vmatprep.mubr.f32.mxu0 %v2887
        %3756 = vmatmul.mubr.f32.gmra.mrb[0].mxu0 %v2886
        %v3757 = vpop.f32.mrb[0].mxu0
        %v3758 = vadd.f32 %v3533, %v3757
        %v3759 = vpop.f32.mrb[0].mxu0
        %3760 = vmatprep.mubr.f32.mxu0 %v2896
        %3761 = vmatmul.mubr.f32.gmra.mrb[0].mxu0 %v2895
        %v3762 = vpop.f32.mrb[0].mxu0
        %v3763 = vadd.f32 %v3538, %v3762
        %v3764 = vpop.f32.mrb[0].mxu0
        %3765 = vmatprep.mubr.f32.mxu0 %v2905
        %3766 = vmatmul.mubr.f32.gmra.mrb[0].mxu0 %v2904
        %v3767 = vpop.f32.mrb[0].mxu0
        %v3768 = vadd.f32 %v3543, %v3767
        %v3769 = vpop.f32.mrb[0].mxu0
        %3770 = vmatprep.mubr.f32.mxu0 %v2914
        %3771 = vmatmul.mubr.f32.gmra.mrb[0].mxu0 %v2913
        %v3772 = vpop.f32.mrb[0].mxu0
        %v3773 = vadd.f32 %v3548, %v3772
        %v3774 = vpop.f32.mrb[0].mxu0
        %3775 = vmatprep.mubr.f32.mxu0 %v2923
        %3776 = vmatmul.mubr.f32.gmra.mrb[0].mxu0 %v2922
        %v3777 = vpop.f32.mrb[0].mxu0
        %v3778 = vadd.f32 %v3553, %v3777
        %v3779 = vpop.f32.mrb[0].mxu0
        %3780 = vmatprep.mubr.f32.mxu0 %v2932
        %3781 = vmatmul.mubr.f32.gmra.mrb[0].mxu0 %v2931
        %v3782 = vpop.f32.mrb[0].mxu0
        %v3783 = vadd.f32 %v3558, %v3782
        %v3784 = vpop.f32.mrb[0].mxu0
        %3785 = vmatprep.mubr.f32.mxu0 %v2941
        %3786 = vmatmul.mubr.f32.gmra.mrb[0].mxu0 %v2940
        %v3787 = vpop.f32.mrb[0].mxu0
        %v3788 = vadd.f32 %v3563, %v3787
        %v3789 = vpop.f32.mrb[0].mxu0
        %3790 = vmatprep.mubr.f32.mxu0 %v2950
        %3791 = vmatmul.mubr.f32.gmra.mrb[0].mxu0 %v2949
        %v3792 = vpop.f32.mrb[0].mxu0
        %v3793 = vadd.f32 %v3568, %v3792
        %v3794 = vpop.f32.mrb[0].mxu0
        %3795 = vmatprep.mubr.f32.mxu0 %v2959
        %3796 = vmatmul.mubr.f32.gmra.mrb[0].mxu0 %v2958
        %v3797 = vpop.f32.mrb[0].mxu0
        %v3798 = vadd.f32 %v3573, %v3797
        %v3799 = vpop.f32.mrb[0].mxu0
        %3800 = vmatprep.mubr.f32.mxu0 %v2968
        %3801 = vmatmul.mubr.f32.gmra.mrb[0].mxu0 %v2967
        %v3802 = vpop.f32.mrb[0].mxu0
        %v3803 = vadd.f32 %v3578, %v3802
        %v3804 = vpop.f32.mrb[0].mxu0
        %3805 = vmatprep.mubr.f32.mxu0 %v2977
        %3806 = vmatmul.mubr.f32.gmra.mrb[0].mxu0 %v2976
        %v3807 = vpop.f32.mrb[0].mxu0
        %v3808 = vadd.f32 %v3583, %v3807
        %v3809 = vpop.f32.mrb[0].mxu0
        %3810 = vmatprep.mubr.f32.mxu0 %v2986
        %3811 = vmatmul.mubr.f32.gmra.mrb[0].mxu0 %v2985
        %v3812 = vpop.f32.mrb[0].mxu0
        %v3813 = vadd.f32 %v3588, %v3812
        %v3814 = vpop.f32.mrb[0].mxu0
        %3815 = vdwg.mxu0
        %3816 = vmatprep.subr.mxu0 0.0
        %3817 = vmatpush1.msra.mxu0 %v3086
        %3818 = vmatprep.subr.mxu0 0.0
        %3819 = vmatpush1.msra.mxu0 %v3087
        %3820 = vmatprep.subr.mxu0 0.0
        %3821 = vmatpush1.msra.mxu0 %v3088
        %3822 = vmatprep.subr.mxu0 0.0
        %3823 = vmatpush1.msra.mxu0 %v3089
        %3824 = vmatprep.subr.mxu0 0.0
        %3825 = vmatpush1.msra.mxu0 %v3090
        %3826 = vmatprep.subr.mxu0 0.0
        %3827 = vmatpush1.msra.mxu0 %v3091
        %3828 = vmatprep.subr.mxu0 0.0
        %3829 = vmatpush1.msra.mxu0 %v3092
        %3830 = vmatprep.subr.mxu0 0.0
        %3831 = vmatpush1.msra.mxu0 %v3093
        %3832 = vmatprep.subr.mxu0 0.0
        %3833 = vmatpush1.msra.mxu0 %v3094
        %3834 = vmatprep.subr.mxu0 0.0
        %3835 = vmatpush1.msra.mxu0 %v3095
        %3836 = vmatprep.subr.mxu0 0.0
        %3837 = vmatpush1.msra.mxu0 %v3096
        %3838 = vmatprep.subr.mxu0 0.0
        %3839 = vmatpush1.msra.mxu0 %v3097
        %3840 = vmatprep.subr.mxu0 0.0
        %3841 = vmatpush1.msra.mxu0 %v3098
        %3842 = vmatprep.subr.mxu0 0.0
        %3843 = vmatpush1.msra.mxu0 %v3099
        %3844 = vmatprep.subr.mxu0 0.0
        %3845 = vmatpush1.msra.mxu0 %v3100
        %3846 = vmatprep.subr.mxu0 0.0
        %3847 = vmatpush1.msra.mxu0 %v3101
        %3848 = vmatprep.subr.mxu0 0.0
        %3849 = vmatpush1.msra.mxu0 %v3102
        %3850 = vmatprep.subr.mxu0 0.0
        %3851 = vmatpush1.msra.mxu0 %v3103
        %3852 = vmatprep.subr.mxu0 0.0
        %3853 = vmatpush1.msra.mxu0 %v3104
        %3854 = vmatprep.subr.mxu0 0.0
        %3855 = vmatpush1.msra.mxu0 %v3105
        %3856 = vmatprep.subr.mxu0 0.0
        %3857 = vmatpush1.msra.mxu0 %v3106
        %3858 = vmatprep.subr.mxu0 0.0
        %3859 = vmatpush1.msra.mxu0 %v3107
        %3860 = vmatprep.subr.mxu0 0.0
        %3861 = vmatpush1.msra.mxu0 %v3108
        %3862 = vmatprep.subr.mxu0 0.0
        %3863 = vmatpush1.msra.mxu0 %v3109
        %3864 = vmatprep.subr.mxu0 0.0
        %3865 = vmatpush1.msra.mxu0 %v3110
        %3866 = vmatprep.subr.mxu0 0.0
        %3867 = vmatpush1.msra.mxu0 %v3111
        %3868 = vmatprep.subr.mxu0 0.0
        %3869 = vmatpush1.msra.mxu0 %v3112
        %3870 = vmatprep.subr.mxu0 0.0
        %3871 = vmatpush1.msra.mxu0 %v3113
        %3872 = vmatprep.subr.mxu0 0.0
        %3873 = vmatpush1.msra.mxu0 %v3114
        %3874 = vmatprep.subr.mxu0 0.0
        %3875 = vmatpush1.msra.mxu0 %v3115
        %3876 = vmatprep.subr.mxu0 0.0
        %3877 = vmatpush1.msra.mxu0 %v3116
        %3878 = vmatprep.subr.mxu0 0.0
        %3879 = vmatpush1.msra.mxu0 %v3117
        %3880 = vmatprep.mubr.f32.mxu0 %v2709
        %3881 = vmatmul.mubr.f32.gmra.mrb[0].mxu0 %v2708
        %v3882 = vpop.f32.mrb[0].mxu0
        %v3883 = vadd.f32 %v3658, %v3882
        %v3884 = vpop.f32.mrb[0].mxu0
        %3885 = vmatprep.mubr.f32.mxu0 %v2718
        %3886 = vmatmul.mubr.f32.gmra.mrb[0].mxu0 %v2717
        %v3887 = vpop.f32.mrb[0].mxu0
        %v3888 = vadd.f32 %v3663, %v3887
        %v3889 = vpop.f32.mrb[0].mxu0
        %3890 = vmatprep.mubr.f32.mxu0 %v2727
        %3891 = vmatmul.mubr.f32.gmra.mrb[0].mxu0 %v2726
        %v3892 = vpop.f32.mrb[0].mxu0
        %v3893 = vadd.f32 %v3668, %v3892
        %v3894 = vpop.f32.mrb[0].mxu0
        %3895 = vmatprep.mubr.f32.mxu0 %v2736
        %3896 = vmatmul.mubr.f32.gmra.mrb[0].mxu0 %v2735
        %v3897 = vpop.f32.mrb[0].mxu0
        %v3898 = vadd.f32 %v3673, %v3897
        %v3899 = vpop.f32.mrb[0].mxu0
        %3900 = vmatprep.mubr.f32.mxu0 %v2745
        %3901 = vmatmul.mubr.f32.gmra.mrb[0].mxu0 %v2744
        %v3902 = vpop.f32.mrb[0].mxu0
        %v3903 = vadd.f32 %v3678, %v3902
        %v3904 = vpop.f32.mrb[0].mxu0
        %3905 = vmatprep.mubr.f32.mxu0 %v2754
        %3906 = vmatmul.mubr.f32.gmra.mrb[0].mxu0 %v2753
        %v3907 = vpop.f32.mrb[0].mxu0
        %v3908 = vadd.f32 %v3683, %v3907
        %v3909 = vpop.f32.mrb[0].mxu0
        %3910 = vmatprep.mubr.f32.mxu0 %v2763
        %3911 = vmatmul.mubr.f32.gmra.mrb[0].mxu0 %v2762
        %v3912 = vpop.f32.mrb[0].mxu0
        %v3913 = vadd.f32 %v3688, %v3912
        %v3914 = vpop.f32.mrb[0].mxu0
        %3915 = vmatprep.mubr.f32.mxu0 %v2772
        %3916 = vmatmul.mubr.f32.gmra.mrb[0].mxu0 %v2771
        %v3917 = vpop.f32.mrb[0].mxu0
        %v3918 = vadd.f32 %v3693, %v3917
        %v3919 = vpop.f32.mrb[0].mxu0
        %3920 = vmatprep.mubr.f32.mxu0 %v2781
        %3921 = vmatmul.mubr.f32.gmra.mrb[0].mxu0 %v2780
        %v3922 = vpop.f32.mrb[0].mxu0
        %v3923 = vadd.f32 %v3698, %v3922
        %v3924 = vpop.f32.mrb[0].mxu0
        %3925 = vmatprep.mubr.f32.mxu0 %v2790
        %3926 = vmatmul.mubr.f32.gmra.mrb[0].mxu0 %v2789
        %v3927 = vpop.f32.mrb[0].mxu0
        %v3928 = vadd.f32 %v3703, %v3927
        %v3929 = vpop.f32.mrb[0].mxu0
        %3930 = vmatprep.mubr.f32.mxu0 %v2799
        %3931 = vmatmul.mubr.f32.gmra.mrb[0].mxu0 %v2798
        %v3932 = vpop.f32.mrb[0].mxu0
        %v3933 = vadd.f32 %v3708, %v3932
        %v3934 = vpop.f32.mrb[0].mxu0
        %3935 = vmatprep.mubr.f32.mxu0 %v2808
        %3936 = vmatmul.mubr.f32.gmra.mrb[0].mxu0 %v2807
        %v3937 = vpop.f32.mrb[0].mxu0
        %v3938 = vadd.f32 %v3713, %v3937
        %v3939 = vpop.f32.mrb[0].mxu0
        %3940 = vmatprep.mubr.f32.mxu0 %v2817
        %3941 = vmatmul.mubr.f32.gmra.mrb[0].mxu0 %v2816
        %v3942 = vpop.f32.mrb[0].mxu0
        %v3943 = vadd.f32 %v3718, %v3942
        %v3944 = vpop.f32.mrb[0].mxu0
        %3945 = vmatprep.mubr.f32.mxu0 %v2826
        %3946 = vmatmul.mubr.f32.gmra.mrb[0].mxu0 %v2825
        %v3947 = vpop.f32.mrb[0].mxu0
        %v3948 = vadd.f32 %v3723, %v3947
        %v3949 = vpop.f32.mrb[0].mxu0
        %3950 = vmatprep.mubr.f32.mxu0 %v2835
        %3951 = vmatmul.mubr.f32.gmra.mrb[0].mxu0 %v2834
        %v3952 = vpop.f32.mrb[0].mxu0
        %v3953 = vadd.f32 %v3728, %v3952
        %v3954 = vpop.f32.mrb[0].mxu0
        %3955 = vmatprep.mubr.f32.mxu0 %v2844
        %3956 = vmatmul.mubr.f32.gmra.mrb[0].mxu0 %v2843
        %v3957 = vpop.f32.mrb[0].mxu0
        %v3958 = vadd.f32 %v3733, %v3957
        %v3959 = vpop.f32.mrb[0].mxu0
        %3960 = vmatprep.mubr.f32.mxu0 %v2853
        %3961 = vmatmul.mubr.f32.gmra.mrb[0].mxu0 %v2852
        %v3962 = vpop.f32.mrb[0].mxu0
        %v3963 = vadd.f32 %v3738, %v3962
        %v3964 = vpop.f32.mrb[0].mxu0
        %3965 = vmatprep.mubr.f32.mxu0 %v2862
        %3966 = vmatmul.mubr.f32.gmra.mrb[0].mxu0 %v2861
        %v3967 = vpop.f32.mrb[0].mxu0
        %v3968 = vadd.f32 %v3743, %v3967
        %v3969 = vpop.f32.mrb[0].mxu0
        %3970 = vmatprep.mubr.f32.mxu0 %v2871
        %3971 = vmatmul.mubr.f32.gmra.mrb[0].mxu0 %v2870
        %v3972 = vpop.f32.mrb[0].mxu0
        %v3973 = vadd.f32 %v3748, %v3972
        %v3974 = vpop.f32.mrb[0].mxu0
        %3975 = vmatprep.mubr.f32.mxu0 %v2880
        %3976 = vmatmul.mubr.f32.gmra.mrb[0].mxu0 %v2879
        %v3977 = vpop.f32.mrb[0].mxu0
        %v3978 = vadd.f32 %v3753, %v3977
        %v3979 = vpop.f32.mrb[0].mxu0
        %3980 = vmatprep.mubr.f32.mxu0 %v2889
        %3981 = vmatmul.mubr.f32.gmra.mrb[0].mxu0 %v2888
        %v3982 = vpop.f32.mrb[0].mxu0
        %v3983 = vadd.f32 %v3758, %v3982
        %v3984 = vpop.f32.mrb[0].mxu0
        %3985 = vmatprep.mubr.f32.mxu0 %v2898
        %3986 = vmatmul.mubr.f32.gmra.mrb[0].mxu0 %v2897
        %v3987 = vpop.f32.mrb[0].mxu0
        %v3988 = vadd.f32 %v3763, %v3987
        %v3989 = vpop.f32.mrb[0].mxu0
        %3990 = vmatprep.mubr.f32.mxu0 %v2907
        %3991 = vmatmul.mubr.f32.gmra.mrb[0].mxu0 %v2906
        %v3992 = vpop.f32.mrb[0].mxu0
        %v3993 = vadd.f32 %v3768, %v3992
        %v3994 = vpop.f32.mrb[0].mxu0
        %3995 = vmatprep.mubr.f32.mxu0 %v2916
        %3996 = vmatmul.mubr.f32.gmra.mrb[0].mxu0 %v2915
        %v3997 = vpop.f32.mrb[0].mxu0
        %v3998 = vadd.f32 %v3773, %v3997
        %v3999 = vpop.f32.mrb[0].mxu0
        %4000 = vmatprep.mubr.f32.mxu0 %v2925
        %4001 = vmatmul.mubr.f32.gmra.mrb[0].mxu0 %v2924
        %v4002 = vpop.f32.mrb[0].mxu0
        %v4003 = vadd.f32 %v3778, %v4002
        %v4004 = vpop.f32.mrb[0].mxu0
        %4005 = vmatprep.mubr.f32.mxu0 %v2934
        %4006 = vmatmul.mubr.f32.gmra.mrb[0].mxu0 %v2933
        %v4007 = vpop.f32.mrb[0].mxu0
        %v4008 = vadd.f32 %v3783, %v4007
        %v4009 = vpop.f32.mrb[0].mxu0
        %4010 = vmatprep.mubr.f32.mxu0 %v2943
        %4011 = vmatmul.mubr.f32.gmra.mrb[0].mxu0 %v2942
        %v4012 = vpop.f32.mrb[0].mxu0
        %v4013 = vadd.f32 %v3788, %v4012
        %v4014 = vpop.f32.mrb[0].mxu0
        %4015 = vmatprep.mubr.f32.mxu0 %v2952
        %4016 = vmatmul.mubr.f32.gmra.mrb[0].mxu0 %v2951
        %v4017 = vpop.f32.mrb[0].mxu0
        %v4018 = vadd.f32 %v3793, %v4017
        %v4019 = vpop.f32.mrb[0].mxu0
        %4020 = vmatprep.mubr.f32.mxu0 %v2961
        %4021 = vmatmul.mubr.f32.gmra.mrb[0].mxu0 %v2960
        %v4022 = vpop.f32.mrb[0].mxu0
        %v4023 = vadd.f32 %v3798, %v4022
        %v4024 = vpop.f32.mrb[0].mxu0
        %4025 = vmatprep.mubr.f32.mxu0 %v2970
        %4026 = vmatmul.mubr.f32.gmra.mrb[0].mxu0 %v2969
        %v4027 = vpop.f32.mrb[0].mxu0
        %v4028 = vadd.f32 %v3803, %v4027
        %v4029 = vpop.f32.mrb[0].mxu0
        %4030 = vmatprep.mubr.f32.mxu0 %v2979
        %4031 = vmatmul.mubr.f32.gmra.mrb[0].mxu0 %v2978
        %v4032 = vpop.f32.mrb[0].mxu0
        %v4033 = vadd.f32 %v3808, %v4032
        %v4034 = vpop.f32.mrb[0].mxu0
        %4035 = vmatprep.mubr.f32.mxu0 %v2988
        %4036 = vmatmul.mubr.f32.gmra.mrb[0].mxu0 %v2987
        %v4037 = vpop.f32.mrb[0].mxu0
        %v4038 = vadd.f32 %v3813, %v4037
        %v4039 = vpop.f32.mrb[0].mxu0
        %4040 = vdwg.mxu0
        %4041 = vmatprep.subr.mxu0 0.0
        %4042 = vmatpush1.msra.mxu0 %v3118
        %4043 = vmatprep.subr.mxu0 0.0
        %4044 = vmatpush1.msra.mxu0 %v3119
        %4045 = vmatprep.subr.mxu0 0.0
        %4046 = vmatpush1.msra.mxu0 %v3120
        %4047 = vmatprep.subr.mxu0 0.0
        %4048 = vmatpush1.msra.mxu0 %v3121
        %4049 = vmatprep.subr.mxu0 0.0
        %4050 = vmatpush1.msra.mxu0 %v3122
        %4051 = vmatprep.subr.mxu0 0.0
        %4052 = vmatpush1.msra.mxu0 %v3123
        %4053 = vmatprep.subr.mxu0 0.0
        %4054 = vmatpush1.msra.mxu0 %v3124
        %4055 = vmatprep.subr.mxu0 0.0
        %4056 = vmatpush1.msra.mxu0 %v3125
        %4057 = vmatprep.subr.mxu0 0.0
        %4058 = vmatpush1.msra.mxu0 %v3126
        %4059 = vmatprep.subr.mxu0 0.0
        %4060 = vmatpush1.msra.mxu0 %v3127
        %4061 = vmatprep.subr.mxu0 0.0
        %4062 = vmatpush1.msra.mxu0 %v3128
        %4063 = vmatprep.subr.mxu0 0.0
        %4064 = vmatpush1.msra.mxu0 %v3129
        %4065 = vmatprep.subr.mxu0 0.0
        %4066 = vmatpush1.msra.mxu0 %v3130
        %4067 = vmatprep.subr.mxu0 0.0
        %4068 = vmatpush1.msra.mxu0 %v3131
        %4069 = vmatprep.subr.mxu0 0.0
        %4070 = vmatpush1.msra.mxu0 %v3132
        %4071 = vmatprep.subr.mxu0 0.0
        %4072 = vmatpush1.msra.mxu0 %v3133
        %4073 = vmatprep.subr.mxu0 0.0
        %4074 = vmatpush1.msra.mxu0 0.0
        %4075 = vmatprep.subr.mxu0 0.0
        %4076 = vmatpush1.msra.mxu0 0.0
        %4077 = vmatprep.subr.mxu0 0.0
        %4078 = vmatpush1.msra.mxu0 0.0
        %4079 = vmatprep.subr.mxu0 0.0
        %4080 = vmatpush1.msra.mxu0 0.0
        %4081 = vmatprep.subr.mxu0 0.0
        %4082 = vmatpush1.msra.mxu0 0.0
        %4083 = vmatprep.subr.mxu0 0.0
        %4084 = vmatpush1.msra.mxu0 0.0
        %4085 = vmatprep.subr.mxu0 0.0
        %4086 = vmatpush1.msra.mxu0 0.0
        %4087 = vmatprep.subr.mxu0 0.0
        %4088 = vmatpush1.msra.mxu0 0.0
        %4089 = vmatprep.subr.mxu0 0.0
        %4090 = vmatpush1.msra.mxu0 0.0
        %4091 = vmatprep.subr.mxu0 0.0
        %4092 = vmatpush1.msra.mxu0 0.0
        %4093 = vmatprep.subr.mxu0 0.0
        %4094 = vmatpush1.msra.mxu0 0.0
        %4095 = vmatprep.subr.mxu0 0.0
        %4096 = vmatpush1.msra.mxu0 0.0
        %4097 = vmatprep.subr.mxu0 0.0
        %4098 = vmatpush1.msra.mxu0 0.0
        %4099 = vmatprep.subr.mxu0 0.0
        %4100 = vmatpush1.msra.mxu0 0.0
        %4101 = vmatprep.subr.mxu0 0.0
        %4102 = vmatpush1.msra.mxu0 0.0
        %4103 = vmatprep.subr.mxu0 0.0
        %4104 = vmatpush1.msra.mxu0 0.0
        %4105 = vmatprep.mubr.f32.mxu0 0.0
        %4106 = vmatmul.mubr.f32.gmra.mrb[0].mxu0 %v2710
        %v4107 = vpop.f32.mrb[0].mxu0
        %v4108 = vadd.f32 %v3883, %v4107
        %v4109 = vpop.f32.mrb[0].mxu0
        %4110 = vmatprep.mubr.f32.mxu0 0.0
        %4111 = vmatmul.mubr.f32.gmra.mrb[0].mxu0 %v2719
        %v4112 = vpop.f32.mrb[0].mxu0
        %v4113 = vadd.f32 %v3888, %v4112
        %v4114 = vpop.f32.mrb[0].mxu0
        %4115 = vmatprep.mubr.f32.mxu0 0.0
        %4116 = vmatmul.mubr.f32.gmra.mrb[0].mxu0 %v2728
        %v4117 = vpop.f32.mrb[0].mxu0
        %v4118 = vadd.f32 %v3893, %v4117
        %v4119 = vpop.f32.mrb[0].mxu0
        %4120 = vmatprep.mubr.f32.mxu0 0.0
        %4121 = vmatmul.mubr.f32.gmra.mrb[0].mxu0 %v2737
        %v4122 = vpop.f32.mrb[0].mxu0
        %v4123 = vadd.f32 %v3898, %v4122
        %v4124 = vpop.f32.mrb[0].mxu0
        %4125 = vmatprep.mubr.f32.mxu0 0.0
        %4126 = vmatmul.mubr.f32.gmra.mrb[0].mxu0 %v2746
        %v4127 = vpop.f32.mrb[0].mxu0
        %v4128 = vadd.f32 %v3903, %v4127
        %v4129 = vpop.f32.mrb[0].mxu0
        %4130 = vmatprep.mubr.f32.mxu0 0.0
        %4131 = vmatmul.mubr.f32.gmra.mrb[0].mxu0 %v2755
        %v4132 = vpop.f32.mrb[0].mxu0
        %v4133 = vadd.f32 %v3908, %v4132
        %v4134 = vpop.f32.mrb[0].mxu0
        %4135 = vmatprep.mubr.f32.mxu0 0.0
        %4136 = vmatmul.mubr.f32.gmra.mrb[0].mxu0 %v2764
        %v4137 = vpop.f32.mrb[0].mxu0
        %v4138 = vadd.f32 %v3913, %v4137
        %v4139 = vpop.f32.mrb[0].mxu0
        %4140 = vmatprep.mubr.f32.mxu0 0.0
        %4141 = vmatmul.mubr.f32.gmra.mrb[0].mxu0 %v2773
        %v4142 = vpop.f32.mrb[0].mxu0
        %v4143 = vadd.f32 %v3918, %v4142
        %v4144 = vpop.f32.mrb[0].mxu0
        %4145 = vmatprep.mubr.f32.mxu0 0.0
        %4146 = vmatmul.mubr.f32.gmra.mrb[0].mxu0 %v2782
        %v4147 = vpop.f32.mrb[0].mxu0
        %v4148 = vadd.f32 %v3923, %v4147
        %v4149 = vpop.f32.mrb[0].mxu0
        %4150 = vmatprep.mubr.f32.mxu0 0.0
        %4151 = vmatmul.mubr.f32.gmra.mrb[0].mxu0 %v2791
        %v4152 = vpop.f32.mrb[0].mxu0
        %v4153 = vadd.f32 %v3928, %v4152
        %v4154 = vpop.f32.mrb[0].mxu0
        %4155 = vmatprep.mubr.f32.mxu0 0.0
        %4156 = vmatmul.mubr.f32.gmra.mrb[0].mxu0 %v2800
        %v4157 = vpop.f32.mrb[0].mxu0
        %v4158 = vadd.f32 %v3933, %v4157
        %v4159 = vpop.f32.mrb[0].mxu0
        %4160 = vmatprep.mubr.f32.mxu0 0.0
        %4161 = vmatmul.mubr.f32.gmra.mrb[0].mxu0 %v2809
        %v4162 = vpop.f32.mrb[0].mxu0
        %v4163 = vadd.f32 %v3938, %v4162
        %v4164 = vpop.f32.mrb[0].mxu0
        %4165 = vmatprep.mubr.f32.mxu0 0.0
        %4166 = vmatmul.mubr.f32.gmra.mrb[0].mxu0 %v2818
        %v4167 = vpop.f32.mrb[0].mxu0
        %v4168 = vadd.f32 %v3943, %v4167
        %v4169 = vpop.f32.mrb[0].mxu0
        %4170 = vmatprep.mubr.f32.mxu0 0.0
        %4171 = vmatmul.mubr.f32.gmra.mrb[0].mxu0 %v2827
        %v4172 = vpop.f32.mrb[0].mxu0
        %v4173 = vadd.f32 %v3948, %v4172
        %v4174 = vpop.f32.mrb[0].mxu0
        %4175 = vmatprep.mubr.f32.mxu0 0.0
        %4176 = vmatmul.mubr.f32.gmra.mrb[0].mxu0 %v2836
        %v4177 = vpop.f32.mrb[0].mxu0
        %v4178 = vadd.f32 %v3953, %v4177
        %v4179 = vpop.f32.mrb[0].mxu0
        %4180 = vmatprep.mubr.f32.mxu0 0.0
        %4181 = vmatmul.mubr.f32.gmra.mrb[0].mxu0 %v2845
        %v4182 = vpop.f32.mrb[0].mxu0
        %v4183 = vadd.f32 %v3958, %v4182
        %v4184 = vpop.f32.mrb[0].mxu0
        %4185 = vmatprep.mubr.f32.mxu0 0.0
        %4186 = vmatmul.mubr.f32.gmra.mrb[0].mxu0 %v2854
        %v4187 = vpop.f32.mrb[0].mxu0
        %v4188 = vadd.f32 %v3963, %v4187
        %v4189 = vpop.f32.mrb[0].mxu0
        %4190 = vmatprep.mubr.f32.mxu0 0.0
        %4191 = vmatmul.mubr.f32.gmra.mrb[0].mxu0 %v2863
        %v4192 = vpop.f32.mrb[0].mxu0
        %v4193 = vadd.f32 %v3968, %v4192
        %v4194 = vpop.f32.mrb[0].mxu0
        %4195 = vmatprep.mubr.f32.mxu0 0.0
        %4196 = vmatmul.mubr.f32.gmra.mrb[0].mxu0 %v2872
        %v4197 = vpop.f32.mrb[0].mxu0
        %v4198 = vadd.f32 %v3973, %v4197
        %v4199 = vpop.f32.mrb[0].mxu0
        %4200 = vmatprep.mubr.f32.mxu0 0.0
        %4201 = vmatmul.mubr.f32.gmra.mrb[0].mxu0 %v2881
        %v4202 = vpop.f32.mrb[0].mxu0
        %v4203 = vadd.f32 %v3978, %v4202
        %v4204 = vpop.f32.mrb[0].mxu0
        %4205 = vmatprep.mubr.f32.mxu0 0.0
        %4206 = vmatmul.mubr.f32.gmra.mrb[0].mxu0 %v2890
        %v4207 = vpop.f32.mrb[0].mxu0
        %v4208 = vadd.f32 %v3983, %v4207
        %v4209 = vpop.f32.mrb[0].mxu0
        %4210 = vmatprep.mubr.f32.mxu0 0.0
        %4211 = vmatmul.mubr.f32.gmra.mrb[0].mxu0 %v2899
        %v4212 = vpop.f32.mrb[0].mxu0
        %v4213 = vadd.f32 %v3988, %v4212
        %v4214 = vpop.f32.mrb[0].mxu0
        %4215 = vmatprep.mubr.f32.mxu0 0.0
        %4216 = vmatmul.mubr.f32.gmra.mrb[0].mxu0 %v2908
        %v4217 = vpop.f32.mrb[0].mxu0
        %v4218 = vadd.f32 %v3993, %v4217
        %v4219 = vpop.f32.mrb[0].mxu0
        %4220 = vmatprep.mubr.f32.mxu0 0.0
        %4221 = vmatmul.mubr.f32.gmra.mrb[0].mxu0 %v2917
        %v4222 = vpop.f32.mrb[0].mxu0
        %v4223 = vadd.f32 %v3998, %v4222
        %v4224 = vpop.f32.mrb[0].mxu0
        %4225 = vmatprep.mubr.f32.mxu0 0.0
        %4226 = vmatmul.mubr.f32.gmra.mrb[0].mxu0 %v2926
        %v4227 = vpop.f32.mrb[0].mxu0
        %v4228 = vadd.f32 %v4003, %v4227
        %v4229 = vpop.f32.mrb[0].mxu0
        %4230 = vmatprep.mubr.f32.mxu0 0.0
        %4231 = vmatmul.mubr.f32.gmra.mrb[0].mxu0 %v2935
        %v4232 = vpop.f32.mrb[0].mxu0
        %v4233 = vadd.f32 %v4008, %v4232
        %v4234 = vpop.f32.mrb[0].mxu0
        %4235 = vmatprep.mubr.f32.mxu0 0.0
        %4236 = vmatmul.mubr.f32.gmra.mrb[0].mxu0 %v2944
        %v4237 = vpop.f32.mrb[0].mxu0
        %v4238 = vadd.f32 %v4013, %v4237
        %v4239 = vpop.f32.mrb[0].mxu0
        %4240 = vmatprep.mubr.f32.mxu0 0.0
        %4241 = vmatmul.mubr.f32.gmra.mrb[0].mxu0 %v2953
        %v4242 = vpop.f32.mrb[0].mxu0
        %v4243 = vadd.f32 %v4018, %v4242
        %v4244 = vpop.f32.mrb[0].mxu0
        %4245 = vmatprep.mubr.f32.mxu0 0.0
        %4246 = vmatmul.mubr.f32.gmra.mrb[0].mxu0 %v2962
        %v4247 = vpop.f32.mrb[0].mxu0
        %v4248 = vadd.f32 %v4023, %v4247
        %v4249 = vpop.f32.mrb[0].mxu0
        %4250 = vmatprep.mubr.f32.mxu0 0.0
        %4251 = vmatmul.mubr.f32.gmra.mrb[0].mxu0 %v2971
        %v4252 = vpop.f32.mrb[0].mxu0
        %v4253 = vadd.f32 %v4028, %v4252
        %v4254 = vpop.f32.mrb[0].mxu0
        %4255 = vmatprep.mubr.f32.mxu0 0.0
        %4256 = vmatmul.mubr.f32.gmra.mrb[0].mxu0 %v2980
        %v4257 = vpop.f32.mrb[0].mxu0
        %v4258 = vadd.f32 %v4033, %v4257
        %v4259 = vpop.f32.mrb[0].mxu0
        %4260 = vmatprep.mubr.f32.mxu0 0.0
        %4261 = vmatmul.mubr.f32.gmra.mrb[0].mxu0 %v2989
        %v4262 = vpop.f32.mrb[0].mxu0
        %v4263 = vadd.f32 %v4038, %v4262
        %v4264 = vpop.f32.mrb[0].mxu0
        %4265 = vdwg.mxu0
        %s4266 = scalar_lea.vmem %s237, 24
        %v4267 = vld [vmem:[%s4266 + $0x1] sm:$0xff]
        %v4268 = vld [vmem:[%s4266 + $0x9] sm:$0xff]
        %v4269 = vld [vmem:[%s4266 + $0x19] sm:$0xff]
        %v4270 = vld [vmem:[%s4266 + $0x21] sm:$0xff]
        %v4271 = vld [vmem:[%s4266 + $0x31] sm:$0xff]
        %v4272 = vld [vmem:[%s4266 + $0x39] sm:$0xff]
        %v4273 = vld [vmem:[%s4266 + $0x49] sm:$0xff]
        %v4274 = vld [vmem:[%s4266 + $0x51] sm:$0xff]
        %v4275 = vld [vmem:[%s4266 + $0x61] sm:$0xff]
        %v4276 = vld [vmem:[%s4266 + $0x69] sm:$0xff]
        %v4277 = vld [vmem:[%s4266 + $0x79] sm:$0xff]
        %v4278 = vld [vmem:[%s4266 + $0x81] sm:$0xff]
        %v4279 = vld [vmem:[%s4266 + $0x91] sm:$0xff]
        %v4280 = vld [vmem:[%s4266 + $0x99] sm:$0xff]
        %v4281 = vld [vmem:[%s4266 + $0xa9] sm:$0xff]
        %v4282 = vld [vmem:[%s4266 + $0xb1] sm:$0xff]
        %v4283 = vld [vmem:[%s4266 + $0xc1] sm:$0xff]
        %v4284 = vld [vmem:[%s4266 + $0xc9] sm:$0xff]
        %v4285 = vld [vmem:[%s4266 + $0xd9] sm:$0xff]
        %v4286 = vld [vmem:[%s4266 + $0xe1] sm:$0xff]
        %v4287 = vld [vmem:[%s4266 + $0xf1] sm:$0xff]
        %v4288 = vld [vmem:[%s4266 + $0xf9] sm:$0xff]
        %v4289 = vld [vmem:[%s4266 + $0x109] sm:$0xff]
        %v4290 = vld [vmem:[%s4266 + $0x111] sm:$0xff]
        %v4291 = vld [vmem:[%s4266 + $0x121] sm:$0xff]
        %v4292 = vld [vmem:[%s4266 + $0x129] sm:$0xff]
        %v4293 = vld [vmem:[%s4266 + $0x139] sm:$0xff]
        %v4294 = vld [vmem:[%s4266 + $0x141] sm:$0xff]
        %v4295 = vld [vmem:[%s4266 + $0x151] sm:$0xff]
        %v4296 = vld [vmem:[%s4266 + $0x159] sm:$0xff]
        %v4297 = vld [vmem:[%s4266 + $0x169] sm:$0xff]
        %v4298 = vld [vmem:[%s4266 + $0x171] sm:$0xff]
        %v4299 = vadd.f32 %v4108, %v4267
        %v4300 = vadd.f32 %v4113, %v4268
        %v4301 = vadd.f32 %v4118, %v4269
        %v4302 = vadd.f32 %v4123, %v4270
        %v4303 = vadd.f32 %v4128, %v4271
        %v4304 = vadd.f32 %v4133, %v4272
        %v4305 = vadd.f32 %v4138, %v4273
        %v4306 = vadd.f32 %v4143, %v4274
        %v4307 = vadd.f32 %v4148, %v4275
        %v4308 = vadd.f32 %v4153, %v4276
        %v4309 = vadd.f32 %v4158, %v4277
        %v4310 = vadd.f32 %v4163, %v4278
        %v4311 = vadd.f32 %v4168, %v4279
        %v4312 = vadd.f32 %v4173, %v4280
        %v4313 = vadd.f32 %v4178, %v4281
        %v4314 = vadd.f32 %v4183, %v4282
        %v4315 = vadd.f32 %v4188, %v4283
        %v4316 = vadd.f32 %v4193, %v4284
        %v4317 = vadd.f32 %v4198, %v4285
        %v4318 = vadd.f32 %v4203, %v4286
        %v4319 = vadd.f32 %v4208, %v4287
        %v4320 = vadd.f32 %v4213, %v4288
        %v4321 = vadd.f32 %v4218, %v4289
        %v4322 = vadd.f32 %v4223, %v4290
        %v4323 = vadd.f32 %v4228, %v4291
        %v4324 = vadd.f32 %v4233, %v4292
        %v4325 = vadd.f32 %v4238, %v4293
        %v4326 = vadd.f32 %v4243, %v4294
        %v4327 = vadd.f32 %v4248, %v4295
        %v4328 = vadd.f32 %v4253, %v4296
        %v4329 = vadd.f32 %v4258, %v4297
        %v4330 = vadd.f32 %v4263, %v4298
        %4331 = vst [vmem:[%s232] sm:$0xff] %v4299
        %4332 = vst [vmem:[%s232 + $0x8] sm:$0xff] %v4300
        %4333 = vst [vmem:[%s232 + $0x10] sm:$0xff] %v4301
        %4334 = vst [vmem:[%s232 + $0x18] sm:$0xff] %v4302
        %4335 = vst [vmem:[%s232 + $0x20] sm:$0xff] %v4303
        %4336 = vst [vmem:[%s232 + $0x28] sm:$0xff] %v4304
        %4337 = vst [vmem:[%s232 + $0x30] sm:$0xff] %v4305
        %4338 = vst [vmem:[%s232 + $0x38] sm:$0xff] %v4306
        %4339 = vst [vmem:[%s232 + $0x40] sm:$0xff] %v4307
        %4340 = vst [vmem:[%s232 + $0x48] sm:$0xff] %v4308
        %4341 = vst [vmem:[%s232 + $0x50] sm:$0xff] %v4309
        %4342 = vst [vmem:[%s232 + $0x58] sm:$0xff] %v4310
        %4343 = vst [vmem:[%s232 + $0x60] sm:$0xff] %v4311
        %4344 = vst [vmem:[%s232 + $0x68] sm:$0xff] %v4312
        %4345 = vst [vmem:[%s232 + $0x70] sm:$0xff] %v4313
        %4346 = vst [vmem:[%s232 + $0x78] sm:$0xff] %v4314
        %4347 = vst [vmem:[%s232 + $0x80] sm:$0xff] %v4315
        %4348 = vst [vmem:[%s232 + $0x88] sm:$0xff] %v4316
        %4349 = vst [vmem:[%s232 + $0x90] sm:$0xff] %v4317
        %4350 = vst [vmem:[%s232 + $0x98] sm:$0xff] %v4318
        %4351 = vst [vmem:[%s232 + $0xa0] sm:$0xff] %v4319
        %4352 = vst [vmem:[%s232 + $0xa8] sm:$0xff] %v4320
        %4353 = vst [vmem:[%s232 + $0xb0] sm:$0xff] %v4321
        %4354 = vst [vmem:[%s232 + $0xb8] sm:$0xff] %v4322
        %4355 = vst [vmem:[%s232 + $0xc0] sm:$0xff] %v4323
        %4356 = vst [vmem:[%s232 + $0xc8] sm:$0xff] %v4324
        %4357 = vst [vmem:[%s232 + $0xd0] sm:$0xff] %v4325
        %4358 = vst [vmem:[%s232 + $0xd8] sm:$0xff] %v4326
        %4359 = vst [vmem:[%s232 + $0xe0] sm:$0xff] %v4327
        %4360 = vst [vmem:[%s232 + $0xe8] sm:$0xff] %v4328
        %4361 = vst [vmem:[%s232 + $0xf0] sm:$0xff] %v4329
        %4362 = vst [vmem:[%s232 + $0xf8] sm:$0xff] %v4330
        %s4363 = sand.u32 %s138, 1
        %s4364 = scalar_lea.sflag [#allocation6], %s4363
        %s4365 = sand.u32 %s138, 1
        %s4366 = smul.addr %s4365, 256
        %s4367 = scalar_lea.vmem [#allocation7], %s4366
        // Predicated region
        $region45: #{tpu_custom_call.1} parent=39 // pred_check
          %p4368 = pneg %p148
        $region46: #{tpu_custom_call.1} parent=39 // pred_check_branch
          %4370 = sbr.rel (%p4368) target = $region48
        $region47: #{tpu_custom_call.1} parent=39 // pred_region
          %s4372 = ssub.s32 4096, 4096
          %4373 = vsyncadd %s4364, %s4372
          %s4374 = smul.addr %s20, 32
          %s4375 = smul.addr %s4374, 128
          %s4376 = scalar_lea.hbm %s5, %s4375
          %s4377 = sshll.u32 %s4367, 4
          %s4378 = int_to_ptr.vmem [resolvable:$true] %s4377
          %4383 = dma.vmem_to_hbm [thread:$0]  %s4378, 4096, %s4376, %s4364, 128, 128, 8
        $region48: #{tpu_custom_call.1} parent=39 // pred_fallthru
          _
      $region40: #{tpu_custom_call.1} parent=5 // pred_fallthru
        _
      %p4384 = scmp.le.s32.totalorder 2, %s15
      // Predicated region
      $region49: #{tpu_custom_call.1} parent=5 // pred_check
        %p4385 = pneg %p4384
      $region50: #{tpu_custom_call.1} parent=5 // pred_check_branch
        %4387 = sbr.rel (%p4385) target = $region52
      $region51: #{tpu_custom_call.1} parent=5 // pred_region
        %s4388 = ssub.s32 %s15, 2
        // Predicated region
        $region53: #{tpu_custom_call.1} parent=51 // pred_check
          %p4389 = pneg %p154
        $region54: #{tpu_custom_call.1} parent=51 // pred_check_branch
          %4391 = sbr.rel (%p4389) target = $region56
        $region55: #{tpu_custom_call.1} parent=51 // pred_region
          %s4392 = sand.u32 %s139, 1
          %s4393 = scalar_lea.sflag [#allocation6], %s4392
          %s4394 = sand.u32 %s139, 1
          %s4395 = smul.addr %s4394, 256
          %s4396 = scalar_lea.vmem [#allocation7], %s4395
          %4397 = dma.done %s4393, 4096
        $region56: #{tpu_custom_call.1} parent=51 // pred_fallthru
          _
      $region52: #{tpu_custom_call.1} parent=5 // pred_fallthru
        _
    $region6: #{tpu_custom_call.1} parent=1 // loop_footer
      %s19 = sadd.s32 1, %s15
    $region7: #{tpu_custom_call.1} parent=1 // loop_footer_branch
      %14 = sbr.rel target = $region3
    $region8: #{tpu_custom_call.1} parent=1 // loop_exit
      _
    %4398 = vsyncpa [#allocation5], 1
    %s4399 = scalar_lea.sflag [#allocation5], 1
    %4400 = vsyncpa %s4399, 1
    %4401 = vsyncpa [#allocation6], 1
    %s4402 = scalar_lea.sflag [#allocation6], 1
    %4403 = vsyncpa %s4402, 1

</llo_original>
